<compile_context>
chip_gen: v6e
topology: v6e:2x2x1
jax: 0.10.0
libtpu: 0.0.40
codegen_flags: <defaults>
</compile_context>

<pallas_src>
import jax
import jax.numpy as jnp
import numpy as np
from jax import lax
from jax.experimental import pallas as pl
from jax.experimental.pallas import tpu as pltpu


def _sigmoid(z):
    return 1.0 / (1.0 + jnp.exp(-z))


def make_kernel(N, C, H1, W1, KH, KW, K2W, PH2, PW2, G):
    """Fused conv1 -> sigmoid -> conv_transpose2 -> sigmoid, whole batch.

    x_ref  : (N, C, H + 2*PH1, W + 2*(PW1+padL))  conv1 input, zero padded
    w1_ref : (C*C*KH*KW,)   SMEM  Conv2d weight, flattened (O, I, KH, KW)
    b1_ref : (C,)           SMEM
    w2_ref : (C*(C//G)*K2W,) SMEM ConvTranspose2d weight, flat (I, O/G, 1, K2W)
    b2_ref : (C,)           SMEM
    out_ref: (N, C, H2, W2)
    """
    padL = K2W - 1 - PW2           # transposed-conv equivalent W padding (=1)
    Wpad = W1 + 2 * padL           # width of the register-held conv1 output
    H2 = H1 - 2 * PH2              # conv2 kernel height is 1
    W2 = W1 - 2 * PW2 + K2W - 1    # == W1 for these params
    cpg = C // G                   # channels per group (in == out)

    def kernel(w1_ref, b1_ref, w2_ref, b2_ref, x_ref, out_ref):
        # Column-validity mask: the conv1 output is computed Wpad wide; the
        # padL boundary columns must be exactly zero for the transposed conv.
        cols = lax.broadcasted_iota(jnp.int32, (H1, Wpad), 1)
        valid = (cols >= padL) & (cols < padL + W1)

        for n in range(N):
            # ---- hoist shifted input windows (computed once, reused by all
            #      output channels): win[(ic,kh,kw)] is (H1, Wpad)
            win = {}
            for ic in range(C):
                plane = x_ref[n, ic]                       # (Hfull, Wfull)
                for kw in range(KW):
                    colw = plane[:, kw:kw + Wpad]          # lane shift, once
                    for kh in range(KH):
                        win[(ic, kh, kw)] = colw[kh:kh + H1, :]

            # ---- conv1 (3x3, stride 1, pad (2,1)) + sigmoid, kept in regs.
            # v2pad[oc]: (H1, Wpad) with padL zero columns on each side.
            v2pad = []
            for oc in range(C):
                acc = jnp.full((H1, Wpad), b1_ref[oc], dtype=jnp.float32)
                for ic in range(C):
                    for kh in range(KH):
                        for kw in range(KW):
                            wv = w1_ref[((oc * C + ic) * KH + kh) * KW + kw]
                            acc = acc + wv * win[(ic, kh, kw)]
                v2pad.append(jnp.where(valid, _sigmoid(acc), 0.0))

            # ---- conv_transpose ((1,3), stride 1, pad (2,1), groups=G)+sigmoid
            # Hoist the H crop and the three W shifts per input channel.
            shifted = []
            for ic in range(C):
                vc = v2pad[ic][PH2:PH2 + H2, :]            # (H2, Wpad)
                shifted.append([vc[:, s:s + W2] for s in range(K2W)])

            for oc in range(C):
                g = oc // cpg
                ocl = oc % cpg
                acc = jnp.full((H2, W2), b2_ref[oc], dtype=jnp.float32)
                for icl in range(cpg):
                    ic = g * cpg + icl
                    for kw in range(K2W):
                        wv = w2_ref[(ic * cpg + ocl) * K2W + kw]
                        acc = acc + wv * shifted[ic][K2W - 1 - kw]
                out_ref[n, oc, :, :] = _sigmoid(acc)

    return kernel


def model_forward(x, w1, b1, w2, b2):
    """x: (N, C, H, W) float32, NCHW. Returns (N, C, H2, W2) float32."""
    N, C, H, W = x.shape
    KH, KW = 3, 3
    PH1, PW1 = 2, 1          # conv1 padding
    K2W = 3                  # conv2 kernel is (1, 3)
    PH2, PW2 = 2, 1          # conv2 (transposed) padding
    G = 2

    H1 = H + 2 * PH1 - KH + 1
    W1 = W + 2 * PW1 - KW + 1
    H2 = H1 - 2 * PH2
    W2 = W1 - 2 * PW2 + K2W - 1
    padL = K2W - 1 - PW2
    assert padL >= 0
    assert 0 <= PH2 and PH2 + H2 <= H1          # no H padding needed for conv2

    # Zero-pad once in the wrapper: H by PH1, W by PW1 + padL so the kernel can
    # compute the conv1 output already W-padded for the transposed conv.
    # TODO(synk): padding could be folded into the kernel if H/W/N grow.
    xp = jnp.pad(x, ((0, 0), (0, 0), (PH1, PH1), (PW1 + padL, PW1 + padL)))

    kernel = make_kernel(N, C, H1, W1, KH, KW, K2W, PH2, PW2, G)

    out = pl.pallas_call(
        kernel,
        out_shape=jax.ShapeDtypeStruct((N, C, H2, W2), jnp.float32),
        in_specs=[
            pl.BlockSpec(memory_space=pltpu.MemorySpace.SMEM),   # w1 (flat)
            pl.BlockSpec(memory_space=pltpu.MemorySpace.SMEM),   # b1
            pl.BlockSpec(memory_space=pltpu.MemorySpace.SMEM),   # w2 (flat)
            pl.BlockSpec(memory_space=pltpu.MemorySpace.SMEM),   # b2
            pl.BlockSpec(memory_space=pltpu.MemorySpace.VMEM),   # x (padded)
        ],
        out_specs=pl.BlockSpec(memory_space=pltpu.MemorySpace.VMEM),
    )(w1.reshape(-1), b1, w2.reshape(-1), b2, xp)
    return out


def reference(x, w1, b1, w2, b2, groups=2):
    """Pure-JAX reference (lax convs) with PyTorch semantics."""
    v1 = jax.lax.conv_general_dilated(
        x, w1, window_strides=(1, 1), padding=((2, 2), (1, 1)),
        dimension_numbers=("NCHW", "OIHW", "NCHW"),
        precision=jax.lax.Precision.HIGHEST)
    v2 = _sigmoid(v1 + b1[None, :, None, None])

    # ConvTranspose2d (stride 1) == conv with spatially flipped, in/out-swapped
    # kernel and padding (k - 1 - p).  kH == 1 and pH == 2 -> crop 2 rows.
    Cin, CoutG, kH, kW = w2.shape
    G = groups
    Cout = CoutG * G
    CinG = Cin // G
    wc = jnp.zeros((Cout, CinG, kH, kW), w2.dtype)
    for g in range(G):
        for ocl in range(CoutG):
            for icl in range(CinG):
                wc = wc.at[g * CoutG + ocl, icl].set(
                    w2[g * CinG + icl, ocl, ::-1, ::-1])
    v2c = v2[:, :, 2:-2, :]
    v3 = jax.lax.conv_general_dilated(
        v2c, wc, (1, 1), padding=((0, 0), (kW - 1 - 1, kW - 1 - 1)),
        dimension_numbers=("NCHW", "OIHW", "NCHW"),
        feature_group_count=G,
        precision=jax.lax.Precision.HIGHEST)
    return _sigmoid(v3 + b2[None, :, None, None])


if __name__ == "__main__":
    N, C, H, W = 2, 4, 9, 28
    G = 2

    key = jax.random.PRNGKey(0)
    k1, k2, k3, k4, k5 = jax.random.split(key, 5)
    w1 = jax.random.normal(k1, (C, C, 3, 3), jnp.float32) * 0.2
    b1 = jax.random.normal(k2, (C,), jnp.float32) * 0.1
    w2 = jax.random.normal(k3, (C, C // G, 1, 3), jnp.float32) * 0.2
    b2 = jax.random.normal(k4, (C,), jnp.float32) * 0.1
    x = jax.random.normal(k5, (N, C, H, W), jnp.float32)

    out = jax.block_until_ready(model_forward(x, w1, b1, w2, b2))
    assert out.shape == (N, C, 7, 28), out.shape

    ref = jax.block_until_ready(reference(x, w1, b1, w2, b2, groups=G))
    np.testing.assert_allclose(np.asarray(out), np.asarray(ref),
                               rtol=1e-4, atol=1e-4)
    print("KERNEL_OK")
</pallas_src>

<mosaic_0001>
module attributes {stable_mosaic.version = 11 : i64} {
  func.func @kernel(%arg0: memref<144xf32, #tpu.memory_space<smem>>, %arg1: memref<4xf32, #tpu.memory_space<smem>>, %arg2: memref<24xf32, #tpu.memory_space<smem>>, %arg3: memref<4xf32, #tpu.memory_space<smem>>, %arg4: memref<2x4x13x32xf32, #tpu.memory_space<vmem>>, %arg5: memref<2x4x7x28xf32, #tpu.memory_space<vmem>>) attributes {dimension_semantics = [], scalar_prefetch = 0 : i64, scratch_operands = 0 : i64, tpu.core_type = #tpu.core_type<tc>} {
    %0 = tpu.iota {dimensions = array<i32: 1>} : vector<11x30xi32>
    %c1_i32 = arith.constant 1 : i32
    %1 = vector.broadcast %c1_i32 : i32 to vector<11x30xi32>
    %2 = arith.cmpi sge, %0, %1 : vector<11x30xi32>
    %c29_i32 = arith.constant 29 : i32
    %3 = vector.broadcast %c29_i32 : i32 to vector<11x30xi32>
    %4 = arith.cmpi slt, %0, %3 : vector<11x30xi32>
    %5 = arith.andi %2, %4 : vector<11x30xi1>
    %c0 = arith.constant 0 : index
    %c0_0 = arith.constant 0 : index
    %c0_1 = arith.constant 0 : index
    %c0_2 = arith.constant 0 : index
    %6 = vector.load %arg4[%c0, %c0_0, %c0_1, %c0_2] : memref<2x4x13x32xf32, #tpu.memory_space<vmem>>, vector<1x1x13x32xf32>
    %7 = vector.shape_cast %6 : vector<1x1x13x32xf32> to vector<13x32xf32>
    %8 = vector.extract_strided_slice %7 {offsets = [0, 0], sizes = [13, 30], strides = [1, 1]} : vector<13x32xf32> to vector<13x30xf32>
    %9 = vector.extract_strided_slice %8 {offsets = [0, 0], sizes = [11, 30], strides = [1, 1]} : vector<13x30xf32> to vector<11x30xf32>
    %10 = vector.extract_strided_slice %8 {offsets = [1, 0], sizes = [11, 30], strides = [1, 1]} : vector<13x30xf32> to vector<11x30xf32>
    %11 = vector.extract_strided_slice %8 {offsets = [2, 0], sizes = [11, 30], strides = [1, 1]} : vector<13x30xf32> to vector<11x30xf32>
    %12 = vector.extract_strided_slice %7 {offsets = [0, 1], sizes = [13, 30], strides = [1, 1]} : vector<13x32xf32> to vector<13x30xf32>
    %13 = vector.extract_strided_slice %12 {offsets = [0, 0], sizes = [11, 30], strides = [1, 1]} : vector<13x30xf32> to vector<11x30xf32>
    %14 = vector.extract_strided_slice %12 {offsets = [1, 0], sizes = [11, 30], strides = [1, 1]} : vector<13x30xf32> to vector<11x30xf32>
    %15 = vector.extract_strided_slice %12 {offsets = [2, 0], sizes = [11, 30], strides = [1, 1]} : vector<13x30xf32> to vector<11x30xf32>
    %16 = vector.extract_strided_slice %7 {offsets = [0, 2], sizes = [13, 30], strides = [1, 1]} : vector<13x32xf32> to vector<13x30xf32>
    %17 = vector.extract_strided_slice %16 {offsets = [0, 0], sizes = [11, 30], strides = [1, 1]} : vector<13x30xf32> to vector<11x30xf32>
    %18 = vector.extract_strided_slice %16 {offsets = [1, 0], sizes = [11, 30], strides = [1, 1]} : vector<13x30xf32> to vector<11x30xf32>
    %19 = vector.extract_strided_slice %16 {offsets = [2, 0], sizes = [11, 30], strides = [1, 1]} : vector<13x30xf32> to vector<11x30xf32>
    %c0_3 = arith.constant 0 : index
    %c1 = arith.constant 1 : index
    %c0_4 = arith.constant 0 : index
    %c0_5 = arith.constant 0 : index
    %20 = vector.load %arg4[%c0_3, %c1, %c0_4, %c0_5] : memref<2x4x13x32xf32, #tpu.memory_space<vmem>>, vector<1x1x13x32xf32>
    %21 = vector.shape_cast %20 : vector<1x1x13x32xf32> to vector<13x32xf32>
    %22 = vector.extract_strided_slice %21 {offsets = [0, 0], sizes = [13, 30], strides = [1, 1]} : vector<13x32xf32> to vector<13x30xf32>
    %23 = vector.extract_strided_slice %22 {offsets = [0, 0], sizes = [11, 30], strides = [1, 1]} : vector<13x30xf32> to vector<11x30xf32>
    %24 = vector.extract_strided_slice %22 {offsets = [1, 0], sizes = [11, 30], strides = [1, 1]} : vector<13x30xf32> to vector<11x30xf32>
    %25 = vector.extract_strided_slice %22 {offsets = [2, 0], sizes = [11, 30], strides = [1, 1]} : vector<13x30xf32> to vector<11x30xf32>
    %26 = vector.extract_strided_slice %21 {offsets = [0, 1], sizes = [13, 30], strides = [1, 1]} : vector<13x32xf32> to vector<13x30xf32>
    %27 = vector.extract_strided_slice %26 {offsets = [0, 0], sizes = [11, 30], strides = [1, 1]} : vector<13x30xf32> to vector<11x30xf32>
    %28 = vector.extract_strided_slice %26 {offsets = [1, 0], sizes = [11, 30], strides = [1, 1]} : vector<13x30xf32> to vector<11x30xf32>
    %29 = vector.extract_strided_slice %26 {offsets = [2, 0], sizes = [11, 30], strides = [1, 1]} : vector<13x30xf32> to vector<11x30xf32>
    %30 = vector.extract_strided_slice %21 {offsets = [0, 2], sizes = [13, 30], strides = [1, 1]} : vector<13x32xf32> to vector<13x30xf32>
    %31 = vector.extract_strided_slice %30 {offsets = [0, 0], sizes = [11, 30], strides = [1, 1]} : vector<13x30xf32> to vector<11x30xf32>
    %32 = vector.extract_strided_slice %30 {offsets = [1, 0], sizes = [11, 30], strides = [1, 1]} : vector<13x30xf32> to vector<11x30xf32>
    %33 = vector.extract_strided_slice %30 {offsets = [2, 0], sizes = [11, 30], strides = [1, 1]} : vector<13x30xf32> to vector<11x30xf32>
    %c0_6 = arith.constant 0 : index
    %c2 = arith.constant 2 : index
    %c0_7 = arith.constant 0 : index
    %c0_8 = arith.constant 0 : index
    %34 = vector.load %arg4[%c0_6, %c2, %c0_7, %c0_8] : memref<2x4x13x32xf32, #tpu.memory_space<vmem>>, vector<1x1x13x32xf32>
    %35 = vector.shape_cast %34 : vector<1x1x13x32xf32> to vector<13x32xf32>
    %36 = vector.extract_strided_slice %35 {offsets = [0, 0], sizes = [13, 30], strides = [1, 1]} : vector<13x32xf32> to vector<13x30xf32>
    %37 = vector.extract_strided_slice %36 {offsets = [0, 0], sizes = [11, 30], strides = [1, 1]} : vector<13x30xf32> to vector<11x30xf32>
    %38 = vector.extract_strided_slice %36 {offsets = [1, 0], sizes = [11, 30], strides = [1, 1]} : vector<13x30xf32> to vector<11x30xf32>
    %39 = vector.extract_strided_slice %36 {offsets = [2, 0], sizes = [11, 30], strides = [1, 1]} : vector<13x30xf32> to vector<11x30xf32>
    %40 = vector.extract_strided_slice %35 {offsets = [0, 1], sizes = [13, 30], strides = [1, 1]} : vector<13x32xf32> to vector<13x30xf32>
    %41 = vector.extract_strided_slice %40 {offsets = [0, 0], sizes = [11, 30], strides = [1, 1]} : vector<13x30xf32> to vector<11x30xf32>
    %42 = vector.extract_strided_slice %40 {offsets = [1, 0], sizes = [11, 30], strides = [1, 1]} : vector<13x30xf32> to vector<11x30xf32>
    %43 = vector.extract_strided_slice %40 {offsets = [2, 0], sizes = [11, 30], strides = [1, 1]} : vector<13x30xf32> to vector<11x30xf32>
    %44 = vector.extract_strided_slice %35 {offsets = [0, 2], sizes = [13, 30], strides = [1, 1]} : vector<13x32xf32> to vector<13x30xf32>
    %45 = vector.extract_strided_slice %44 {offsets = [0, 0], sizes = [11, 30], strides = [1, 1]} : vector<13x30xf32> to vector<11x30xf32>
    %46 = vector.extract_strided_slice %44 {offsets = [1, 0], sizes = [11, 30], strides = [1, 1]} : vector<13x30xf32> to vector<11x30xf32>
    %47 = vector.extract_strided_slice %44 {offsets = [2, 0], sizes = [11, 30], strides = [1, 1]} : vector<13x30xf32> to vector<11x30xf32>
    %c0_9 = arith.constant 0 : index
    %c3 = arith.constant 3 : index
    %c0_10 = arith.constant 0 : index
    %c0_11 = arith.constant 0 : index
    %48 = vector.load %arg4[%c0_9, %c3, %c0_10, %c0_11] : memref<2x4x13x32xf32, #tpu.memory_space<vmem>>, vector<1x1x13x32xf32>
    %49 = vector.shape_cast %48 : vector<1x1x13x32xf32> to vector<13x32xf32>
    %50 = vector.extract_strided_slice %49 {offsets = [0, 0], sizes = [13, 30], strides = [1, 1]} : vector<13x32xf32> to vector<13x30xf32>
    %51 = vector.extract_strided_slice %50 {offsets = [0, 0], sizes = [11, 30], strides = [1, 1]} : vector<13x30xf32> to vector<11x30xf32>
    %52 = vector.extract_strided_slice %50 {offsets = [1, 0], sizes = [11, 30], strides = [1, 1]} : vector<13x30xf32> to vector<11x30xf32>
    %53 = vector.extract_strided_slice %50 {offsets = [2, 0], sizes = [11, 30], strides = [1, 1]} : vector<13x30xf32> to vector<11x30xf32>
    %54 = vector.extract_strided_slice %49 {offsets = [0, 1], sizes = [13, 30], strides = [1, 1]} : vector<13x32xf32> to vector<13x30xf32>
    %55 = vector.extract_strided_slice %54 {offsets = [0, 0], sizes = [11, 30], strides = [1, 1]} : vector<13x30xf32> to vector<11x30xf32>
    %56 = vector.extract_strided_slice %54 {offsets = [1, 0], sizes = [11, 30], strides = [1, 1]} : vector<13x30xf32> to vector<11x30xf32>
    %57 = vector.extract_strided_slice %54 {offsets = [2, 0], sizes = [11, 30], strides = [1, 1]} : vector<13x30xf32> to vector<11x30xf32>
    %58 = vector.extract_strided_slice %49 {offsets = [0, 2], sizes = [13, 30], strides = [1, 1]} : vector<13x32xf32> to vector<13x30xf32>
    %59 = vector.extract_strided_slice %58 {offsets = [0, 0], sizes = [11, 30], strides = [1, 1]} : vector<13x30xf32> to vector<11x30xf32>
    %60 = vector.extract_strided_slice %58 {offsets = [1, 0], sizes = [11, 30], strides = [1, 1]} : vector<13x30xf32> to vector<11x30xf32>
    %61 = vector.extract_strided_slice %58 {offsets = [2, 0], sizes = [11, 30], strides = [1, 1]} : vector<13x30xf32> to vector<11x30xf32>
    %c0_12 = arith.constant 0 : index
    %62 = memref.load %arg1[%c0_12] : memref<4xf32, #tpu.memory_space<smem>>
    %63 = vector.broadcast %62 : f32 to vector<11x30xf32>
    %c0_13 = arith.constant 0 : index
    %64 = memref.load %arg0[%c0_13] : memref<144xf32, #tpu.memory_space<smem>>
    %65 = vector.broadcast %64 : f32 to vector<11x30xf32>
    %66 = arith.mulf %65, %9 : vector<11x30xf32>
    %67 = arith.addf %63, %66 : vector<11x30xf32>
    %c1_14 = arith.constant 1 : index
    %68 = memref.load %arg0[%c1_14] : memref<144xf32, #tpu.memory_space<smem>>
    %69 = vector.broadcast %68 : f32 to vector<11x30xf32>
    %70 = arith.mulf %69, %13 : vector<11x30xf32>
    %71 = arith.addf %67, %70 : vector<11x30xf32>
    %c2_15 = arith.constant 2 : index
    %72 = memref.load %arg0[%c2_15] : memref<144xf32, #tpu.memory_space<smem>>
    %73 = vector.broadcast %72 : f32 to vector<11x30xf32>
    %74 = arith.mulf %73, %17 : vector<11x30xf32>
    %75 = arith.addf %71, %74 : vector<11x30xf32>
    %c3_16 = arith.constant 3 : index
    %76 = memref.load %arg0[%c3_16] : memref<144xf32, #tpu.memory_space<smem>>
    %77 = vector.broadcast %76 : f32 to vector<11x30xf32>
    %78 = arith.mulf %77, %10 : vector<11x30xf32>
    %79 = arith.addf %75, %78 : vector<11x30xf32>
    %c4 = arith.constant 4 : index
    %80 = memref.load %arg0[%c4] : memref<144xf32, #tpu.memory_space<smem>>
    %81 = vector.broadcast %80 : f32 to vector<11x30xf32>
    %82 = arith.mulf %81, %14 : vector<11x30xf32>
    %83 = arith.addf %79, %82 : vector<11x30xf32>
    %c5 = arith.constant 5 : index
    %84 = memref.load %arg0[%c5] : memref<144xf32, #tpu.memory_space<smem>>
    %85 = vector.broadcast %84 : f32 to vector<11x30xf32>
    %86 = arith.mulf %85, %18 : vector<11x30xf32>
    %87 = arith.addf %83, %86 : vector<11x30xf32>
    %c6 = arith.constant 6 : index
    %88 = memref.load %arg0[%c6] : memref<144xf32, #tpu.memory_space<smem>>
    %89 = vector.broadcast %88 : f32 to vector<11x30xf32>
    %90 = arith.mulf %89, %11 : vector<11x30xf32>
    %91 = arith.addf %87, %90 : vector<11x30xf32>
    %c7 = arith.constant 7 : index
    %92 = memref.load %arg0[%c7] : memref<144xf32, #tpu.memory_space<smem>>
    %93 = vector.broadcast %92 : f32 to vector<11x30xf32>
    %94 = arith.mulf %93, %15 : vector<11x30xf32>
    %95 = arith.addf %91, %94 : vector<11x30xf32>
    %c8 = arith.constant 8 : index
    %96 = memref.load %arg0[%c8] : memref<144xf32, #tpu.memory_space<smem>>
    %97 = vector.broadcast %96 : f32 to vector<11x30xf32>
    %98 = arith.mulf %97, %19 : vector<11x30xf32>
    %99 = arith.addf %95, %98 : vector<11x30xf32>
    %c9 = arith.constant 9 : index
    %100 = memref.load %arg0[%c9] : memref<144xf32, #tpu.memory_space<smem>>
    %101 = vector.broadcast %100 : f32 to vector<11x30xf32>
    %102 = arith.mulf %101, %23 : vector<11x30xf32>
    %103 = arith.addf %99, %102 : vector<11x30xf32>
    %c10 = arith.constant 10 : index
    %104 = memref.load %arg0[%c10] : memref<144xf32, #tpu.memory_space<smem>>
    %105 = vector.broadcast %104 : f32 to vector<11x30xf32>
    %106 = arith.mulf %105, %27 : vector<11x30xf32>
    %107 = arith.addf %103, %106 : vector<11x30xf32>
    %c11 = arith.constant 11 : index
    %108 = memref.load %arg0[%c11] : memref<144xf32, #tpu.memory_space<smem>>
    %109 = vector.broadcast %108 : f32 to vector<11x30xf32>
    %110 = arith.mulf %109, %31 : vector<11x30xf32>
    %111 = arith.addf %107, %110 : vector<11x30xf32>
    %c12 = arith.constant 12 : index
    %112 = memref.load %arg0[%c12] : memref<144xf32, #tpu.memory_space<smem>>
    %113 = vector.broadcast %112 : f32 to vector<11x30xf32>
    %114 = arith.mulf %113, %24 : vector<11x30xf32>
    %115 = arith.addf %111, %114 : vector<11x30xf32>
    %c13 = arith.constant 13 : index
    %116 = memref.load %arg0[%c13] : memref<144xf32, #tpu.memory_space<smem>>
    %117 = vector.broadcast %116 : f32 to vector<11x30xf32>
    %118 = arith.mulf %117, %28 : vector<11x30xf32>
    %119 = arith.addf %115, %118 : vector<11x30xf32>
    %c14 = arith.constant 14 : index
    %120 = memref.load %arg0[%c14] : memref<144xf32, #tpu.memory_space<smem>>
    %121 = vector.broadcast %120 : f32 to vector<11x30xf32>
    %122 = arith.mulf %121, %32 : vector<11x30xf32>
    %123 = arith.addf %119, %122 : vector<11x30xf32>
    %c15 = arith.constant 15 : index
    %124 = memref.load %arg0[%c15] : memref<144xf32, #tpu.memory_space<smem>>
    %125 = vector.broadcast %124 : f32 to vector<11x30xf32>
    %126 = arith.mulf %125, %25 : vector<11x30xf32>
    %127 = arith.addf %123, %126 : vector<11x30xf32>
    %c16 = arith.constant 16 : index
    %128 = memref.load %arg0[%c16] : memref<144xf32, #tpu.memory_space<smem>>
    %129 = vector.broadcast %128 : f32 to vector<11x30xf32>
    %130 = arith.mulf %129, %29 : vector<11x30xf32>
    %131 = arith.addf %127, %130 : vector<11x30xf32>
    %c17 = arith.constant 17 : index
    %132 = memref.load %arg0[%c17] : memref<144xf32, #tpu.memory_space<smem>>
    %133 = vector.broadcast %132 : f32 to vector<11x30xf32>
    %134 = arith.mulf %133, %33 : vector<11x30xf32>
    %135 = arith.addf %131, %134 : vector<11x30xf32>
    %c18 = arith.constant 18 : index
    %136 = memref.load %arg0[%c18] : memref<144xf32, #tpu.memory_space<smem>>
    %137 = vector.broadcast %136 : f32 to vector<11x30xf32>
    %138 = arith.mulf %137, %37 : vector<11x30xf32>
    %139 = arith.addf %135, %138 : vector<11x30xf32>
    %c19 = arith.constant 19 : index
    %140 = memref.load %arg0[%c19] : memref<144xf32, #tpu.memory_space<smem>>
    %141 = vector.broadcast %140 : f32 to vector<11x30xf32>
    %142 = arith.mulf %141, %41 : vector<11x30xf32>
    %143 = arith.addf %139, %142 : vector<11x30xf32>
    %c20 = arith.constant 20 : index
    %144 = memref.load %arg0[%c20] : memref<144xf32, #tpu.memory_space<smem>>
    %145 = vector.broadcast %144 : f32 to vector<11x30xf32>
    %146 = arith.mulf %145, %45 : vector<11x30xf32>
    %147 = arith.addf %143, %146 : vector<11x30xf32>
    %c21 = arith.constant 21 : index
    %148 = memref.load %arg0[%c21] : memref<144xf32, #tpu.memory_space<smem>>
    %149 = vector.broadcast %148 : f32 to vector<11x30xf32>
    %150 = arith.mulf %149, %38 : vector<11x30xf32>
    %151 = arith.addf %147, %150 : vector<11x30xf32>
    %c22 = arith.constant 22 : index
    %152 = memref.load %arg0[%c22] : memref<144xf32, #tpu.memory_space<smem>>
    %153 = vector.broadcast %152 : f32 to vector<11x30xf32>
    %154 = arith.mulf %153, %42 : vector<11x30xf32>
    %155 = arith.addf %151, %154 : vector<11x30xf32>
    %c23 = arith.constant 23 : index
    %156 = memref.load %arg0[%c23] : memref<144xf32, #tpu.memory_space<smem>>
    %157 = vector.broadcast %156 : f32 to vector<11x30xf32>
    %158 = arith.mulf %157, %46 : vector<11x30xf32>
    %159 = arith.addf %155, %158 : vector<11x30xf32>
    %c24 = arith.constant 24 : index
    %160 = memref.load %arg0[%c24] : memref<144xf32, #tpu.memory_space<smem>>
    %161 = vector.broadcast %160 : f32 to vector<11x30xf32>
    %162 = arith.mulf %161, %39 : vector<11x30xf32>
    %163 = arith.addf %159, %162 : vector<11x30xf32>
    %c25 = arith.constant 25 : index
    %164 = memref.load %arg0[%c25] : memref<144xf32, #tpu.memory_space<smem>>
    %165 = vector.broadcast %164 : f32 to vector<11x30xf32>
    %166 = arith.mulf %165, %43 : vector<11x30xf32>
    %167 = arith.addf %163, %166 : vector<11x30xf32>
    %c26 = arith.constant 26 : index
    %168 = memref.load %arg0[%c26] : memref<144xf32, #tpu.memory_space<smem>>
    %169 = vector.broadcast %168 : f32 to vector<11x30xf32>
    %170 = arith.mulf %169, %47 : vector<11x30xf32>
    %171 = arith.addf %167, %170 : vector<11x30xf32>
    %c27 = arith.constant 27 : index
    %172 = memref.load %arg0[%c27] : memref<144xf32, #tpu.memory_space<smem>>
    %173 = vector.broadcast %172 : f32 to vector<11x30xf32>
    %174 = arith.mulf %173, %51 : vector<11x30xf32>
    %175 = arith.addf %171, %174 : vector<11x30xf32>
    %c28 = arith.constant 28 : index
    %176 = memref.load %arg0[%c28] : memref<144xf32, #tpu.memory_space<smem>>
    %177 = vector.broadcast %176 : f32 to vector<11x30xf32>
    %178 = arith.mulf %177, %55 : vector<11x30xf32>
    %179 = arith.addf %175, %178 : vector<11x30xf32>
    %c29 = arith.constant 29 : index
    %180 = memref.load %arg0[%c29] : memref<144xf32, #tpu.memory_space<smem>>
    %181 = vector.broadcast %180 : f32 to vector<11x30xf32>
    %182 = arith.mulf %181, %59 : vector<11x30xf32>
    %183 = arith.addf %179, %182 : vector<11x30xf32>
    %c30 = arith.constant 30 : index
    %184 = memref.load %arg0[%c30] : memref<144xf32, #tpu.memory_space<smem>>
    %185 = vector.broadcast %184 : f32 to vector<11x30xf32>
    %186 = arith.mulf %185, %52 : vector<11x30xf32>
    %187 = arith.addf %183, %186 : vector<11x30xf32>
    %c31 = arith.constant 31 : index
    %188 = memref.load %arg0[%c31] : memref<144xf32, #tpu.memory_space<smem>>
    %189 = vector.broadcast %188 : f32 to vector<11x30xf32>
    %190 = arith.mulf %189, %56 : vector<11x30xf32>
    %191 = arith.addf %187, %190 : vector<11x30xf32>
    %c32 = arith.constant 32 : index
    %192 = memref.load %arg0[%c32] : memref<144xf32, #tpu.memory_space<smem>>
    %193 = vector.broadcast %192 : f32 to vector<11x30xf32>
    %194 = arith.mulf %193, %60 : vector<11x30xf32>
    %195 = arith.addf %191, %194 : vector<11x30xf32>
    %c33 = arith.constant 33 : index
    %196 = memref.load %arg0[%c33] : memref<144xf32, #tpu.memory_space<smem>>
    %197 = vector.broadcast %196 : f32 to vector<11x30xf32>
    %198 = arith.mulf %197, %53 : vector<11x30xf32>
    %199 = arith.addf %195, %198 : vector<11x30xf32>
    %c34 = arith.constant 34 : index
    %200 = memref.load %arg0[%c34] : memref<144xf32, #tpu.memory_space<smem>>
    %201 = vector.broadcast %200 : f32 to vector<11x30xf32>
    %202 = arith.mulf %201, %57 : vector<11x30xf32>
    %203 = arith.addf %199, %202 : vector<11x30xf32>
    %c35 = arith.constant 35 : index
    %204 = memref.load %arg0[%c35] : memref<144xf32, #tpu.memory_space<smem>>
    %205 = vector.broadcast %204 : f32 to vector<11x30xf32>
    %206 = arith.mulf %205, %61 : vector<11x30xf32>
    %207 = arith.addf %203, %206 : vector<11x30xf32>
    %cst = arith.constant 0.000000e+00 : f32
    %208 = vector.broadcast %cst : f32 to vector<11x30xf32>
    %209 = arith.subf %208, %207 : vector<11x30xf32>
    %210 = math.exp %209 : vector<11x30xf32>
    %cst_17 = arith.constant 1.000000e+00 : f32
    %211 = vector.broadcast %cst_17 : f32 to vector<11x30xf32>
    %212 = arith.addf %211, %210 : vector<11x30xf32>
    %cst_18 = arith.constant 1.000000e+00 : f32
    %213 = vector.broadcast %cst_18 : f32 to vector<11x30xf32>
    %214 = arith.divf %213, %212 : vector<11x30xf32>
    %cst_19 = arith.constant 0.000000e+00 : f32
    %215 = vector.broadcast %cst_19 : f32 to vector<11x30xf32>
    %216 = arith.select %5, %214, %215 : vector<11x30xi1>, vector<11x30xf32>
    %c1_20 = arith.constant 1 : index
    %217 = memref.load %arg1[%c1_20] : memref<4xf32, #tpu.memory_space<smem>>
    %218 = vector.broadcast %217 : f32 to vector<11x30xf32>
    %c36 = arith.constant 36 : index
    %219 = memref.load %arg0[%c36] : memref<144xf32, #tpu.memory_space<smem>>
    %220 = vector.broadcast %219 : f32 to vector<11x30xf32>
    %221 = arith.mulf %220, %9 : vector<11x30xf32>
    %222 = arith.addf %218, %221 : vector<11x30xf32>
    %c37 = arith.constant 37 : index
    %223 = memref.load %arg0[%c37] : memref<144xf32, #tpu.memory_space<smem>>
    %224 = vector.broadcast %223 : f32 to vector<11x30xf32>
    %225 = arith.mulf %224, %13 : vector<11x30xf32>
    %226 = arith.addf %222, %225 : vector<11x30xf32>
    %c38 = arith.constant 38 : index
    %227 = memref.load %arg0[%c38] : memref<144xf32, #tpu.memory_space<smem>>
    %228 = vector.broadcast %227 : f32 to vector<11x30xf32>
    %229 = arith.mulf %228, %17 : vector<11x30xf32>
    %230 = arith.addf %226, %229 : vector<11x30xf32>
    %c39 = arith.constant 39 : index
    %231 = memref.load %arg0[%c39] : memref<144xf32, #tpu.memory_space<smem>>
    %232 = vector.broadcast %231 : f32 to vector<11x30xf32>
    %233 = arith.mulf %232, %10 : vector<11x30xf32>
    %234 = arith.addf %230, %233 : vector<11x30xf32>
    %c40 = arith.constant 40 : index
    %235 = memref.load %arg0[%c40] : memref<144xf32, #tpu.memory_space<smem>>
    %236 = vector.broadcast %235 : f32 to vector<11x30xf32>
    %237 = arith.mulf %236, %14 : vector<11x30xf32>
    %238 = arith.addf %234, %237 : vector<11x30xf32>
    %c41 = arith.constant 41 : index
    %239 = memref.load %arg0[%c41] : memref<144xf32, #tpu.memory_space<smem>>
    %240 = vector.broadcast %239 : f32 to vector<11x30xf32>
    %241 = arith.mulf %240, %18 : vector<11x30xf32>
    %242 = arith.addf %238, %241 : vector<11x30xf32>
    %c42 = arith.constant 42 : index
    %243 = memref.load %arg0[%c42] : memref<144xf32, #tpu.memory_space<smem>>
    %244 = vector.broadcast %243 : f32 to vector<11x30xf32>
    %245 = arith.mulf %244, %11 : vector<11x30xf32>
    %246 = arith.addf %242, %245 : vector<11x30xf32>
    %c43 = arith.constant 43 : index
    %247 = memref.load %arg0[%c43] : memref<144xf32, #tpu.memory_space<smem>>
    %248 = vector.broadcast %247 : f32 to vector<11x30xf32>
    %249 = arith.mulf %248, %15 : vector<11x30xf32>
    %250 = arith.addf %246, %249 : vector<11x30xf32>
    %c44 = arith.constant 44 : index
    %251 = memref.load %arg0[%c44] : memref<144xf32, #tpu.memory_space<smem>>
    %252 = vector.broadcast %251 : f32 to vector<11x30xf32>
    %253 = arith.mulf %252, %19 : vector<11x30xf32>
    %254 = arith.addf %250, %253 : vector<11x30xf32>
    %c45 = arith.constant 45 : index
    %255 = memref.load %arg0[%c45] : memref<144xf32, #tpu.memory_space<smem>>
    %256 = vector.broadcast %255 : f32 to vector<11x30xf32>
    %257 = arith.mulf %256, %23 : vector<11x30xf32>
    %258 = arith.addf %254, %257 : vector<11x30xf32>
    %c46 = arith.constant 46 : index
    %259 = memref.load %arg0[%c46] : memref<144xf32, #tpu.memory_space<smem>>
    %260 = vector.broadcast %259 : f32 to vector<11x30xf32>
    %261 = arith.mulf %260, %27 : vector<11x30xf32>
    %262 = arith.addf %258, %261 : vector<11x30xf32>
    %c47 = arith.constant 47 : index
    %263 = memref.load %arg0[%c47] : memref<144xf32, #tpu.memory_space<smem>>
    %264 = vector.broadcast %263 : f32 to vector<11x30xf32>
    %265 = arith.mulf %264, %31 : vector<11x30xf32>
    %266 = arith.addf %262, %265 : vector<11x30xf32>
    %c48 = arith.constant 48 : index
    %267 = memref.load %arg0[%c48] : memref<144xf32, #tpu.memory_space<smem>>
    %268 = vector.broadcast %267 : f32 to vector<11x30xf32>
    %269 = arith.mulf %268, %24 : vector<11x30xf32>
    %270 = arith.addf %266, %269 : vector<11x30xf32>
    %c49 = arith.constant 49 : index
    %271 = memref.load %arg0[%c49] : memref<144xf32, #tpu.memory_space<smem>>
    %272 = vector.broadcast %271 : f32 to vector<11x30xf32>
    %273 = arith.mulf %272, %28 : vector<11x30xf32>
    %274 = arith.addf %270, %273 : vector<11x30xf32>
    %c50 = arith.constant 50 : index
    %275 = memref.load %arg0[%c50] : memref<144xf32, #tpu.memory_space<smem>>
    %276 = vector.broadcast %275 : f32 to vector<11x30xf32>
    %277 = arith.mulf %276, %32 : vector<11x30xf32>
    %278 = arith.addf %274, %277 : vector<11x30xf32>
    %c51 = arith.constant 51 : index
    %279 = memref.load %arg0[%c51] : memref<144xf32, #tpu.memory_space<smem>>
    %280 = vector.broadcast %279 : f32 to vector<11x30xf32>
    %281 = arith.mulf %280, %25 : vector<11x30xf32>
    %282 = arith.addf %278, %281 : vector<11x30xf32>
    %c52 = arith.constant 52 : index
    %283 = memref.load %arg0[%c52] : memref<144xf32, #tpu.memory_space<smem>>
    %284 = vector.broadcast %283 : f32 to vector<11x30xf32>
    %285 = arith.mulf %284, %29 : vector<11x30xf32>
    %286 = arith.addf %282, %285 : vector<11x30xf32>
    %c53 = arith.constant 53 : index
    %287 = memref.load %arg0[%c53] : memref<144xf32, #tpu.memory_space<smem>>
    %288 = vector.broadcast %287 : f32 to vector<11x30xf32>
    %289 = arith.mulf %288, %33 : vector<11x30xf32>
    %290 = arith.addf %286, %289 : vector<11x30xf32>
    %c54 = arith.constant 54 : index
    %291 = memref.load %arg0[%c54] : memref<144xf32, #tpu.memory_space<smem>>
    %292 = vector.broadcast %291 : f32 to vector<11x30xf32>
    %293 = arith.mulf %292, %37 : vector<11x30xf32>
    %294 = arith.addf %290, %293 : vector<11x30xf32>
    %c55 = arith.constant 55 : index
    %295 = memref.load %arg0[%c55] : memref<144xf32, #tpu.memory_space<smem>>
    %296 = vector.broadcast %295 : f32 to vector<11x30xf32>
    %297 = arith.mulf %296, %41 : vector<11x30xf32>
    %298 = arith.addf %294, %297 : vector<11x30xf32>
    %c56 = arith.constant 56 : index
    %299 = memref.load %arg0[%c56] : memref<144xf32, #tpu.memory_space<smem>>
    %300 = vector.broadcast %299 : f32 to vector<11x30xf32>
    %301 = arith.mulf %300, %45 : vector<11x30xf32>
    %302 = arith.addf %298, %301 : vector<11x30xf32>
    %c57 = arith.constant 57 : index
    %303 = memref.load %arg0[%c57] : memref<144xf32, #tpu.memory_space<smem>>
    %304 = vector.broadcast %303 : f32 to vector<11x30xf32>
    %305 = arith.mulf %304, %38 : vector<11x30xf32>
    %306 = arith.addf %302, %305 : vector<11x30xf32>
    %c58 = arith.constant 58 : index
    %307 = memref.load %arg0[%c58] : memref<144xf32, #tpu.memory_space<smem>>
    %308 = vector.broadcast %307 : f32 to vector<11x30xf32>
    %309 = arith.mulf %308, %42 : vector<11x30xf32>
    %310 = arith.addf %306, %309 : vector<11x30xf32>
    %c59 = arith.constant 59 : index
    %311 = memref.load %arg0[%c59] : memref<144xf32, #tpu.memory_space<smem>>
    %312 = vector.broadcast %311 : f32 to vector<11x30xf32>
    %313 = arith.mulf %312, %46 : vector<11x30xf32>
    %314 = arith.addf %310, %313 : vector<11x30xf32>
    %c60 = arith.constant 60 : index
    %315 = memref.load %arg0[%c60] : memref<144xf32, #tpu.memory_space<smem>>
    %316 = vector.broadcast %315 : f32 to vector<11x30xf32>
    %317 = arith.mulf %316, %39 : vector<11x30xf32>
    %318 = arith.addf %314, %317 : vector<11x30xf32>
    %c61 = arith.constant 61 : index
    %319 = memref.load %arg0[%c61] : memref<144xf32, #tpu.memory_space<smem>>
    %320 = vector.broadcast %319 : f32 to vector<11x30xf32>
    %321 = arith.mulf %320, %43 : vector<11x30xf32>
    %322 = arith.addf %318, %321 : vector<11x30xf32>
    %c62 = arith.constant 62 : index
    %323 = memref.load %arg0[%c62] : memref<144xf32, #tpu.memory_space<smem>>
    %324 = vector.broadcast %323 : f32 to vector<11x30xf32>
    %325 = arith.mulf %324, %47 : vector<11x30xf32>
    %326 = arith.addf %322, %325 : vector<11x30xf32>
    %c63 = arith.constant 63 : index
    %327 = memref.load %arg0[%c63] : memref<144xf32, #tpu.memory_space<smem>>
    %328 = vector.broadcast %327 : f32 to vector<11x30xf32>
    %329 = arith.mulf %328, %51 : vector<11x30xf32>
    %330 = arith.addf %326, %329 : vector<11x30xf32>
    %c64 = arith.constant 64 : index
    %331 = memref.load %arg0[%c64] : memref<144xf32, #tpu.memory_space<smem>>
    %332 = vector.broadcast %331 : f32 to vector<11x30xf32>
    %333 = arith.mulf %332, %55 : vector<11x30xf32>
    %334 = arith.addf %330, %333 : vector<11x30xf32>
    %c65 = arith.constant 65 : index
    %335 = memref.load %arg0[%c65] : memref<144xf32, #tpu.memory_space<smem>>
    %336 = vector.broadcast %335 : f32 to vector<11x30xf32>
    %337 = arith.mulf %336, %59 : vector<11x30xf32>
    %338 = arith.addf %334, %337 : vector<11x30xf32>
    %c66 = arith.constant 66 : index
    %339 = memref.load %arg0[%c66] : memref<144xf32, #tpu.memory_space<smem>>
    %340 = vector.broadcast %339 : f32 to vector<11x30xf32>
    %341 = arith.mulf %340, %52 : vector<11x30xf32>
    %342 = arith.addf %338, %341 : vector<11x30xf32>
    %c67 = arith.constant 67 : index
    %343 = memref.load %arg0[%c67] : memref<144xf32, #tpu.memory_space<smem>>
    %344 = vector.broadcast %343 : f32 to vector<11x30xf32>
    %345 = arith.mulf %344, %56 : vector<11x30xf32>
    %346 = arith.addf %342, %345 : vector<11x30xf32>
    %c68 = arith.constant 68 : index
    %347 = memref.load %arg0[%c68] : memref<144xf32, #tpu.memory_space<smem>>
    %348 = vector.broadcast %347 : f32 to vector<11x30xf32>
    %349 = arith.mulf %348, %60 : vector<11x30xf32>
    %350 = arith.addf %346, %349 : vector<11x30xf32>
    %c69 = arith.constant 69 : index
    %351 = memref.load %arg0[%c69] : memref<144xf32, #tpu.memory_space<smem>>
    %352 = vector.broadcast %351 : f32 to vector<11x30xf32>
    %353 = arith.mulf %352, %53 : vector<11x30xf32>
    %354 = arith.addf %350, %353 : vector<11x30xf32>
    %c70 = arith.constant 70 : index
    %355 = memref.load %arg0[%c70] : memref<144xf32, #tpu.memory_space<smem>>
    %356 = vector.broadcast %355 : f32 to vector<11x30xf32>
    %357 = arith.mulf %356, %57 : vector<11x30xf32>
    %358 = arith.addf %354, %357 : vector<11x30xf32>
    %c71 = arith.constant 71 : index
    %359 = memref.load %arg0[%c71] : memref<144xf32, #tpu.memory_space<smem>>
    %360 = vector.broadcast %359 : f32 to vector<11x30xf32>
    %361 = arith.mulf %360, %61 : vector<11x30xf32>
    %362 = arith.addf %358, %361 : vector<11x30xf32>
    %cst_21 = arith.constant 0.000000e+00 : f32
    %363 = vector.broadcast %cst_21 : f32 to vector<11x30xf32>
    %364 = arith.subf %363, %362 : vector<11x30xf32>
    %365 = math.exp %364 : vector<11x30xf32>
    %cst_22 = arith.constant 1.000000e+00 : f32
    %366 = vector.broadcast %cst_22 : f32 to vector<11x30xf32>
    %367 = arith.addf %366, %365 : vector<11x30xf32>
    %cst_23 = arith.constant 1.000000e+00 : f32
    %368 = vector.broadcast %cst_23 : f32 to vector<11x30xf32>
    %369 = arith.divf %368, %367 : vector<11x30xf32>
    %cst_24 = arith.constant 0.000000e+00 : f32
    %370 = vector.broadcast %cst_24 : f32 to vector<11x30xf32>
    %371 = arith.select %5, %369, %370 : vector<11x30xi1>, vector<11x30xf32>
    %c2_25 = arith.constant 2 : index
    %372 = memref.load %arg1[%c2_25] : memref<4xf32, #tpu.memory_space<smem>>
    %373 = vector.broadcast %372 : f32 to vector<11x30xf32>
    %c72 = arith.constant 72 : index
    %374 = memref.load %arg0[%c72] : memref<144xf32, #tpu.memory_space<smem>>
    %375 = vector.broadcast %374 : f32 to vector<11x30xf32>
    %376 = arith.mulf %375, %9 : vector<11x30xf32>
    %377 = arith.addf %373, %376 : vector<11x30xf32>
    %c73 = arith.constant 73 : index
    %378 = memref.load %arg0[%c73] : memref<144xf32, #tpu.memory_space<smem>>
    %379 = vector.broadcast %378 : f32 to vector<11x30xf32>
    %380 = arith.mulf %379, %13 : vector<11x30xf32>
    %381 = arith.addf %377, %380 : vector<11x30xf32>
    %c74 = arith.constant 74 : index
    %382 = memref.load %arg0[%c74] : memref<144xf32, #tpu.memory_space<smem>>
    %383 = vector.broadcast %382 : f32 to vector<11x30xf32>
    %384 = arith.mulf %383, %17 : vector<11x30xf32>
    %385 = arith.addf %381, %384 : vector<11x30xf32>
    %c75 = arith.constant 75 : index
    %386 = memref.load %arg0[%c75] : memref<144xf32, #tpu.memory_space<smem>>
    %387 = vector.broadcast %386 : f32 to vector<11x30xf32>
    %388 = arith.mulf %387, %10 : vector<11x30xf32>
    %389 = arith.addf %385, %388 : vector<11x30xf32>
    %c76 = arith.constant 76 : index
    %390 = memref.load %arg0[%c76] : memref<144xf32, #tpu.memory_space<smem>>
    %391 = vector.broadcast %390 : f32 to vector<11x30xf32>
    %392 = arith.mulf %391, %14 : vector<11x30xf32>
    %393 = arith.addf %389, %392 : vector<11x30xf32>
    %c77 = arith.constant 77 : index
    %394 = memref.load %arg0[%c77] : memref<144xf32, #tpu.memory_space<smem>>
    %395 = vector.broadcast %394 : f32 to vector<11x30xf32>
    %396 = arith.mulf %395, %18 : vector<11x30xf32>
    %397 = arith.addf %393, %396 : vector<11x30xf32>
    %c78 = arith.constant 78 : index
    %398 = memref.load %arg0[%c78] : memref<144xf32, #tpu.memory_space<smem>>
    %399 = vector.broadcast %398 : f32 to vector<11x30xf32>
    %400 = arith.mulf %399, %11 : vector<11x30xf32>
    %401 = arith.addf %397, %400 : vector<11x30xf32>
    %c79 = arith.constant 79 : index
    %402 = memref.load %arg0[%c79] : memref<144xf32, #tpu.memory_space<smem>>
    %403 = vector.broadcast %402 : f32 to vector<11x30xf32>
    %404 = arith.mulf %403, %15 : vector<11x30xf32>
    %405 = arith.addf %401, %404 : vector<11x30xf32>
    %c80 = arith.constant 80 : index
    %406 = memref.load %arg0[%c80] : memref<144xf32, #tpu.memory_space<smem>>
    %407 = vector.broadcast %406 : f32 to vector<11x30xf32>
    %408 = arith.mulf %407, %19 : vector<11x30xf32>
    %409 = arith.addf %405, %408 : vector<11x30xf32>
    %c81 = arith.constant 81 : index
    %410 = memref.load %arg0[%c81] : memref<144xf32, #tpu.memory_space<smem>>
    %411 = vector.broadcast %410 : f32 to vector<11x30xf32>
    %412 = arith.mulf %411, %23 : vector<11x30xf32>
    %413 = arith.addf %409, %412 : vector<11x30xf32>
    %c82 = arith.constant 82 : index
    %414 = memref.load %arg0[%c82] : memref<144xf32, #tpu.memory_space<smem>>
    %415 = vector.broadcast %414 : f32 to vector<11x30xf32>
    %416 = arith.mulf %415, %27 : vector<11x30xf32>
    %417 = arith.addf %413, %416 : vector<11x30xf32>
    %c83 = arith.constant 83 : index
    %418 = memref.load %arg0[%c83] : memref<144xf32, #tpu.memory_space<smem>>
    %419 = vector.broadcast %418 : f32 to vector<11x30xf32>
    %420 = arith.mulf %419, %31 : vector<11x30xf32>
    %421 = arith.addf %417, %420 : vector<11x30xf32>
    %c84 = arith.constant 84 : index
    %422 = memref.load %arg0[%c84] : memref<144xf32, #tpu.memory_space<smem>>
    %423 = vector.broadcast %422 : f32 to vector<11x30xf32>
    %424 = arith.mulf %423, %24 : vector<11x30xf32>
    %425 = arith.addf %421, %424 : vector<11x30xf32>
    %c85 = arith.constant 85 : index
    %426 = memref.load %arg0[%c85] : memref<144xf32, #tpu.memory_space<smem>>
    %427 = vector.broadcast %426 : f32 to vector<11x30xf32>
    %428 = arith.mulf %427, %28 : vector<11x30xf32>
    %429 = arith.addf %425, %428 : vector<11x30xf32>
    %c86 = arith.constant 86 : index
    %430 = memref.load %arg0[%c86] : memref<144xf32, #tpu.memory_space<smem>>
    %431 = vector.broadcast %430 : f32 to vector<11x30xf32>
    %432 = arith.mulf %431, %32 : vector<11x30xf32>
    %433 = arith.addf %429, %432 : vector<11x30xf32>
    %c87 = arith.constant 87 : index
    %434 = memref.load %arg0[%c87] : memref<144xf32, #tpu.memory_space<smem>>
    %435 = vector.broadcast %434 : f32 to vector<11x30xf32>
    %436 = arith.mulf %435, %25 : vector<11x30xf32>
    %437 = arith.addf %433, %436 : vector<11x30xf32>
    %c88 = arith.constant 88 : index
    %438 = memref.load %arg0[%c88] : memref<144xf32, #tpu.memory_space<smem>>
    %439 = vector.broadcast %438 : f32 to vector<11x30xf32>
    %440 = arith.mulf %439, %29 : vector<11x30xf32>
    %441 = arith.addf %437, %440 : vector<11x30xf32>
    %c89 = arith.constant 89 : index
    %442 = memref.load %arg0[%c89] : memref<144xf32, #tpu.memory_space<smem>>
    %443 = vector.broadcast %442 : f32 to vector<11x30xf32>
    %444 = arith.mulf %443, %33 : vector<11x30xf32>
    %445 = arith.addf %441, %444 : vector<11x30xf32>
    %c90 = arith.constant 90 : index
    %446 = memref.load %arg0[%c90] : memref<144xf32, #tpu.memory_space<smem>>
    %447 = vector.broadcast %446 : f32 to vector<11x30xf32>
    %448 = arith.mulf %447, %37 : vector<11x30xf32>
    %449 = arith.addf %445, %448 : vector<11x30xf32>
    %c91 = arith.constant 91 : index
    %450 = memref.load %arg0[%c91] : memref<144xf32, #tpu.memory_space<smem>>
    %451 = vector.broadcast %450 : f32 to vector<11x30xf32>
    %452 = arith.mulf %451, %41 : vector<11x30xf32>
    %453 = arith.addf %449, %452 : vector<11x30xf32>
    %c92 = arith.constant 92 : index
    %454 = memref.load %arg0[%c92] : memref<144xf32, #tpu.memory_space<smem>>
    %455 = vector.broadcast %454 : f32 to vector<11x30xf32>
    %456 = arith.mulf %455, %45 : vector<11x30xf32>
    %457 = arith.addf %453, %456 : vector<11x30xf32>
    %c93 = arith.constant 93 : index
    %458 = memref.load %arg0[%c93] : memref<144xf32, #tpu.memory_space<smem>>
    %459 = vector.broadcast %458 : f32 to vector<11x30xf32>
    %460 = arith.mulf %459, %38 : vector<11x30xf32>
    %461 = arith.addf %457, %460 : vector<11x30xf32>
    %c94 = arith.constant 94 : index
    %462 = memref.load %arg0[%c94] : memref<144xf32, #tpu.memory_space<smem>>
    %463 = vector.broadcast %462 : f32 to vector<11x30xf32>
    %464 = arith.mulf %463, %42 : vector<11x30xf32>
    %465 = arith.addf %461, %464 : vector<11x30xf32>
    %c95 = arith.constant 95 : index
    %466 = memref.load %arg0[%c95] : memref<144xf32, #tpu.memory_space<smem>>
    %467 = vector.broadcast %466 : f32 to vector<11x30xf32>
    %468 = arith.mulf %467, %46 : vector<11x30xf32>
    %469 = arith.addf %465, %468 : vector<11x30xf32>
    %c96 = arith.constant 96 : index
    %470 = memref.load %arg0[%c96] : memref<144xf32, #tpu.memory_space<smem>>
    %471 = vector.broadcast %470 : f32 to vector<11x30xf32>
    %472 = arith.mulf %471, %39 : vector<11x30xf32>
    %473 = arith.addf %469, %472 : vector<11x30xf32>
    %c97 = arith.constant 97 : index
    %474 = memref.load %arg0[%c97] : memref<144xf32, #tpu.memory_space<smem>>
    %475 = vector.broadcast %474 : f32 to vector<11x30xf32>
    %476 = arith.mulf %475, %43 : vector<11x30xf32>
    %477 = arith.addf %473, %476 : vector<11x30xf32>
    %c98 = arith.constant 98 : index
    %478 = memref.load %arg0[%c98] : memref<144xf32, #tpu.memory_space<smem>>
    %479 = vector.broadcast %478 : f32 to vector<11x30xf32>
    %480 = arith.mulf %479, %47 : vector<11x30xf32>
    %481 = arith.addf %477, %480 : vector<11x30xf32>
    %c99 = arith.constant 99 : index
    %482 = memref.load %arg0[%c99] : memref<144xf32, #tpu.memory_space<smem>>
    %483 = vector.broadcast %482 : f32 to vector<11x30xf32>
    %484 = arith.mulf %483, %51 : vector<11x30xf32>
    %485 = arith.addf %481, %484 : vector<11x30xf32>
    %c100 = arith.constant 100 : index
    %486 = memref.load %arg0[%c100] : memref<144xf32, #tpu.memory_space<smem>>
    %487 = vector.broadcast %486 : f32 to vector<11x30xf32>
    %488 = arith.mulf %487, %55 : vector<11x30xf32>
    %489 = arith.addf %485, %488 : vector<11x30xf32>
    %c101 = arith.constant 101 : index
    %490 = memref.load %arg0[%c101] : memref<144xf32, #tpu.memory_space<smem>>
    %491 = vector.broadcast %490 : f32 to vector<11x30xf32>
    %492 = arith.mulf %491, %59 : vector<11x30xf32>
    %493 = arith.addf %489, %492 : vector<11x30xf32>
    %c102 = arith.constant 102 : index
    %494 = memref.load %arg0[%c102] : memref<144xf32, #tpu.memory_space<smem>>
    %495 = vector.broadcast %494 : f32 to vector<11x30xf32>
    %496 = arith.mulf %495, %52 : vector<11x30xf32>
    %497 = arith.addf %493, %496 : vector<11x30xf32>
    %c103 = arith.constant 103 : index
    %498 = memref.load %arg0[%c103] : memref<144xf32, #tpu.memory_space<smem>>
    %499 = vector.broadcast %498 : f32 to vector<11x30xf32>
    %500 = arith.mulf %499, %56 : vector<11x30xf32>
    %501 = arith.addf %497, %500 : vector<11x30xf32>
    %c104 = arith.constant 104 : index
    %502 = memref.load %arg0[%c104] : memref<144xf32, #tpu.memory_space<smem>>
    %503 = vector.broadcast %502 : f32 to vector<11x30xf32>
    %504 = arith.mulf %503, %60 : vector<11x30xf32>
    %505 = arith.addf %501, %504 : vector<11x30xf32>
    %c105 = arith.constant 105 : index
    %506 = memref.load %arg0[%c105] : memref<144xf32, #tpu.memory_space<smem>>
    %507 = vector.broadcast %506 : f32 to vector<11x30xf32>
    %508 = arith.mulf %507, %53 : vector<11x30xf32>
    %509 = arith.addf %505, %508 : vector<11x30xf32>
    %c106 = arith.constant 106 : index
    %510 = memref.load %arg0[%c106] : memref<144xf32, #tpu.memory_space<smem>>
    %511 = vector.broadcast %510 : f32 to vector<11x30xf32>
    %512 = arith.mulf %511, %57 : vector<11x30xf32>
    %513 = arith.addf %509, %512 : vector<11x30xf32>
    %c107 = arith.constant 107 : index
    %514 = memref.load %arg0[%c107] : memref<144xf32, #tpu.memory_space<smem>>
    %515 = vector.broadcast %514 : f32 to vector<11x30xf32>
    %516 = arith.mulf %515, %61 : vector<11x30xf32>
    %517 = arith.addf %513, %516 : vector<11x30xf32>
    %cst_26 = arith.constant 0.000000e+00 : f32
    %518 = vector.broadcast %cst_26 : f32 to vector<11x30xf32>
    %519 = arith.subf %518, %517 : vector<11x30xf32>
    %520 = math.exp %519 : vector<11x30xf32>
    %cst_27 = arith.constant 1.000000e+00 : f32
    %521 = vector.broadcast %cst_27 : f32 to vector<11x30xf32>
    %522 = arith.addf %521, %520 : vector<11x30xf32>
    %cst_28 = arith.constant 1.000000e+00 : f32
    %523 = vector.broadcast %cst_28 : f32 to vector<11x30xf32>
    %524 = arith.divf %523, %522 : vector<11x30xf32>
    %cst_29 = arith.constant 0.000000e+00 : f32
    %525 = vector.broadcast %cst_29 : f32 to vector<11x30xf32>
    %526 = arith.select %5, %524, %525 : vector<11x30xi1>, vector<11x30xf32>
    %c3_30 = arith.constant 3 : index
    %527 = memref.load %arg1[%c3_30] : memref<4xf32, #tpu.memory_space<smem>>
    %528 = vector.broadcast %527 : f32 to vector<11x30xf32>
    %c108 = arith.constant 108 : index
    %529 = memref.load %arg0[%c108] : memref<144xf32, #tpu.memory_space<smem>>
    %530 = vector.broadcast %529 : f32 to vector<11x30xf32>
    %531 = arith.mulf %530, %9 : vector<11x30xf32>
    %532 = arith.addf %528, %531 : vector<11x30xf32>
    %c109 = arith.constant 109 : index
    %533 = memref.load %arg0[%c109] : memref<144xf32, #tpu.memory_space<smem>>
    %534 = vector.broadcast %533 : f32 to vector<11x30xf32>
    %535 = arith.mulf %534, %13 : vector<11x30xf32>
    %536 = arith.addf %532, %535 : vector<11x30xf32>
    %c110 = arith.constant 110 : index
    %537 = memref.load %arg0[%c110] : memref<144xf32, #tpu.memory_space<smem>>
    %538 = vector.broadcast %537 : f32 to vector<11x30xf32>
    %539 = arith.mulf %538, %17 : vector<11x30xf32>
    %540 = arith.addf %536, %539 : vector<11x30xf32>
    %c111 = arith.constant 111 : index
    %541 = memref.load %arg0[%c111] : memref<144xf32, #tpu.memory_space<smem>>
    %542 = vector.broadcast %541 : f32 to vector<11x30xf32>
    %543 = arith.mulf %542, %10 : vector<11x30xf32>
    %544 = arith.addf %540, %543 : vector<11x30xf32>
    %c112 = arith.constant 112 : index
    %545 = memref.load %arg0[%c112] : memref<144xf32, #tpu.memory_space<smem>>
    %546 = vector.broadcast %545 : f32 to vector<11x30xf32>
    %547 = arith.mulf %546, %14 : vector<11x30xf32>
    %548 = arith.addf %544, %547 : vector<11x30xf32>
    %c113 = arith.constant 113 : index
    %549 = memref.load %arg0[%c113] : memref<144xf32, #tpu.memory_space<smem>>
    %550 = vector.broadcast %549 : f32 to vector<11x30xf32>
    %551 = arith.mulf %550, %18 : vector<11x30xf32>
    %552 = arith.addf %548, %551 : vector<11x30xf32>
    %c114 = arith.constant 114 : index
    %553 = memref.load %arg0[%c114] : memref<144xf32, #tpu.memory_space<smem>>
    %554 = vector.broadcast %553 : f32 to vector<11x30xf32>
    %555 = arith.mulf %554, %11 : vector<11x30xf32>
    %556 = arith.addf %552, %555 : vector<11x30xf32>
    %c115 = arith.constant 115 : index
    %557 = memref.load %arg0[%c115] : memref<144xf32, #tpu.memory_space<smem>>
    %558 = vector.broadcast %557 : f32 to vector<11x30xf32>
    %559 = arith.mulf %558, %15 : vector<11x30xf32>
    %560 = arith.addf %556, %559 : vector<11x30xf32>
    %c116 = arith.constant 116 : index
    %561 = memref.load %arg0[%c116] : memref<144xf32, #tpu.memory_space<smem>>
    %562 = vector.broadcast %561 : f32 to vector<11x30xf32>
    %563 = arith.mulf %562, %19 : vector<11x30xf32>
    %564 = arith.addf %560, %563 : vector<11x30xf32>
    %c117 = arith.constant 117 : index
    %565 = memref.load %arg0[%c117] : memref<144xf32, #tpu.memory_space<smem>>
    %566 = vector.broadcast %565 : f32 to vector<11x30xf32>
    %567 = arith.mulf %566, %23 : vector<11x30xf32>
    %568 = arith.addf %564, %567 : vector<11x30xf32>
    %c118 = arith.constant 118 : index
    %569 = memref.load %arg0[%c118] : memref<144xf32, #tpu.memory_space<smem>>
    %570 = vector.broadcast %569 : f32 to vector<11x30xf32>
    %571 = arith.mulf %570, %27 : vector<11x30xf32>
    %572 = arith.addf %568, %571 : vector<11x30xf32>
    %c119 = arith.constant 119 : index
    %573 = memref.load %arg0[%c119] : memref<144xf32, #tpu.memory_space<smem>>
    %574 = vector.broadcast %573 : f32 to vector<11x30xf32>
    %575 = arith.mulf %574, %31 : vector<11x30xf32>
    %576 = arith.addf %572, %575 : vector<11x30xf32>
    %c120 = arith.constant 120 : index
    %577 = memref.load %arg0[%c120] : memref<144xf32, #tpu.memory_space<smem>>
    %578 = vector.broadcast %577 : f32 to vector<11x30xf32>
    %579 = arith.mulf %578, %24 : vector<11x30xf32>
    %580 = arith.addf %576, %579 : vector<11x30xf32>
    %c121 = arith.constant 121 : index
    %581 = memref.load %arg0[%c121] : memref<144xf32, #tpu.memory_space<smem>>
    %582 = vector.broadcast %581 : f32 to vector<11x30xf32>
    %583 = arith.mulf %582, %28 : vector<11x30xf32>
    %584 = arith.addf %580, %583 : vector<11x30xf32>
    %c122 = arith.constant 122 : index
    %585 = memref.load %arg0[%c122] : memref<144xf32, #tpu.memory_space<smem>>
    %586 = vector.broadcast %585 : f32 to vector<11x30xf32>
    %587 = arith.mulf %586, %32 : vector<11x30xf32>
    %588 = arith.addf %584, %587 : vector<11x30xf32>
    %c123 = arith.constant 123 : index
    %589 = memref.load %arg0[%c123] : memref<144xf32, #tpu.memory_space<smem>>
    %590 = vector.broadcast %589 : f32 to vector<11x30xf32>
    %591 = arith.mulf %590, %25 : vector<11x30xf32>
    %592 = arith.addf %588, %591 : vector<11x30xf32>
    %c124 = arith.constant 124 : index
    %593 = memref.load %arg0[%c124] : memref<144xf32, #tpu.memory_space<smem>>
    %594 = vector.broadcast %593 : f32 to vector<11x30xf32>
    %595 = arith.mulf %594, %29 : vector<11x30xf32>
    %596 = arith.addf %592, %595 : vector<11x30xf32>
    %c125 = arith.constant 125 : index
    %597 = memref.load %arg0[%c125] : memref<144xf32, #tpu.memory_space<smem>>
    %598 = vector.broadcast %597 : f32 to vector<11x30xf32>
    %599 = arith.mulf %598, %33 : vector<11x30xf32>
    %600 = arith.addf %596, %599 : vector<11x30xf32>
    %c126 = arith.constant 126 : index
    %601 = memref.load %arg0[%c126] : memref<144xf32, #tpu.memory_space<smem>>
    %602 = vector.broadcast %601 : f32 to vector<11x30xf32>
    %603 = arith.mulf %602, %37 : vector<11x30xf32>
    %604 = arith.addf %600, %603 : vector<11x30xf32>
    %c127 = arith.constant 127 : index
    %605 = memref.load %arg0[%c127] : memref<144xf32, #tpu.memory_space<smem>>
    %606 = vector.broadcast %605 : f32 to vector<11x30xf32>
    %607 = arith.mulf %606, %41 : vector<11x30xf32>
    %608 = arith.addf %604, %607 : vector<11x30xf32>
    %c128 = arith.constant 128 : index
    %609 = memref.load %arg0[%c128] : memref<144xf32, #tpu.memory_space<smem>>
    %610 = vector.broadcast %609 : f32 to vector<11x30xf32>
    %611 = arith.mulf %610, %45 : vector<11x30xf32>
    %612 = arith.addf %608, %611 : vector<11x30xf32>
    %c129 = arith.constant 129 : index
    %613 = memref.load %arg0[%c129] : memref<144xf32, #tpu.memory_space<smem>>
    %614 = vector.broadcast %613 : f32 to vector<11x30xf32>
    %615 = arith.mulf %614, %38 : vector<11x30xf32>
    %616 = arith.addf %612, %615 : vector<11x30xf32>
    %c130 = arith.constant 130 : index
    %617 = memref.load %arg0[%c130] : memref<144xf32, #tpu.memory_space<smem>>
    %618 = vector.broadcast %617 : f32 to vector<11x30xf32>
    %619 = arith.mulf %618, %42 : vector<11x30xf32>
    %620 = arith.addf %616, %619 : vector<11x30xf32>
    %c131 = arith.constant 131 : index
    %621 = memref.load %arg0[%c131] : memref<144xf32, #tpu.memory_space<smem>>
    %622 = vector.broadcast %621 : f32 to vector<11x30xf32>
    %623 = arith.mulf %622, %46 : vector<11x30xf32>
    %624 = arith.addf %620, %623 : vector<11x30xf32>
    %c132 = arith.constant 132 : index
    %625 = memref.load %arg0[%c132] : memref<144xf32, #tpu.memory_space<smem>>
    %626 = vector.broadcast %625 : f32 to vector<11x30xf32>
    %627 = arith.mulf %626, %39 : vector<11x30xf32>
    %628 = arith.addf %624, %627 : vector<11x30xf32>
    %c133 = arith.constant 133 : index
    %629 = memref.load %arg0[%c133] : memref<144xf32, #tpu.memory_space<smem>>
    %630 = vector.broadcast %629 : f32 to vector<11x30xf32>
    %631 = arith.mulf %630, %43 : vector<11x30xf32>
    %632 = arith.addf %628, %631 : vector<11x30xf32>
    %c134 = arith.constant 134 : index
    %633 = memref.load %arg0[%c134] : memref<144xf32, #tpu.memory_space<smem>>
    %634 = vector.broadcast %633 : f32 to vector<11x30xf32>
    %635 = arith.mulf %634, %47 : vector<11x30xf32>
    %636 = arith.addf %632, %635 : vector<11x30xf32>
    %c135 = arith.constant 135 : index
    %637 = memref.load %arg0[%c135] : memref<144xf32, #tpu.memory_space<smem>>
    %638 = vector.broadcast %637 : f32 to vector<11x30xf32>
    %639 = arith.mulf %638, %51 : vector<11x30xf32>
    %640 = arith.addf %636, %639 : vector<11x30xf32>
    %c136 = arith.constant 136 : index
    %641 = memref.load %arg0[%c136] : memref<144xf32, #tpu.memory_space<smem>>
    %642 = vector.broadcast %641 : f32 to vector<11x30xf32>
    %643 = arith.mulf %642, %55 : vector<11x30xf32>
    %644 = arith.addf %640, %643 : vector<11x30xf32>
    %c137 = arith.constant 137 : index
    %645 = memref.load %arg0[%c137] : memref<144xf32, #tpu.memory_space<smem>>
    %646 = vector.broadcast %645 : f32 to vector<11x30xf32>
    %647 = arith.mulf %646, %59 : vector<11x30xf32>
    %648 = arith.addf %644, %647 : vector<11x30xf32>
    %c138 = arith.constant 138 : index
    %649 = memref.load %arg0[%c138] : memref<144xf32, #tpu.memory_space<smem>>
    %650 = vector.broadcast %649 : f32 to vector<11x30xf32>
    %651 = arith.mulf %650, %52 : vector<11x30xf32>
    %652 = arith.addf %648, %651 : vector<11x30xf32>
    %c139 = arith.constant 139 : index
    %653 = memref.load %arg0[%c139] : memref<144xf32, #tpu.memory_space<smem>>
    %654 = vector.broadcast %653 : f32 to vector<11x30xf32>
    %655 = arith.mulf %654, %56 : vector<11x30xf32>
    %656 = arith.addf %652, %655 : vector<11x30xf32>
    %c140 = arith.constant 140 : index
    %657 = memref.load %arg0[%c140] : memref<144xf32, #tpu.memory_space<smem>>
    %658 = vector.broadcast %657 : f32 to vector<11x30xf32>
    %659 = arith.mulf %658, %60 : vector<11x30xf32>
    %660 = arith.addf %656, %659 : vector<11x30xf32>
    %c141 = arith.constant 141 : index
    %661 = memref.load %arg0[%c141] : memref<144xf32, #tpu.memory_space<smem>>
    %662 = vector.broadcast %661 : f32 to vector<11x30xf32>
    %663 = arith.mulf %662, %53 : vector<11x30xf32>
    %664 = arith.addf %660, %663 : vector<11x30xf32>
    %c142 = arith.constant 142 : index
    %665 = memref.load %arg0[%c142] : memref<144xf32, #tpu.memory_space<smem>>
    %666 = vector.broadcast %665 : f32 to vector<11x30xf32>
    %667 = arith.mulf %666, %57 : vector<11x30xf32>
    %668 = arith.addf %664, %667 : vector<11x30xf32>
    %c143 = arith.constant 143 : index
    %669 = memref.load %arg0[%c143] : memref<144xf32, #tpu.memory_space<smem>>
    %670 = vector.broadcast %669 : f32 to vector<11x30xf32>
    %671 = arith.mulf %670, %61 : vector<11x30xf32>
    %672 = arith.addf %668, %671 : vector<11x30xf32>
    %cst_31 = arith.constant 0.000000e+00 : f32
    %673 = vector.broadcast %cst_31 : f32 to vector<11x30xf32>
    %674 = arith.subf %673, %672 : vector<11x30xf32>
    %675 = math.exp %674 : vector<11x30xf32>
    %cst_32 = arith.constant 1.000000e+00 : f32
    %676 = vector.broadcast %cst_32 : f32 to vector<11x30xf32>
    %677 = arith.addf %676, %675 : vector<11x30xf32>
    %cst_33 = arith.constant 1.000000e+00 : f32
    %678 = vector.broadcast %cst_33 : f32 to vector<11x30xf32>
    %679 = arith.divf %678, %677 : vector<11x30xf32>
    %cst_34 = arith.constant 0.000000e+00 : f32
    %680 = vector.broadcast %cst_34 : f32 to vector<11x30xf32>
    %681 = arith.select %5, %679, %680 : vector<11x30xi1>, vector<11x30xf32>
    %682 = vector.extract_strided_slice %216 {offsets = [2, 0], sizes = [7, 30], strides = [1, 1]} : vector<11x30xf32> to vector<7x30xf32>
    %683 = vector.extract_strided_slice %682 {offsets = [0, 0], sizes = [7, 28], strides = [1, 1]} : vector<7x30xf32> to vector<7x28xf32>
    %684 = vector.extract_strided_slice %682 {offsets = [0, 1], sizes = [7, 28], strides = [1, 1]} : vector<7x30xf32> to vector<7x28xf32>
    %685 = vector.extract_strided_slice %682 {offsets = [0, 2], sizes = [7, 28], strides = [1, 1]} : vector<7x30xf32> to vector<7x28xf32>
    %686 = vector.extract_strided_slice %371 {offsets = [2, 0], sizes = [7, 30], strides = [1, 1]} : vector<11x30xf32> to vector<7x30xf32>
    %687 = vector.extract_strided_slice %686 {offsets = [0, 0], sizes = [7, 28], strides = [1, 1]} : vector<7x30xf32> to vector<7x28xf32>
    %688 = vector.extract_strided_slice %686 {offsets = [0, 1], sizes = [7, 28], strides = [1, 1]} : vector<7x30xf32> to vector<7x28xf32>
    %689 = vector.extract_strided_slice %686 {offsets = [0, 2], sizes = [7, 28], strides = [1, 1]} : vector<7x30xf32> to vector<7x28xf32>
    %690 = vector.extract_strided_slice %526 {offsets = [2, 0], sizes = [7, 30], strides = [1, 1]} : vector<11x30xf32> to vector<7x30xf32>
    %691 = vector.extract_strided_slice %690 {offsets = [0, 0], sizes = [7, 28], strides = [1, 1]} : vector<7x30xf32> to vector<7x28xf32>
    %692 = vector.extract_strided_slice %690 {offsets = [0, 1], sizes = [7, 28], strides = [1, 1]} : vector<7x30xf32> to vector<7x28xf32>
    %693 = vector.extract_strided_slice %690 {offsets = [0, 2], sizes = [7, 28], strides = [1, 1]} : vector<7x30xf32> to vector<7x28xf32>
    %694 = vector.extract_strided_slice %681 {offsets = [2, 0], sizes = [7, 30], strides = [1, 1]} : vector<11x30xf32> to vector<7x30xf32>
    %695 = vector.extract_strided_slice %694 {offsets = [0, 0], sizes = [7, 28], strides = [1, 1]} : vector<7x30xf32> to vector<7x28xf32>
    %696 = vector.extract_strided_slice %694 {offsets = [0, 1], sizes = [7, 28], strides = [1, 1]} : vector<7x30xf32> to vector<7x28xf32>
    %697 = vector.extract_strided_slice %694 {offsets = [0, 2], sizes = [7, 28], strides = [1, 1]} : vector<7x30xf32> to vector<7x28xf32>
    %c0_35 = arith.constant 0 : index
    %698 = memref.load %arg3[%c0_35] : memref<4xf32, #tpu.memory_space<smem>>
    %699 = vector.broadcast %698 : f32 to vector<7x28xf32>
    %c0_36 = arith.constant 0 : index
    %700 = memref.load %arg2[%c0_36] : memref<24xf32, #tpu.memory_space<smem>>
    %701 = vector.broadcast %700 : f32 to vector<7x28xf32>
    %702 = arith.mulf %701, %685 : vector<7x28xf32>
    %703 = arith.addf %699, %702 : vector<7x28xf32>
    %c1_37 = arith.constant 1 : index
    %704 = memref.load %arg2[%c1_37] : memref<24xf32, #tpu.memory_space<smem>>
    %705 = vector.broadcast %704 : f32 to vector<7x28xf32>
    %706 = arith.mulf %705, %684 : vector<7x28xf32>
    %707 = arith.addf %703, %706 : vector<7x28xf32>
    %c2_38 = arith.constant 2 : index
    %708 = memref.load %arg2[%c2_38] : memref<24xf32, #tpu.memory_space<smem>>
    %709 = vector.broadcast %708 : f32 to vector<7x28xf32>
    %710 = arith.mulf %709, %683 : vector<7x28xf32>
    %711 = arith.addf %707, %710 : vector<7x28xf32>
    %c6_39 = arith.constant 6 : index
    %712 = memref.load %arg2[%c6_39] : memref<24xf32, #tpu.memory_space<smem>>
    %713 = vector.broadcast %712 : f32 to vector<7x28xf32>
    %714 = arith.mulf %713, %689 : vector<7x28xf32>
    %715 = arith.addf %711, %714 : vector<7x28xf32>
    %c7_40 = arith.constant 7 : index
    %716 = memref.load %arg2[%c7_40] : memref<24xf32, #tpu.memory_space<smem>>
    %717 = vector.broadcast %716 : f32 to vector<7x28xf32>
    %718 = arith.mulf %717, %688 : vector<7x28xf32>
    %719 = arith.addf %715, %718 : vector<7x28xf32>
    %c8_41 = arith.constant 8 : index
    %720 = memref.load %arg2[%c8_41] : memref<24xf32, #tpu.memory_space<smem>>
    %721 = vector.broadcast %720 : f32 to vector<7x28xf32>
    %722 = arith.mulf %721, %687 : vector<7x28xf32>
    %723 = arith.addf %719, %722 : vector<7x28xf32>
    %cst_42 = arith.constant 0.000000e+00 : f32
    %724 = vector.broadcast %cst_42 : f32 to vector<7x28xf32>
    %725 = arith.subf %724, %723 : vector<7x28xf32>
    %726 = math.exp %725 : vector<7x28xf32>
    %cst_43 = arith.constant 1.000000e+00 : f32
    %727 = vector.broadcast %cst_43 : f32 to vector<7x28xf32>
    %728 = arith.addf %727, %726 : vector<7x28xf32>
    %cst_44 = arith.constant 1.000000e+00 : f32
    %729 = vector.broadcast %cst_44 : f32 to vector<7x28xf32>
    %730 = arith.divf %729, %728 : vector<7x28xf32>
    %c0_45 = arith.constant 0 : index
    %c0_46 = arith.constant 0 : index
    %c0_47 = arith.constant 0 : index
    %c0_48 = arith.constant 0 : index
    %731 = vector.load %arg5[%c0_45, %c0_46, %c0_47, %c0_48] : memref<2x4x7x28xf32, #tpu.memory_space<vmem>>, vector<1x1x7x28xf32>
    %732 = vector.shape_cast %731 : vector<1x1x7x28xf32> to vector<7x28xf32>
    %733 = vector.shape_cast %730 : vector<7x28xf32> to vector<1x1x7x28xf32>
    tpu.vector_store %arg5[%c0_45, %c0_46, %c0_47, %c0_48], %733 {strides = array<i32>} : memref<2x4x7x28xf32, #tpu.memory_space<vmem>>, vector<1x1x7x28xf32>,
    %c1_49 = arith.constant 1 : index
    %734 = memref.load %arg3[%c1_49] : memref<4xf32, #tpu.memory_space<smem>>
    %735 = vector.broadcast %734 : f32 to vector<7x28xf32>
    %c3_50 = arith.constant 3 : index
    %736 = memref.load %arg2[%c3_50] : memref<24xf32, #tpu.memory_space<smem>>
    %737 = vector.broadcast %736 : f32 to vector<7x28xf32>
    %738 = arith.mulf %737, %685 : vector<7x28xf32>
    %739 = arith.addf %735, %738 : vector<7x28xf32>
    %c4_51 = arith.constant 4 : index
    %740 = memref.load %arg2[%c4_51] : memref<24xf32, #tpu.memory_space<smem>>
    %741 = vector.broadcast %740 : f32 to vector<7x28xf32>
    %742 = arith.mulf %741, %684 : vector<7x28xf32>
    %743 = arith.addf %739, %742 : vector<7x28xf32>
    %c5_52 = arith.constant 5 : index
    %744 = memref.load %arg2[%c5_52] : memref<24xf32, #tpu.memory_space<smem>>
    %745 = vector.broadcast %744 : f32 to vector<7x28xf32>
    %746 = arith.mulf %745, %683 : vector<7x28xf32>
    %747 = arith.addf %743, %746 : vector<7x28xf32>
    %c9_53 = arith.constant 9 : index
    %748 = memref.load %arg2[%c9_53] : memref<24xf32, #tpu.memory_space<smem>>
    %749 = vector.broadcast %748 : f32 to vector<7x28xf32>
    %750 = arith.mulf %749, %689 : vector<7x28xf32>
    %751 = arith.addf %747, %750 : vector<7x28xf32>
    %c10_54 = arith.constant 10 : index
    %752 = memref.load %arg2[%c10_54] : memref<24xf32, #tpu.memory_space<smem>>
    %753 = vector.broadcast %752 : f32 to vector<7x28xf32>
    %754 = arith.mulf %753, %688 : vector<7x28xf32>
    %755 = arith.addf %751, %754 : vector<7x28xf32>
    %c11_55 = arith.constant 11 : index
    %756 = memref.load %arg2[%c11_55] : memref<24xf32, #tpu.memory_space<smem>>
    %757 = vector.broadcast %756 : f32 to vector<7x28xf32>
    %758 = arith.mulf %757, %687 : vector<7x28xf32>
    %759 = arith.addf %755, %758 : vector<7x28xf32>
    %cst_56 = arith.constant 0.000000e+00 : f32
    %760 = vector.broadcast %cst_56 : f32 to vector<7x28xf32>
    %761 = arith.subf %760, %759 : vector<7x28xf32>
    %762 = math.exp %761 : vector<7x28xf32>
    %cst_57 = arith.constant 1.000000e+00 : f32
    %763 = vector.broadcast %cst_57 : f32 to vector<7x28xf32>
    %764 = arith.addf %763, %762 : vector<7x28xf32>
    %cst_58 = arith.constant 1.000000e+00 : f32
    %765 = vector.broadcast %cst_58 : f32 to vector<7x28xf32>
    %766 = arith.divf %765, %764 : vector<7x28xf32>
    %c0_59 = arith.constant 0 : index
    %c1_60 = arith.constant 1 : index
    %c0_61 = arith.constant 0 : index
    %c0_62 = arith.constant 0 : index
    %767 = vector.load %arg5[%c0_59, %c1_60, %c0_61, %c0_62] : memref<2x4x7x28xf32, #tpu.memory_space<vmem>>, vector<1x1x7x28xf32>
    %768 = vector.shape_cast %767 : vector<1x1x7x28xf32> to vector<7x28xf32>
    %769 = vector.shape_cast %766 : vector<7x28xf32> to vector<1x1x7x28xf32>
    tpu.vector_store %arg5[%c0_59, %c1_60, %c0_61, %c0_62], %769 {strides = array<i32>} : memref<2x4x7x28xf32, #tpu.memory_space<vmem>>, vector<1x1x7x28xf32>,
    %c2_63 = arith.constant 2 : index
    %770 = memref.load %arg3[%c2_63] : memref<4xf32, #tpu.memory_space<smem>>
    %771 = vector.broadcast %770 : f32 to vector<7x28xf32>
    %c12_64 = arith.constant 12 : index
    %772 = memref.load %arg2[%c12_64] : memref<24xf32, #tpu.memory_space<smem>>
    %773 = vector.broadcast %772 : f32 to vector<7x28xf32>
    %774 = arith.mulf %773, %693 : vector<7x28xf32>
    %775 = arith.addf %771, %774 : vector<7x28xf32>
    %c13_65 = arith.constant 13 : index
    %776 = memref.load %arg2[%c13_65] : memref<24xf32, #tpu.memory_space<smem>>
    %777 = vector.broadcast %776 : f32 to vector<7x28xf32>
    %778 = arith.mulf %777, %692 : vector<7x28xf32>
    %779 = arith.addf %775, %778 : vector<7x28xf32>
    %c14_66 = arith.constant 14 : index
    %780 = memref.load %arg2[%c14_66] : memref<24xf32, #tpu.memory_space<smem>>
    %781 = vector.broadcast %780 : f32 to vector<7x28xf32>
    %782 = arith.mulf %781, %691 : vector<7x28xf32>
    %783 = arith.addf %779, %782 : vector<7x28xf32>
    %c18_67 = arith.constant 18 : index
    %784 = memref.load %arg2[%c18_67] : memref<24xf32, #tpu.memory_space<smem>>
    %785 = vector.broadcast %784 : f32 to vector<7x28xf32>
    %786 = arith.mulf %785, %697 : vector<7x28xf32>
    %787 = arith.addf %783, %786 : vector<7x28xf32>
    %c19_68 = arith.constant 19 : index
    %788 = memref.load %arg2[%c19_68] : memref<24xf32, #tpu.memory_space<smem>>
    %789 = vector.broadcast %788 : f32 to vector<7x28xf32>
    %790 = arith.mulf %789, %696 : vector<7x28xf32>
    %791 = arith.addf %787, %790 : vector<7x28xf32>
    %c20_69 = arith.constant 20 : index
    %792 = memref.load %arg2[%c20_69] : memref<24xf32, #tpu.memory_space<smem>>
    %793 = vector.broadcast %792 : f32 to vector<7x28xf32>
    %794 = arith.mulf %793, %695 : vector<7x28xf32>
    %795 = arith.addf %791, %794 : vector<7x28xf32>
    %cst_70 = arith.constant 0.000000e+00 : f32
    %796 = vector.broadcast %cst_70 : f32 to vector<7x28xf32>
    %797 = arith.subf %796, %795 : vector<7x28xf32>
    %798 = math.exp %797 : vector<7x28xf32>
    %cst_71 = arith.constant 1.000000e+00 : f32
    %799 = vector.broadcast %cst_71 : f32 to vector<7x28xf32>
    %800 = arith.addf %799, %798 : vector<7x28xf32>
    %cst_72 = arith.constant 1.000000e+00 : f32
    %801 = vector.broadcast %cst_72 : f32 to vector<7x28xf32>
    %802 = arith.divf %801, %800 : vector<7x28xf32>
    %c0_73 = arith.constant 0 : index
    %c2_74 = arith.constant 2 : index
    %c0_75 = arith.constant 0 : index
    %c0_76 = arith.constant 0 : index
    %803 = vector.load %arg5[%c0_73, %c2_74, %c0_75, %c0_76] : memref<2x4x7x28xf32, #tpu.memory_space<vmem>>, vector<1x1x7x28xf32>
    %804 = vector.shape_cast %803 : vector<1x1x7x28xf32> to vector<7x28xf32>
    %805 = vector.shape_cast %802 : vector<7x28xf32> to vector<1x1x7x28xf32>
    tpu.vector_store %arg5[%c0_73, %c2_74, %c0_75, %c0_76], %805 {strides = array<i32>} : memref<2x4x7x28xf32, #tpu.memory_space<vmem>>, vector<1x1x7x28xf32>,
    %c3_77 = arith.constant 3 : index
    %806 = memref.load %arg3[%c3_77] : memref<4xf32, #tpu.memory_space<smem>>
    %807 = vector.broadcast %806 : f32 to vector<7x28xf32>
    %c15_78 = arith.constant 15 : index
    %808 = memref.load %arg2[%c15_78] : memref<24xf32, #tpu.memory_space<smem>>
    %809 = vector.broadcast %808 : f32 to vector<7x28xf32>
    %810 = arith.mulf %809, %693 : vector<7x28xf32>
    %811 = arith.addf %807, %810 : vector<7x28xf32>
    %c16_79 = arith.constant 16 : index
    %812 = memref.load %arg2[%c16_79] : memref<24xf32, #tpu.memory_space<smem>>
    %813 = vector.broadcast %812 : f32 to vector<7x28xf32>
    %814 = arith.mulf %813, %692 : vector<7x28xf32>
    %815 = arith.addf %811, %814 : vector<7x28xf32>
    %c17_80 = arith.constant 17 : index
    %816 = memref.load %arg2[%c17_80] : memref<24xf32, #tpu.memory_space<smem>>
    %817 = vector.broadcast %816 : f32 to vector<7x28xf32>
    %818 = arith.mulf %817, %691 : vector<7x28xf32>
    %819 = arith.addf %815, %818 : vector<7x28xf32>
    %c21_81 = arith.constant 21 : index
    %820 = memref.load %arg2[%c21_81] : memref<24xf32, #tpu.memory_space<smem>>
    %821 = vector.broadcast %820 : f32 to vector<7x28xf32>
    %822 = arith.mulf %821, %697 : vector<7x28xf32>
    %823 = arith.addf %819, %822 : vector<7x28xf32>
    %c22_82 = arith.constant 22 : index
    %824 = memref.load %arg2[%c22_82] : memref<24xf32, #tpu.memory_space<smem>>
    %825 = vector.broadcast %824 : f32 to vector<7x28xf32>
    %826 = arith.mulf %825, %696 : vector<7x28xf32>
    %827 = arith.addf %823, %826 : vector<7x28xf32>
    %c23_83 = arith.constant 23 : index
    %828 = memref.load %arg2[%c23_83] : memref<24xf32, #tpu.memory_space<smem>>
    %829 = vector.broadcast %828 : f32 to vector<7x28xf32>
    %830 = arith.mulf %829, %695 : vector<7x28xf32>
    %831 = arith.addf %827, %830 : vector<7x28xf32>
    %cst_84 = arith.constant 0.000000e+00 : f32
    %832 = vector.broadcast %cst_84 : f32 to vector<7x28xf32>
    %833 = arith.subf %832, %831 : vector<7x28xf32>
    %834 = math.exp %833 : vector<7x28xf32>
    %cst_85 = arith.constant 1.000000e+00 : f32
    %835 = vector.broadcast %cst_85 : f32 to vector<7x28xf32>
    %836 = arith.addf %835, %834 : vector<7x28xf32>
    %cst_86 = arith.constant 1.000000e+00 : f32
    %837 = vector.broadcast %cst_86 : f32 to vector<7x28xf32>
    %838 = arith.divf %837, %836 : vector<7x28xf32>
    %c0_87 = arith.constant 0 : index
    %c3_88 = arith.constant 3 : index
    %c0_89 = arith.constant 0 : index
    %c0_90 = arith.constant 0 : index
    %839 = vector.load %arg5[%c0_87, %c3_88, %c0_89, %c0_90] : memref<2x4x7x28xf32, #tpu.memory_space<vmem>>, vector<1x1x7x28xf32>
    %840 = vector.shape_cast %839 : vector<1x1x7x28xf32> to vector<7x28xf32>
    %841 = vector.shape_cast %838 : vector<7x28xf32> to vector<1x1x7x28xf32>
    tpu.vector_store %arg5[%c0_87, %c3_88, %c0_89, %c0_90], %841 {strides = array<i32>} : memref<2x4x7x28xf32, #tpu.memory_space<vmem>>, vector<1x1x7x28xf32>,
    %c1_91 = arith.constant 1 : index
    %c0_92 = arith.constant 0 : index
    %c0_93 = arith.constant 0 : index
    %c0_94 = arith.constant 0 : index
    %842 = vector.load %arg4[%c1_91, %c0_92, %c0_93, %c0_94] : memref<2x4x13x32xf32, #tpu.memory_space<vmem>>, vector<1x1x13x32xf32>
    %843 = vector.shape_cast %842 : vector<1x1x13x32xf32> to vector<13x32xf32>
    %844 = vector.extract_strided_slice %843 {offsets = [0, 0], sizes = [13, 30], strides = [1, 1]} : vector<13x32xf32> to vector<13x30xf32>
    %845 = vector.extract_strided_slice %844 {offsets = [0, 0], sizes = [11, 30], strides = [1, 1]} : vector<13x30xf32> to vector<11x30xf32>
    %846 = vector.extract_strided_slice %844 {offsets = [1, 0], sizes = [11, 30], strides = [1, 1]} : vector<13x30xf32> to vector<11x30xf32>
    %847 = vector.extract_strided_slice %844 {offsets = [2, 0], sizes = [11, 30], strides = [1, 1]} : vector<13x30xf32> to vector<11x30xf32>
    %848 = vector.extract_strided_slice %843 {offsets = [0, 1], sizes = [13, 30], strides = [1, 1]} : vector<13x32xf32> to vector<13x30xf32>
    %849 = vector.extract_strided_slice %848 {offsets = [0, 0], sizes = [11, 30], strides = [1, 1]} : vector<13x30xf32> to vector<11x30xf32>
    %850 = vector.extract_strided_slice %848 {offsets = [1, 0], sizes = [11, 30], strides = [1, 1]} : vector<13x30xf32> to vector<11x30xf32>
    %851 = vector.extract_strided_slice %848 {offsets = [2, 0], sizes = [11, 30], strides = [1, 1]} : vector<13x30xf32> to vector<11x30xf32>
    %852 = vector.extract_strided_slice %843 {offsets = [0, 2], sizes = [13, 30], strides = [1, 1]} : vector<13x32xf32> to vector<13x30xf32>
    %853 = vector.extract_strided_slice %852 {offsets = [0, 0], sizes = [11, 30], strides = [1, 1]} : vector<13x30xf32> to vector<11x30xf32>
    %854 = vector.extract_strided_slice %852 {offsets = [1, 0], sizes = [11, 30], strides = [1, 1]} : vector<13x30xf32> to vector<11x30xf32>
    %855 = vector.extract_strided_slice %852 {offsets = [2, 0], sizes = [11, 30], strides = [1, 1]} : vector<13x30xf32> to vector<11x30xf32>
    %c1_95 = arith.constant 1 : index
    %c1_96 = arith.constant 1 : index
    %c0_97 = arith.constant 0 : index
    %c0_98 = arith.constant 0 : index
    %856 = vector.load %arg4[%c1_95, %c1_96, %c0_97, %c0_98] : memref<2x4x13x32xf32, #tpu.memory_space<vmem>>, vector<1x1x13x32xf32>
    %857 = vector.shape_cast %856 : vector<1x1x13x32xf32> to vector<13x32xf32>
    %858 = vector.extract_strided_slice %857 {offsets = [0, 0], sizes = [13, 30], strides = [1, 1]} : vector<13x32xf32> to vector<13x30xf32>
    %859 = vector.extract_strided_slice %858 {offsets = [0, 0], sizes = [11, 30], strides = [1, 1]} : vector<13x30xf32> to vector<11x30xf32>
    %860 = vector.extract_strided_slice %858 {offsets = [1, 0], sizes = [11, 30], strides = [1, 1]} : vector<13x30xf32> to vector<11x30xf32>
    %861 = vector.extract_strided_slice %858 {offsets = [2, 0], sizes = [11, 30], strides = [1, 1]} : vector<13x30xf32> to vector<11x30xf32>
    %862 = vector.extract_strided_slice %857 {offsets = [0, 1], sizes = [13, 30], strides = [1, 1]} : vector<13x32xf32> to vector<13x30xf32>
    %863 = vector.extract_strided_slice %862 {offsets = [0, 0], sizes = [11, 30], strides = [1, 1]} : vector<13x30xf32> to vector<11x30xf32>
    %864 = vector.extract_strided_slice %862 {offsets = [1, 0], sizes = [11, 30], strides = [1, 1]} : vector<13x30xf32> to vector<11x30xf32>
    %865 = vector.extract_strided_slice %862 {offsets = [2, 0], sizes = [11, 30], strides = [1, 1]} : vector<13x30xf32> to vector<11x30xf32>
    %866 = vector.extract_strided_slice %857 {offsets = [0, 2], sizes = [13, 30], strides = [1, 1]} : vector<13x32xf32> to vector<13x30xf32>
    %867 = vector.extract_strided_slice %866 {offsets = [0, 0], sizes = [11, 30], strides = [1, 1]} : vector<13x30xf32> to vector<11x30xf32>
    %868 = vector.extract_strided_slice %866 {offsets = [1, 0], sizes = [11, 30], strides = [1, 1]} : vector<13x30xf32> to vector<11x30xf32>
    %869 = vector.extract_strided_slice %866 {offsets = [2, 0], sizes = [11, 30], strides = [1, 1]} : vector<13x30xf32> to vector<11x30xf32>
    %c1_99 = arith.constant 1 : index
    %c2_100 = arith.constant 2 : index
    %c0_101 = arith.constant 0 : index
    %c0_102 = arith.constant 0 : index
    %870 = vector.load %arg4[%c1_99, %c2_100, %c0_101, %c0_102] : memref<2x4x13x32xf32, #tpu.memory_space<vmem>>, vector<1x1x13x32xf32>
    %871 = vector.shape_cast %870 : vector<1x1x13x32xf32> to vector<13x32xf32>
    %872 = vector.extract_strided_slice %871 {offsets = [0, 0], sizes = [13, 30], strides = [1, 1]} : vector<13x32xf32> to vector<13x30xf32>
    %873 = vector.extract_strided_slice %872 {offsets = [0, 0], sizes = [11, 30], strides = [1, 1]} : vector<13x30xf32> to vector<11x30xf32>
    %874 = vector.extract_strided_slice %872 {offsets = [1, 0], sizes = [11, 30], strides = [1, 1]} : vector<13x30xf32> to vector<11x30xf32>
    %875 = vector.extract_strided_slice %872 {offsets = [2, 0], sizes = [11, 30], strides = [1, 1]} : vector<13x30xf32> to vector<11x30xf32>
    %876 = vector.extract_strided_slice %871 {offsets = [0, 1], sizes = [13, 30], strides = [1, 1]} : vector<13x32xf32> to vector<13x30xf32>
    %877 = vector.extract_strided_slice %876 {offsets = [0, 0], sizes = [11, 30], strides = [1, 1]} : vector<13x30xf32> to vector<11x30xf32>
    %878 = vector.extract_strided_slice %876 {offsets = [1, 0], sizes = [11, 30], strides = [1, 1]} : vector<13x30xf32> to vector<11x30xf32>
    %879 = vector.extract_strided_slice %876 {offsets = [2, 0], sizes = [11, 30], strides = [1, 1]} : vector<13x30xf32> to vector<11x30xf32>
    %880 = vector.extract_strided_slice %871 {offsets = [0, 2], sizes = [13, 30], strides = [1, 1]} : vector<13x32xf32> to vector<13x30xf32>
    %881 = vector.extract_strided_slice %880 {offsets = [0, 0], sizes = [11, 30], strides = [1, 1]} : vector<13x30xf32> to vector<11x30xf32>
    %882 = vector.extract_strided_slice %880 {offsets = [1, 0], sizes = [11, 30], strides = [1, 1]} : vector<13x30xf32> to vector<11x30xf32>
    %883 = vector.extract_strided_slice %880 {offsets = [2, 0], sizes = [11, 30], strides = [1, 1]} : vector<13x30xf32> to vector<11x30xf32>
    %c1_103 = arith.constant 1 : index
    %c3_104 = arith.constant 3 : index
    %c0_105 = arith.constant 0 : index
    %c0_106 = arith.constant 0 : index
    %884 = vector.load %arg4[%c1_103, %c3_104, %c0_105, %c0_106] : memref<2x4x13x32xf32, #tpu.memory_space<vmem>>, vector<1x1x13x32xf32>
    %885 = vector.shape_cast %884 : vector<1x1x13x32xf32> to vector<13x32xf32>
    %886 = vector.extract_strided_slice %885 {offsets = [0, 0], sizes = [13, 30], strides = [1, 1]} : vector<13x32xf32> to vector<13x30xf32>
    %887 = vector.extract_strided_slice %886 {offsets = [0, 0], sizes = [11, 30], strides = [1, 1]} : vector<13x30xf32> to vector<11x30xf32>
    %888 = vector.extract_strided_slice %886 {offsets = [1, 0], sizes = [11, 30], strides = [1, 1]} : vector<13x30xf32> to vector<11x30xf32>
    %889 = vector.extract_strided_slice %886 {offsets = [2, 0], sizes = [11, 30], strides = [1, 1]} : vector<13x30xf32> to vector<11x30xf32>
    %890 = vector.extract_strided_slice %885 {offsets = [0, 1], sizes = [13, 30], strides = [1, 1]} : vector<13x32xf32> to vector<13x30xf32>
    %891 = vector.extract_strided_slice %890 {offsets = [0, 0], sizes = [11, 30], strides = [1, 1]} : vector<13x30xf32> to vector<11x30xf32>
    %892 = vector.extract_strided_slice %890 {offsets = [1, 0], sizes = [11, 30], strides = [1, 1]} : vector<13x30xf32> to vector<11x30xf32>
    %893 = vector.extract_strided_slice %890 {offsets = [2, 0], sizes = [11, 30], strides = [1, 1]} : vector<13x30xf32> to vector<11x30xf32>
    %894 = vector.extract_strided_slice %885 {offsets = [0, 2], sizes = [13, 30], strides = [1, 1]} : vector<13x32xf32> to vector<13x30xf32>
    %895 = vector.extract_strided_slice %894 {offsets = [0, 0], sizes = [11, 30], strides = [1, 1]} : vector<13x30xf32> to vector<11x30xf32>
    %896 = vector.extract_strided_slice %894 {offsets = [1, 0], sizes = [11, 30], strides = [1, 1]} : vector<13x30xf32> to vector<11x30xf32>
    %897 = vector.extract_strided_slice %894 {offsets = [2, 0], sizes = [11, 30], strides = [1, 1]} : vector<13x30xf32> to vector<11x30xf32>
    %c0_107 = arith.constant 0 : index
    %898 = memref.load %arg1[%c0_107] : memref<4xf32, #tpu.memory_space<smem>>
    %899 = vector.broadcast %898 : f32 to vector<11x30xf32>
    %c0_108 = arith.constant 0 : index
    %900 = memref.load %arg0[%c0_108] : memref<144xf32, #tpu.memory_space<smem>>
    %901 = vector.broadcast %900 : f32 to vector<11x30xf32>
    %902 = arith.mulf %901, %845 : vector<11x30xf32>
    %903 = arith.addf %899, %902 : vector<11x30xf32>
    %c1_109 = arith.constant 1 : index
    %904 = memref.load %arg0[%c1_109] : memref<144xf32, #tpu.memory_space<smem>>
    %905 = vector.broadcast %904 : f32 to vector<11x30xf32>
    %906 = arith.mulf %905, %849 : vector<11x30xf32>
    %907 = arith.addf %903, %906 : vector<11x30xf32>
    %c2_110 = arith.constant 2 : index
    %908 = memref.load %arg0[%c2_110] : memref<144xf32, #tpu.memory_space<smem>>
    %909 = vector.broadcast %908 : f32 to vector<11x30xf32>
    %910 = arith.mulf %909, %853 : vector<11x30xf32>
    %911 = arith.addf %907, %910 : vector<11x30xf32>
    %c3_111 = arith.constant 3 : index
    %912 = memref.load %arg0[%c3_111] : memref<144xf32, #tpu.memory_space<smem>>
    %913 = vector.broadcast %912 : f32 to vector<11x30xf32>
    %914 = arith.mulf %913, %846 : vector<11x30xf32>
    %915 = arith.addf %911, %914 : vector<11x30xf32>
    %c4_112 = arith.constant 4 : index
    %916 = memref.load %arg0[%c4_112] : memref<144xf32, #tpu.memory_space<smem>>
    %917 = vector.broadcast %916 : f32 to vector<11x30xf32>
    %918 = arith.mulf %917, %850 : vector<11x30xf32>
    %919 = arith.addf %915, %918 : vector<11x30xf32>
    %c5_113 = arith.constant 5 : index
    %920 = memref.load %arg0[%c5_113] : memref<144xf32, #tpu.memory_space<smem>>
    %921 = vector.broadcast %920 : f32 to vector<11x30xf32>
    %922 = arith.mulf %921, %854 : vector<11x30xf32>
    %923 = arith.addf %919, %922 : vector<11x30xf32>
    %c6_114 = arith.constant 6 : index
    %924 = memref.load %arg0[%c6_114] : memref<144xf32, #tpu.memory_space<smem>>
    %925 = vector.broadcast %924 : f32 to vector<11x30xf32>
    %926 = arith.mulf %925, %847 : vector<11x30xf32>
    %927 = arith.addf %923, %926 : vector<11x30xf32>
    %c7_115 = arith.constant 7 : index
    %928 = memref.load %arg0[%c7_115] : memref<144xf32, #tpu.memory_space<smem>>
    %929 = vector.broadcast %928 : f32 to vector<11x30xf32>
    %930 = arith.mulf %929, %851 : vector<11x30xf32>
    %931 = arith.addf %927, %930 : vector<11x30xf32>
    %c8_116 = arith.constant 8 : index
    %932 = memref.load %arg0[%c8_116] : memref<144xf32, #tpu.memory_space<smem>>
    %933 = vector.broadcast %932 : f32 to vector<11x30xf32>
    %934 = arith.mulf %933, %855 : vector<11x30xf32>
    %935 = arith.addf %931, %934 : vector<11x30xf32>
    %c9_117 = arith.constant 9 : index
    %936 = memref.load %arg0[%c9_117] : memref<144xf32, #tpu.memory_space<smem>>
    %937 = vector.broadcast %936 : f32 to vector<11x30xf32>
    %938 = arith.mulf %937, %859 : vector<11x30xf32>
    %939 = arith.addf %935, %938 : vector<11x30xf32>
    %c10_118 = arith.constant 10 : index
    %940 = memref.load %arg0[%c10_118] : memref<144xf32, #tpu.memory_space<smem>>
    %941 = vector.broadcast %940 : f32 to vector<11x30xf32>
    %942 = arith.mulf %941, %863 : vector<11x30xf32>
    %943 = arith.addf %939, %942 : vector<11x30xf32>
    %c11_119 = arith.constant 11 : index
    %944 = memref.load %arg0[%c11_119] : memref<144xf32, #tpu.memory_space<smem>>
    %945 = vector.broadcast %944 : f32 to vector<11x30xf32>
    %946 = arith.mulf %945, %867 : vector<11x30xf32>
    %947 = arith.addf %943, %946 : vector<11x30xf32>
    %c12_120 = arith.constant 12 : index
    %948 = memref.load %arg0[%c12_120] : memref<144xf32, #tpu.memory_space<smem>>
    %949 = vector.broadcast %948 : f32 to vector<11x30xf32>
    %950 = arith.mulf %949, %860 : vector<11x30xf32>
    %951 = arith.addf %947, %950 : vector<11x30xf32>
    %c13_121 = arith.constant 13 : index
    %952 = memref.load %arg0[%c13_121] : memref<144xf32, #tpu.memory_space<smem>>
    %953 = vector.broadcast %952 : f32 to vector<11x30xf32>
    %954 = arith.mulf %953, %864 : vector<11x30xf32>
    %955 = arith.addf %951, %954 : vector<11x30xf32>
    %c14_122 = arith.constant 14 : index
    %956 = memref.load %arg0[%c14_122] : memref<144xf32, #tpu.memory_space<smem>>
    %957 = vector.broadcast %956 : f32 to vector<11x30xf32>
    %958 = arith.mulf %957, %868 : vector<11x30xf32>
    %959 = arith.addf %955, %958 : vector<11x30xf32>
    %c15_123 = arith.constant 15 : index
    %960 = memref.load %arg0[%c15_123] : memref<144xf32, #tpu.memory_space<smem>>
    %961 = vector.broadcast %960 : f32 to vector<11x30xf32>
    %962 = arith.mulf %961, %861 : vector<11x30xf32>
    %963 = arith.addf %959, %962 : vector<11x30xf32>
    %c16_124 = arith.constant 16 : index
    %964 = memref.load %arg0[%c16_124] : memref<144xf32, #tpu.memory_space<smem>>
    %965 = vector.broadcast %964 : f32 to vector<11x30xf32>
    %966 = arith.mulf %965, %865 : vector<11x30xf32>
    %967 = arith.addf %963, %966 : vector<11x30xf32>
    %c17_125 = arith.constant 17 : index
    %968 = memref.load %arg0[%c17_125] : memref<144xf32, #tpu.memory_space<smem>>
    %969 = vector.broadcast %968 : f32 to vector<11x30xf32>
    %970 = arith.mulf %969, %869 : vector<11x30xf32>
    %971 = arith.addf %967, %970 : vector<11x30xf32>
    %c18_126 = arith.constant 18 : index
    %972 = memref.load %arg0[%c18_126] : memref<144xf32, #tpu.memory_space<smem>>
    %973 = vector.broadcast %972 : f32 to vector<11x30xf32>
    %974 = arith.mulf %973, %873 : vector<11x30xf32>
    %975 = arith.addf %971, %974 : vector<11x30xf32>
    %c19_127 = arith.constant 19 : index
    %976 = memref.load %arg0[%c19_127] : memref<144xf32, #tpu.memory_space<smem>>
    %977 = vector.broadcast %976 : f32 to vector<11x30xf32>
    %978 = arith.mulf %977, %877 : vector<11x30xf32>
    %979 = arith.addf %975, %978 : vector<11x30xf32>
    %c20_128 = arith.constant 20 : index
    %980 = memref.load %arg0[%c20_128] : memref<144xf32, #tpu.memory_space<smem>>
    %981 = vector.broadcast %980 : f32 to vector<11x30xf32>
    %982 = arith.mulf %981, %881 : vector<11x30xf32>
    %983 = arith.addf %979, %982 : vector<11x30xf32>
    %c21_129 = arith.constant 21 : index
    %984 = memref.load %arg0[%c21_129] : memref<144xf32, #tpu.memory_space<smem>>
    %985 = vector.broadcast %984 : f32 to vector<11x30xf32>
    %986 = arith.mulf %985, %874 : vector<11x30xf32>
    %987 = arith.addf %983, %986 : vector<11x30xf32>
    %c22_130 = arith.constant 22 : index
    %988 = memref.load %arg0[%c22_130] : memref<144xf32, #tpu.memory_space<smem>>
    %989 = vector.broadcast %988 : f32 to vector<11x30xf32>
    %990 = arith.mulf %989, %878 : vector<11x30xf32>
    %991 = arith.addf %987, %990 : vector<11x30xf32>
    %c23_131 = arith.constant 23 : index
    %992 = memref.load %arg0[%c23_131] : memref<144xf32, #tpu.memory_space<smem>>
    %993 = vector.broadcast %992 : f32 to vector<11x30xf32>
    %994 = arith.mulf %993, %882 : vector<11x30xf32>
    %995 = arith.addf %991, %994 : vector<11x30xf32>
    %c24_132 = arith.constant 24 : index
    %996 = memref.load %arg0[%c24_132] : memref<144xf32, #tpu.memory_space<smem>>
    %997 = vector.broadcast %996 : f32 to vector<11x30xf32>
    %998 = arith.mulf %997, %875 : vector<11x30xf32>
    %999 = arith.addf %995, %998 : vector<11x30xf32>
    %c25_133 = arith.constant 25 : index
    %1000 = memref.load %arg0[%c25_133] : memref<144xf32, #tpu.memory_space<smem>>
    %1001 = vector.broadcast %1000 : f32 to vector<11x30xf32>
    %1002 = arith.mulf %1001, %879 : vector<11x30xf32>
    %1003 = arith.addf %999, %1002 : vector<11x30xf32>
    %c26_134 = arith.constant 26 : index
    %1004 = memref.load %arg0[%c26_134] : memref<144xf32, #tpu.memory_space<smem>>
    %1005 = vector.broadcast %1004 : f32 to vector<11x30xf32>
    %1006 = arith.mulf %1005, %883 : vector<11x30xf32>
    %1007 = arith.addf %1003, %1006 : vector<11x30xf32>
    %c27_135 = arith.constant 27 : index
    %1008 = memref.load %arg0[%c27_135] : memref<144xf32, #tpu.memory_space<smem>>
    %1009 = vector.broadcast %1008 : f32 to vector<11x30xf32>
    %1010 = arith.mulf %1009, %887 : vector<11x30xf32>
    %1011 = arith.addf %1007, %1010 : vector<11x30xf32>
    %c28_136 = arith.constant 28 : index
    %1012 = memref.load %arg0[%c28_136] : memref<144xf32, #tpu.memory_space<smem>>
    %1013 = vector.broadcast %1012 : f32 to vector<11x30xf32>
    %1014 = arith.mulf %1013, %891 : vector<11x30xf32>
    %1015 = arith.addf %1011, %1014 : vector<11x30xf32>
    %c29_137 = arith.constant 29 : index
    %1016 = memref.load %arg0[%c29_137] : memref<144xf32, #tpu.memory_space<smem>>
    %1017 = vector.broadcast %1016 : f32 to vector<11x30xf32>
    %1018 = arith.mulf %1017, %895 : vector<11x30xf32>
    %1019 = arith.addf %1015, %1018 : vector<11x30xf32>
    %c30_138 = arith.constant 30 : index
    %1020 = memref.load %arg0[%c30_138] : memref<144xf32, #tpu.memory_space<smem>>
    %1021 = vector.broadcast %1020 : f32 to vector<11x30xf32>
    %1022 = arith.mulf %1021, %888 : vector<11x30xf32>
    %1023 = arith.addf %1019, %1022 : vector<11x30xf32>
    %c31_139 = arith.constant 31 : index
    %1024 = memref.load %arg0[%c31_139] : memref<144xf32, #tpu.memory_space<smem>>
    %1025 = vector.broadcast %1024 : f32 to vector<11x30xf32>
    %1026 = arith.mulf %1025, %892 : vector<11x30xf32>
    %1027 = arith.addf %1023, %1026 : vector<11x30xf32>
    %c32_140 = arith.constant 32 : index
    %1028 = memref.load %arg0[%c32_140] : memref<144xf32, #tpu.memory_space<smem>>
    %1029 = vector.broadcast %1028 : f32 to vector<11x30xf32>
    %1030 = arith.mulf %1029, %896 : vector<11x30xf32>
    %1031 = arith.addf %1027, %1030 : vector<11x30xf32>
    %c33_141 = arith.constant 33 : index
    %1032 = memref.load %arg0[%c33_141] : memref<144xf32, #tpu.memory_space<smem>>
    %1033 = vector.broadcast %1032 : f32 to vector<11x30xf32>
    %1034 = arith.mulf %1033, %889 : vector<11x30xf32>
    %1035 = arith.addf %1031, %1034 : vector<11x30xf32>
    %c34_142 = arith.constant 34 : index
    %1036 = memref.load %arg0[%c34_142] : memref<144xf32, #tpu.memory_space<smem>>
    %1037 = vector.broadcast %1036 : f32 to vector<11x30xf32>
    %1038 = arith.mulf %1037, %893 : vector<11x30xf32>
    %1039 = arith.addf %1035, %1038 : vector<11x30xf32>
    %c35_143 = arith.constant 35 : index
    %1040 = memref.load %arg0[%c35_143] : memref<144xf32, #tpu.memory_space<smem>>
    %1041 = vector.broadcast %1040 : f32 to vector<11x30xf32>
    %1042 = arith.mulf %1041, %897 : vector<11x30xf32>
    %1043 = arith.addf %1039, %1042 : vector<11x30xf32>
    %cst_144 = arith.constant 0.000000e+00 : f32
    %1044 = vector.broadcast %cst_144 : f32 to vector<11x30xf32>
    %1045 = arith.subf %1044, %1043 : vector<11x30xf32>
    %1046 = math.exp %1045 : vector<11x30xf32>
    %cst_145 = arith.constant 1.000000e+00 : f32
    %1047 = vector.broadcast %cst_145 : f32 to vector<11x30xf32>
    %1048 = arith.addf %1047, %1046 : vector<11x30xf32>
    %cst_146 = arith.constant 1.000000e+00 : f32
    %1049 = vector.broadcast %cst_146 : f32 to vector<11x30xf32>
    %1050 = arith.divf %1049, %1048 : vector<11x30xf32>
    %cst_147 = arith.constant 0.000000e+00 : f32
    %1051 = vector.broadcast %cst_147 : f32 to vector<11x30xf32>
    %1052 = arith.select %5, %1050, %1051 : vector<11x30xi1>, vector<11x30xf32>
    %c1_148 = arith.constant 1 : index
    %1053 = memref.load %arg1[%c1_148] : memref<4xf32, #tpu.memory_space<smem>>
    %1054 = vector.broadcast %1053 : f32 to vector<11x30xf32>
    %c36_149 = arith.constant 36 : index
    %1055 = memref.load %arg0[%c36_149] : memref<144xf32, #tpu.memory_space<smem>>
    %1056 = vector.broadcast %1055 : f32 to vector<11x30xf32>
    %1057 = arith.mulf %1056, %845 : vector<11x30xf32>
    %1058 = arith.addf %1054, %1057 : vector<11x30xf32>
    %c37_150 = arith.constant 37 : index
    %1059 = memref.load %arg0[%c37_150] : memref<144xf32, #tpu.memory_space<smem>>
    %1060 = vector.broadcast %1059 : f32 to vector<11x30xf32>
    %1061 = arith.mulf %1060, %849 : vector<11x30xf32>
    %1062 = arith.addf %1058, %1061 : vector<11x30xf32>
    %c38_151 = arith.constant 38 : index
    %1063 = memref.load %arg0[%c38_151] : memref<144xf32, #tpu.memory_space<smem>>
    %1064 = vector.broadcast %1063 : f32 to vector<11x30xf32>
    %1065 = arith.mulf %1064, %853 : vector<11x30xf32>
    %1066 = arith.addf %1062, %1065 : vector<11x30xf32>
    %c39_152 = arith.constant 39 : index
    %1067 = memref.load %arg0[%c39_152] : memref<144xf32, #tpu.memory_space<smem>>
    %1068 = vector.broadcast %1067 : f32 to vector<11x30xf32>
    %1069 = arith.mulf %1068, %846 : vector<11x30xf32>
    %1070 = arith.addf %1066, %1069 : vector<11x30xf32>
    %c40_153 = arith.constant 40 : index
    %1071 = memref.load %arg0[%c40_153] : memref<144xf32, #tpu.memory_space<smem>>
    %1072 = vector.broadcast %1071 : f32 to vector<11x30xf32>
    %1073 = arith.mulf %1072, %850 : vector<11x30xf32>
    %1074 = arith.addf %1070, %1073 : vector<11x30xf32>
    %c41_154 = arith.constant 41 : index
    %1075 = memref.load %arg0[%c41_154] : memref<144xf32, #tpu.memory_space<smem>>
    %1076 = vector.broadcast %1075 : f32 to vector<11x30xf32>
    %1077 = arith.mulf %1076, %854 : vector<11x30xf32>
    %1078 = arith.addf %1074, %1077 : vector<11x30xf32>
    %c42_155 = arith.constant 42 : index
    %1079 = memref.load %arg0[%c42_155] : memref<144xf32, #tpu.memory_space<smem>>
    %1080 = vector.broadcast %1079 : f32 to vector<11x30xf32>
    %1081 = arith.mulf %1080, %847 : vector<11x30xf32>
    %1082 = arith.addf %1078, %1081 : vector<11x30xf32>
    %c43_156 = arith.constant 43 : index
    %1083 = memref.load %arg0[%c43_156] : memref<144xf32, #tpu.memory_space<smem>>
    %1084 = vector.broadcast %1083 : f32 to vector<11x30xf32>
    %1085 = arith.mulf %1084, %851 : vector<11x30xf32>
    %1086 = arith.addf %1082, %1085 : vector<11x30xf32>
    %c44_157 = arith.constant 44 : index
    %1087 = memref.load %arg0[%c44_157] : memref<144xf32, #tpu.memory_space<smem>>
    %1088 = vector.broadcast %1087 : f32 to vector<11x30xf32>
    %1089 = arith.mulf %1088, %855 : vector<11x30xf32>
    %1090 = arith.addf %1086, %1089 : vector<11x30xf32>
    %c45_158 = arith.constant 45 : index
    %1091 = memref.load %arg0[%c45_158] : memref<144xf32, #tpu.memory_space<smem>>
    %1092 = vector.broadcast %1091 : f32 to vector<11x30xf32>
    %1093 = arith.mulf %1092, %859 : vector<11x30xf32>
    %1094 = arith.addf %1090, %1093 : vector<11x30xf32>
    %c46_159 = arith.constant 46 : index
    %1095 = memref.load %arg0[%c46_159] : memref<144xf32, #tpu.memory_space<smem>>
    %1096 = vector.broadcast %1095 : f32 to vector<11x30xf32>
    %1097 = arith.mulf %1096, %863 : vector<11x30xf32>
    %1098 = arith.addf %1094, %1097 : vector<11x30xf32>
    %c47_160 = arith.constant 47 : index
    %1099 = memref.load %arg0[%c47_160] : memref<144xf32, #tpu.memory_space<smem>>
    %1100 = vector.broadcast %1099 : f32 to vector<11x30xf32>
    %1101 = arith.mulf %1100, %867 : vector<11x30xf32>
    %1102 = arith.addf %1098, %1101 : vector<11x30xf32>
    %c48_161 = arith.constant 48 : index
    %1103 = memref.load %arg0[%c48_161] : memref<144xf32, #tpu.memory_space<smem>>
    %1104 = vector.broadcast %1103 : f32 to vector<11x30xf32>
    %1105 = arith.mulf %1104, %860 : vector<11x30xf32>
    %1106 = arith.addf %1102, %1105 : vector<11x30xf32>
    %c49_162 = arith.constant 49 : index
    %1107 = memref.load %arg0[%c49_162] : memref<144xf32, #tpu.memory_space<smem>>
    %1108 = vector.broadcast %1107 : f32 to vector<11x30xf32>
    %1109 = arith.mulf %1108, %864 : vector<11x30xf32>
    %1110 = arith.addf %1106, %1109 : vector<11x30xf32>
    %c50_163 = arith.constant 50 : index
    %1111 = memref.load %arg0[%c50_163] : memref<144xf32, #tpu.memory_space<smem>>
    %1112 = vector.broadcast %1111 : f32 to vector<11x30xf32>
    %1113 = arith.mulf %1112, %868 : vector<11x30xf32>
    %1114 = arith.addf %1110, %1113 : vector<11x30xf32>
    %c51_164 = arith.constant 51 : index
    %1115 = memref.load %arg0[%c51_164] : memref<144xf32, #tpu.memory_space<smem>>
    %1116 = vector.broadcast %1115 : f32 to vector<11x30xf32>
    %1117 = arith.mulf %1116, %861 : vector<11x30xf32>
    %1118 = arith.addf %1114, %1117 : vector<11x30xf32>
    %c52_165 = arith.constant 52 : index
    %1119 = memref.load %arg0[%c52_165] : memref<144xf32, #tpu.memory_space<smem>>
    %1120 = vector.broadcast %1119 : f32 to vector<11x30xf32>
    %1121 = arith.mulf %1120, %865 : vector<11x30xf32>
    %1122 = arith.addf %1118, %1121 : vector<11x30xf32>
    %c53_166 = arith.constant 53 : index
    %1123 = memref.load %arg0[%c53_166] : memref<144xf32, #tpu.memory_space<smem>>
    %1124 = vector.broadcast %1123 : f32 to vector<11x30xf32>
    %1125 = arith.mulf %1124, %869 : vector<11x30xf32>
    %1126 = arith.addf %1122, %1125 : vector<11x30xf32>
    %c54_167 = arith.constant 54 : index
    %1127 = memref.load %arg0[%c54_167] : memref<144xf32, #tpu.memory_space<smem>>
    %1128 = vector.broadcast %1127 : f32 to vector<11x30xf32>
    %1129 = arith.mulf %1128, %873 : vector<11x30xf32>
    %1130 = arith.addf %1126, %1129 : vector<11x30xf32>
    %c55_168 = arith.constant 55 : index
    %1131 = memref.load %arg0[%c55_168] : memref<144xf32, #tpu.memory_space<smem>>
    %1132 = vector.broadcast %1131 : f32 to vector<11x30xf32>
    %1133 = arith.mulf %1132, %877 : vector<11x30xf32>
    %1134 = arith.addf %1130, %1133 : vector<11x30xf32>
    %c56_169 = arith.constant 56 : index
    %1135 = memref.load %arg0[%c56_169] : memref<144xf32, #tpu.memory_space<smem>>
    %1136 = vector.broadcast %1135 : f32 to vector<11x30xf32>
    %1137 = arith.mulf %1136, %881 : vector<11x30xf32>
    %1138 = arith.addf %1134, %1137 : vector<11x30xf32>
    %c57_170 = arith.constant 57 : index
    %1139 = memref.load %arg0[%c57_170] : memref<144xf32, #tpu.memory_space<smem>>
    %1140 = vector.broadcast %1139 : f32 to vector<11x30xf32>
    %1141 = arith.mulf %1140, %874 : vector<11x30xf32>
    %1142 = arith.addf %1138, %1141 : vector<11x30xf32>
    %c58_171 = arith.constant 58 : index
    %1143 = memref.load %arg0[%c58_171] : memref<144xf32, #tpu.memory_space<smem>>
    %1144 = vector.broadcast %1143 : f32 to vector<11x30xf32>
    %1145 = arith.mulf %1144, %878 : vector<11x30xf32>
    %1146 = arith.addf %1142, %1145 : vector<11x30xf32>
    %c59_172 = arith.constant 59 : index
    %1147 = memref.load %arg0[%c59_172] : memref<144xf32, #tpu.memory_space<smem>>
    %1148 = vector.broadcast %1147 : f32 to vector<11x30xf32>
    %1149 = arith.mulf %1148, %882 : vector<11x30xf32>
    %1150 = arith.addf %1146, %1149 : vector<11x30xf32>
    %c60_173 = arith.constant 60 : index
    %1151 = memref.load %arg0[%c60_173] : memref<144xf32, #tpu.memory_space<smem>>
    %1152 = vector.broadcast %1151 : f32 to vector<11x30xf32>
    %1153 = arith.mulf %1152, %875 : vector<11x30xf32>
    %1154 = arith.addf %1150, %1153 : vector<11x30xf32>
    %c61_174 = arith.constant 61 : index
    %1155 = memref.load %arg0[%c61_174] : memref<144xf32, #tpu.memory_space<smem>>
    %1156 = vector.broadcast %1155 : f32 to vector<11x30xf32>
    %1157 = arith.mulf %1156, %879 : vector<11x30xf32>
    %1158 = arith.addf %1154, %1157 : vector<11x30xf32>
    %c62_175 = arith.constant 62 : index
    %1159 = memref.load %arg0[%c62_175] : memref<144xf32, #tpu.memory_space<smem>>
    %1160 = vector.broadcast %1159 : f32 to vector<11x30xf32>
    %1161 = arith.mulf %1160, %883 : vector<11x30xf32>
    %1162 = arith.addf %1158, %1161 : vector<11x30xf32>
    %c63_176 = arith.constant 63 : index
    %1163 = memref.load %arg0[%c63_176] : memref<144xf32, #tpu.memory_space<smem>>
    %1164 = vector.broadcast %1163 : f32 to vector<11x30xf32>
    %1165 = arith.mulf %1164, %887 : vector<11x30xf32>
    %1166 = arith.addf %1162, %1165 : vector<11x30xf32>
    %c64_177 = arith.constant 64 : index
    %1167 = memref.load %arg0[%c64_177] : memref<144xf32, #tpu.memory_space<smem>>
    %1168 = vector.broadcast %1167 : f32 to vector<11x30xf32>
    %1169 = arith.mulf %1168, %891 : vector<11x30xf32>
    %1170 = arith.addf %1166, %1169 : vector<11x30xf32>
    %c65_178 = arith.constant 65 : index
    %1171 = memref.load %arg0[%c65_178] : memref<144xf32, #tpu.memory_space<smem>>
    %1172 = vector.broadcast %1171 : f32 to vector<11x30xf32>
    %1173 = arith.mulf %1172, %895 : vector<11x30xf32>
    %1174 = arith.addf %1170, %1173 : vector<11x30xf32>
    %c66_179 = arith.constant 66 : index
    %1175 = memref.load %arg0[%c66_179] : memref<144xf32, #tpu.memory_space<smem>>
    %1176 = vector.broadcast %1175 : f32 to vector<11x30xf32>
    %1177 = arith.mulf %1176, %888 : vector<11x30xf32>
    %1178 = arith.addf %1174, %1177 : vector<11x30xf32>
    %c67_180 = arith.constant 67 : index
    %1179 = memref.load %arg0[%c67_180] : memref<144xf32, #tpu.memory_space<smem>>
    %1180 = vector.broadcast %1179 : f32 to vector<11x30xf32>
    %1181 = arith.mulf %1180, %892 : vector<11x30xf32>
    %1182 = arith.addf %1178, %1181 : vector<11x30xf32>
    %c68_181 = arith.constant 68 : index
    %1183 = memref.load %arg0[%c68_181] : memref<144xf32, #tpu.memory_space<smem>>
    %1184 = vector.broadcast %1183 : f32 to vector<11x30xf32>
    %1185 = arith.mulf %1184, %896 : vector<11x30xf32>
    %1186 = arith.addf %1182, %1185 : vector<11x30xf32>
    %c69_182 = arith.constant 69 : index
    %1187 = memref.load %arg0[%c69_182] : memref<144xf32, #tpu.memory_space<smem>>
    %1188 = vector.broadcast %1187 : f32 to vector<11x30xf32>
    %1189 = arith.mulf %1188, %889 : vector<11x30xf32>
    %1190 = arith.addf %1186, %1189 : vector<11x30xf32>
    %c70_183 = arith.constant 70 : index
    %1191 = memref.load %arg0[%c70_183] : memref<144xf32, #tpu.memory_space<smem>>
    %1192 = vector.broadcast %1191 : f32 to vector<11x30xf32>
    %1193 = arith.mulf %1192, %893 : vector<11x30xf32>
    %1194 = arith.addf %1190, %1193 : vector<11x30xf32>
    %c71_184 = arith.constant 71 : index
    %1195 = memref.load %arg0[%c71_184] : memref<144xf32, #tpu.memory_space<smem>>
    %1196 = vector.broadcast %1195 : f32 to vector<11x30xf32>
    %1197 = arith.mulf %1196, %897 : vector<11x30xf32>
    %1198 = arith.addf %1194, %1197 : vector<11x30xf32>
    %cst_185 = arith.constant 0.000000e+00 : f32
    %1199 = vector.broadcast %cst_185 : f32 to vector<11x30xf32>
    %1200 = arith.subf %1199, %1198 : vector<11x30xf32>
    %1201 = math.exp %1200 : vector<11x30xf32>
    %cst_186 = arith.constant 1.000000e+00 : f32
    %1202 = vector.broadcast %cst_186 : f32 to vector<11x30xf32>
    %1203 = arith.addf %1202, %1201 : vector<11x30xf32>
    %cst_187 = arith.constant 1.000000e+00 : f32
    %1204 = vector.broadcast %cst_187 : f32 to vector<11x30xf32>
    %1205 = arith.divf %1204, %1203 : vector<11x30xf32>
    %cst_188 = arith.constant 0.000000e+00 : f32
    %1206 = vector.broadcast %cst_188 : f32 to vector<11x30xf32>
    %1207 = arith.select %5, %1205, %1206 : vector<11x30xi1>, vector<11x30xf32>
    %c2_189 = arith.constant 2 : index
    %1208 = memref.load %arg1[%c2_189] : memref<4xf32, #tpu.memory_space<smem>>
    %1209 = vector.broadcast %1208 : f32 to vector<11x30xf32>
    %c72_190 = arith.constant 72 : index
    %1210 = memref.load %arg0[%c72_190] : memref<144xf32, #tpu.memory_space<smem>>
    %1211 = vector.broadcast %1210 : f32 to vector<11x30xf32>
    %1212 = arith.mulf %1211, %845 : vector<11x30xf32>
    %1213 = arith.addf %1209, %1212 : vector<11x30xf32>
    %c73_191 = arith.constant 73 : index
    %1214 = memref.load %arg0[%c73_191] : memref<144xf32, #tpu.memory_space<smem>>
    %1215 = vector.broadcast %1214 : f32 to vector<11x30xf32>
    %1216 = arith.mulf %1215, %849 : vector<11x30xf32>
    %1217 = arith.addf %1213, %1216 : vector<11x30xf32>
    %c74_192 = arith.constant 74 : index
    %1218 = memref.load %arg0[%c74_192] : memref<144xf32, #tpu.memory_space<smem>>
    %1219 = vector.broadcast %1218 : f32 to vector<11x30xf32>
    %1220 = arith.mulf %1219, %853 : vector<11x30xf32>
    %1221 = arith.addf %1217, %1220 : vector<11x30xf32>
    %c75_193 = arith.constant 75 : index
    %1222 = memref.load %arg0[%c75_193] : memref<144xf32, #tpu.memory_space<smem>>
    %1223 = vector.broadcast %1222 : f32 to vector<11x30xf32>
    %1224 = arith.mulf %1223, %846 : vector<11x30xf32>
    %1225 = arith.addf %1221, %1224 : vector<11x30xf32>
    %c76_194 = arith.constant 76 : index
    %1226 = memref.load %arg0[%c76_194] : memref<144xf32, #tpu.memory_space<smem>>
    %1227 = vector.broadcast %1226 : f32 to vector<11x30xf32>
    %1228 = arith.mulf %1227, %850 : vector<11x30xf32>
    %1229 = arith.addf %1225, %1228 : vector<11x30xf32>
    %c77_195 = arith.constant 77 : index
    %1230 = memref.load %arg0[%c77_195] : memref<144xf32, #tpu.memory_space<smem>>
    %1231 = vector.broadcast %1230 : f32 to vector<11x30xf32>
    %1232 = arith.mulf %1231, %854 : vector<11x30xf32>
    %1233 = arith.addf %1229, %1232 : vector<11x30xf32>
    %c78_196 = arith.constant 78 : index
    %1234 = memref.load %arg0[%c78_196] : memref<144xf32, #tpu.memory_space<smem>>
    %1235 = vector.broadcast %1234 : f32 to vector<11x30xf32>
    %1236 = arith.mulf %1235, %847 : vector<11x30xf32>
    %1237 = arith.addf %1233, %1236 : vector<11x30xf32>
    %c79_197 = arith.constant 79 : index
    %1238 = memref.load %arg0[%c79_197] : memref<144xf32, #tpu.memory_space<smem>>
    %1239 = vector.broadcast %1238 : f32 to vector<11x30xf32>
    %1240 = arith.mulf %1239, %851 : vector<11x30xf32>
    %1241 = arith.addf %1237, %1240 : vector<11x30xf32>
    %c80_198 = arith.constant 80 : index
    %1242 = memref.load %arg0[%c80_198] : memref<144xf32, #tpu.memory_space<smem>>
    %1243 = vector.broadcast %1242 : f32 to vector<11x30xf32>
    %1244 = arith.mulf %1243, %855 : vector<11x30xf32>
    %1245 = arith.addf %1241, %1244 : vector<11x30xf32>
    %c81_199 = arith.constant 81 : index
    %1246 = memref.load %arg0[%c81_199] : memref<144xf32, #tpu.memory_space<smem>>
    %1247 = vector.broadcast %1246 : f32 to vector<11x30xf32>
    %1248 = arith.mulf %1247, %859 : vector<11x30xf32>
    %1249 = arith.addf %1245, %1248 : vector<11x30xf32>
    %c82_200 = arith.constant 82 : index
    %1250 = memref.load %arg0[%c82_200] : memref<144xf32, #tpu.memory_space<smem>>
    %1251 = vector.broadcast %1250 : f32 to vector<11x30xf32>
    %1252 = arith.mulf %1251, %863 : vector<11x30xf32>
    %1253 = arith.addf %1249, %1252 : vector<11x30xf32>
    %c83_201 = arith.constant 83 : index
    %1254 = memref.load %arg0[%c83_201] : memref<144xf32, #tpu.memory_space<smem>>
    %1255 = vector.broadcast %1254 : f32 to vector<11x30xf32>
    %1256 = arith.mulf %1255, %867 : vector<11x30xf32>
    %1257 = arith.addf %1253, %1256 : vector<11x30xf32>
    %c84_202 = arith.constant 84 : index
    %1258 = memref.load %arg0[%c84_202] : memref<144xf32, #tpu.memory_space<smem>>
    %1259 = vector.broadcast %1258 : f32 to vector<11x30xf32>
    %1260 = arith.mulf %1259, %860 : vector<11x30xf32>
    %1261 = arith.addf %1257, %1260 : vector<11x30xf32>
    %c85_203 = arith.constant 85 : index
    %1262 = memref.load %arg0[%c85_203] : memref<144xf32, #tpu.memory_space<smem>>
    %1263 = vector.broadcast %1262 : f32 to vector<11x30xf32>
    %1264 = arith.mulf %1263, %864 : vector<11x30xf32>
    %1265 = arith.addf %1261, %1264 : vector<11x30xf32>
    %c86_204 = arith.constant 86 : index
    %1266 = memref.load %arg0[%c86_204] : memref<144xf32, #tpu.memory_space<smem>>
    %1267 = vector.broadcast %1266 : f32 to vector<11x30xf32>
    %1268 = arith.mulf %1267, %868 : vector<11x30xf32>
    %1269 = arith.addf %1265, %1268 : vector<11x30xf32>
    %c87_205 = arith.constant 87 : index
    %1270 = memref.load %arg0[%c87_205] : memref<144xf32, #tpu.memory_space<smem>>
    %1271 = vector.broadcast %1270 : f32 to vector<11x30xf32>
    %1272 = arith.mulf %1271, %861 : vector<11x30xf32>
    %1273 = arith.addf %1269, %1272 : vector<11x30xf32>
    %c88_206 = arith.constant 88 : index
    %1274 = memref.load %arg0[%c88_206] : memref<144xf32, #tpu.memory_space<smem>>
    %1275 = vector.broadcast %1274 : f32 to vector<11x30xf32>
    %1276 = arith.mulf %1275, %865 : vector<11x30xf32>
    %1277 = arith.addf %1273, %1276 : vector<11x30xf32>
    %c89_207 = arith.constant 89 : index
    %1278 = memref.load %arg0[%c89_207] : memref<144xf32, #tpu.memory_space<smem>>
    %1279 = vector.broadcast %1278 : f32 to vector<11x30xf32>
    %1280 = arith.mulf %1279, %869 : vector<11x30xf32>
    %1281 = arith.addf %1277, %1280 : vector<11x30xf32>
    %c90_208 = arith.constant 90 : index
    %1282 = memref.load %arg0[%c90_208] : memref<144xf32, #tpu.memory_space<smem>>
    %1283 = vector.broadcast %1282 : f32 to vector<11x30xf32>
    %1284 = arith.mulf %1283, %873 : vector<11x30xf32>
    %1285 = arith.addf %1281, %1284 : vector<11x30xf32>
    %c91_209 = arith.constant 91 : index
    %1286 = memref.load %arg0[%c91_209] : memref<144xf32, #tpu.memory_space<smem>>
    %1287 = vector.broadcast %1286 : f32 to vector<11x30xf32>
    %1288 = arith.mulf %1287, %877 : vector<11x30xf32>
    %1289 = arith.addf %1285, %1288 : vector<11x30xf32>
    %c92_210 = arith.constant 92 : index
    %1290 = memref.load %arg0[%c92_210] : memref<144xf32, #tpu.memory_space<smem>>
    %1291 = vector.broadcast %1290 : f32 to vector<11x30xf32>
    %1292 = arith.mulf %1291, %881 : vector<11x30xf32>
    %1293 = arith.addf %1289, %1292 : vector<11x30xf32>
    %c93_211 = arith.constant 93 : index
    %1294 = memref.load %arg0[%c93_211] : memref<144xf32, #tpu.memory_space<smem>>
    %1295 = vector.broadcast %1294 : f32 to vector<11x30xf32>
    %1296 = arith.mulf %1295, %874 : vector<11x30xf32>
    %1297 = arith.addf %1293, %1296 : vector<11x30xf32>
    %c94_212 = arith.constant 94 : index
    %1298 = memref.load %arg0[%c94_212] : memref<144xf32, #tpu.memory_space<smem>>
    %1299 = vector.broadcast %1298 : f32 to vector<11x30xf32>
    %1300 = arith.mulf %1299, %878 : vector<11x30xf32>
    %1301 = arith.addf %1297, %1300 : vector<11x30xf32>
    %c95_213 = arith.constant 95 : index
    %1302 = memref.load %arg0[%c95_213] : memref<144xf32, #tpu.memory_space<smem>>
    %1303 = vector.broadcast %1302 : f32 to vector<11x30xf32>
    %1304 = arith.mulf %1303, %882 : vector<11x30xf32>
    %1305 = arith.addf %1301, %1304 : vector<11x30xf32>
    %c96_214 = arith.constant 96 : index
    %1306 = memref.load %arg0[%c96_214] : memref<144xf32, #tpu.memory_space<smem>>
    %1307 = vector.broadcast %1306 : f32 to vector<11x30xf32>
    %1308 = arith.mulf %1307, %875 : vector<11x30xf32>
    %1309 = arith.addf %1305, %1308 : vector<11x30xf32>
    %c97_215 = arith.constant 97 : index
    %1310 = memref.load %arg0[%c97_215] : memref<144xf32, #tpu.memory_space<smem>>
    %1311 = vector.broadcast %1310 : f32 to vector<11x30xf32>
    %1312 = arith.mulf %1311, %879 : vector<11x30xf32>
    %1313 = arith.addf %1309, %1312 : vector<11x30xf32>
    %c98_216 = arith.constant 98 : index
    %1314 = memref.load %arg0[%c98_216] : memref<144xf32, #tpu.memory_space<smem>>
    %1315 = vector.broadcast %1314 : f32 to vector<11x30xf32>
    %1316 = arith.mulf %1315, %883 : vector<11x30xf32>
    %1317 = arith.addf %1313, %1316 : vector<11x30xf32>
    %c99_217 = arith.constant 99 : index
    %1318 = memref.load %arg0[%c99_217] : memref<144xf32, #tpu.memory_space<smem>>
    %1319 = vector.broadcast %1318 : f32 to vector<11x30xf32>
    %1320 = arith.mulf %1319, %887 : vector<11x30xf32>
    %1321 = arith.addf %1317, %1320 : vector<11x30xf32>
    %c100_218 = arith.constant 100 : index
    %1322 = memref.load %arg0[%c100_218] : memref<144xf32, #tpu.memory_space<smem>>
    %1323 = vector.broadcast %1322 : f32 to vector<11x30xf32>
    %1324 = arith.mulf %1323, %891 : vector<11x30xf32>
    %1325 = arith.addf %1321, %1324 : vector<11x30xf32>
    %c101_219 = arith.constant 101 : index
    %1326 = memref.load %arg0[%c101_219] : memref<144xf32, #tpu.memory_space<smem>>
    %1327 = vector.broadcast %1326 : f32 to vector<11x30xf32>
    %1328 = arith.mulf %1327, %895 : vector<11x30xf32>
    %1329 = arith.addf %1325, %1328 : vector<11x30xf32>
    %c102_220 = arith.constant 102 : index
    %1330 = memref.load %arg0[%c102_220] : memref<144xf32, #tpu.memory_space<smem>>
    %1331 = vector.broadcast %1330 : f32 to vector<11x30xf32>
    %1332 = arith.mulf %1331, %888 : vector<11x30xf32>
    %1333 = arith.addf %1329, %1332 : vector<11x30xf32>
    %c103_221 = arith.constant 103 : index
    %1334 = memref.load %arg0[%c103_221] : memref<144xf32, #tpu.memory_space<smem>>
    %1335 = vector.broadcast %1334 : f32 to vector<11x30xf32>
    %1336 = arith.mulf %1335, %892 : vector<11x30xf32>
    %1337 = arith.addf %1333, %1336 : vector<11x30xf32>
    %c104_222 = arith.constant 104 : index
    %1338 = memref.load %arg0[%c104_222] : memref<144xf32, #tpu.memory_space<smem>>
    %1339 = vector.broadcast %1338 : f32 to vector<11x30xf32>
    %1340 = arith.mulf %1339, %896 : vector<11x30xf32>
    %1341 = arith.addf %1337, %1340 : vector<11x30xf32>
    %c105_223 = arith.constant 105 : index
    %1342 = memref.load %arg0[%c105_223] : memref<144xf32, #tpu.memory_space<smem>>
    %1343 = vector.broadcast %1342 : f32 to vector<11x30xf32>
    %1344 = arith.mulf %1343, %889 : vector<11x30xf32>
    %1345 = arith.addf %1341, %1344 : vector<11x30xf32>
    %c106_224 = arith.constant 106 : index
    %1346 = memref.load %arg0[%c106_224] : memref<144xf32, #tpu.memory_space<smem>>
    %1347 = vector.broadcast %1346 : f32 to vector<11x30xf32>
    %1348 = arith.mulf %1347, %893 : vector<11x30xf32>
    %1349 = arith.addf %1345, %1348 : vector<11x30xf32>
    %c107_225 = arith.constant 107 : index
    %1350 = memref.load %arg0[%c107_225] : memref<144xf32, #tpu.memory_space<smem>>
    %1351 = vector.broadcast %1350 : f32 to vector<11x30xf32>
    %1352 = arith.mulf %1351, %897 : vector<11x30xf32>
    %1353 = arith.addf %1349, %1352 : vector<11x30xf32>
    %cst_226 = arith.constant 0.000000e+00 : f32
    %1354 = vector.broadcast %cst_226 : f32 to vector<11x30xf32>
    %1355 = arith.subf %1354, %1353 : vector<11x30xf32>
    %1356 = math.exp %1355 : vector<11x30xf32>
    %cst_227 = arith.constant 1.000000e+00 : f32
    %1357 = vector.broadcast %cst_227 : f32 to vector<11x30xf32>
    %1358 = arith.addf %1357, %1356 : vector<11x30xf32>
    %cst_228 = arith.constant 1.000000e+00 : f32
    %1359 = vector.broadcast %cst_228 : f32 to vector<11x30xf32>
    %1360 = arith.divf %1359, %1358 : vector<11x30xf32>
    %cst_229 = arith.constant 0.000000e+00 : f32
    %1361 = vector.broadcast %cst_229 : f32 to vector<11x30xf32>
    %1362 = arith.select %5, %1360, %1361 : vector<11x30xi1>, vector<11x30xf32>
    %c3_230 = arith.constant 3 : index
    %1363 = memref.load %arg1[%c3_230] : memref<4xf32, #tpu.memory_space<smem>>
    %1364 = vector.broadcast %1363 : f32 to vector<11x30xf32>
    %c108_231 = arith.constant 108 : index
    %1365 = memref.load %arg0[%c108_231] : memref<144xf32, #tpu.memory_space<smem>>
    %1366 = vector.broadcast %1365 : f32 to vector<11x30xf32>
    %1367 = arith.mulf %1366, %845 : vector<11x30xf32>
    %1368 = arith.addf %1364, %1367 : vector<11x30xf32>
    %c109_232 = arith.constant 109 : index
    %1369 = memref.load %arg0[%c109_232] : memref<144xf32, #tpu.memory_space<smem>>
    %1370 = vector.broadcast %1369 : f32 to vector<11x30xf32>
    %1371 = arith.mulf %1370, %849 : vector<11x30xf32>
    %1372 = arith.addf %1368, %1371 : vector<11x30xf32>
    %c110_233 = arith.constant 110 : index
    %1373 = memref.load %arg0[%c110_233] : memref<144xf32, #tpu.memory_space<smem>>
    %1374 = vector.broadcast %1373 : f32 to vector<11x30xf32>
    %1375 = arith.mulf %1374, %853 : vector<11x30xf32>
    %1376 = arith.addf %1372, %1375 : vector<11x30xf32>
    %c111_234 = arith.constant 111 : index
    %1377 = memref.load %arg0[%c111_234] : memref<144xf32, #tpu.memory_space<smem>>
    %1378 = vector.broadcast %1377 : f32 to vector<11x30xf32>
    %1379 = arith.mulf %1378, %846 : vector<11x30xf32>
    %1380 = arith.addf %1376, %1379 : vector<11x30xf32>
    %c112_235 = arith.constant 112 : index
    %1381 = memref.load %arg0[%c112_235] : memref<144xf32, #tpu.memory_space<smem>>
    %1382 = vector.broadcast %1381 : f32 to vector<11x30xf32>
    %1383 = arith.mulf %1382, %850 : vector<11x30xf32>
    %1384 = arith.addf %1380, %1383 : vector<11x30xf32>
    %c113_236 = arith.constant 113 : index
    %1385 = memref.load %arg0[%c113_236] : memref<144xf32, #tpu.memory_space<smem>>
    %1386 = vector.broadcast %1385 : f32 to vector<11x30xf32>
    %1387 = arith.mulf %1386, %854 : vector<11x30xf32>
    %1388 = arith.addf %1384, %1387 : vector<11x30xf32>
    %c114_237 = arith.constant 114 : index
    %1389 = memref.load %arg0[%c114_237] : memref<144xf32, #tpu.memory_space<smem>>
    %1390 = vector.broadcast %1389 : f32 to vector<11x30xf32>
    %1391 = arith.mulf %1390, %847 : vector<11x30xf32>
    %1392 = arith.addf %1388, %1391 : vector<11x30xf32>
    %c115_238 = arith.constant 115 : index
    %1393 = memref.load %arg0[%c115_238] : memref<144xf32, #tpu.memory_space<smem>>
    %1394 = vector.broadcast %1393 : f32 to vector<11x30xf32>
    %1395 = arith.mulf %1394, %851 : vector<11x30xf32>
    %1396 = arith.addf %1392, %1395 : vector<11x30xf32>
    %c116_239 = arith.constant 116 : index
    %1397 = memref.load %arg0[%c116_239] : memref<144xf32, #tpu.memory_space<smem>>
    %1398 = vector.broadcast %1397 : f32 to vector<11x30xf32>
    %1399 = arith.mulf %1398, %855 : vector<11x30xf32>
    %1400 = arith.addf %1396, %1399 : vector<11x30xf32>
    %c117_240 = arith.constant 117 : index
    %1401 = memref.load %arg0[%c117_240] : memref<144xf32, #tpu.memory_space<smem>>
    %1402 = vector.broadcast %1401 : f32 to vector<11x30xf32>
    %1403 = arith.mulf %1402, %859 : vector<11x30xf32>
    %1404 = arith.addf %1400, %1403 : vector<11x30xf32>
    %c118_241 = arith.constant 118 : index
    %1405 = memref.load %arg0[%c118_241] : memref<144xf32, #tpu.memory_space<smem>>
    %1406 = vector.broadcast %1405 : f32 to vector<11x30xf32>
    %1407 = arith.mulf %1406, %863 : vector<11x30xf32>
    %1408 = arith.addf %1404, %1407 : vector<11x30xf32>
    %c119_242 = arith.constant 119 : index
    %1409 = memref.load %arg0[%c119_242] : memref<144xf32, #tpu.memory_space<smem>>
    %1410 = vector.broadcast %1409 : f32 to vector<11x30xf32>
    %1411 = arith.mulf %1410, %867 : vector<11x30xf32>
    %1412 = arith.addf %1408, %1411 : vector<11x30xf32>
    %c120_243 = arith.constant 120 : index
    %1413 = memref.load %arg0[%c120_243] : memref<144xf32, #tpu.memory_space<smem>>
    %1414 = vector.broadcast %1413 : f32 to vector<11x30xf32>
    %1415 = arith.mulf %1414, %860 : vector<11x30xf32>
    %1416 = arith.addf %1412, %1415 : vector<11x30xf32>
    %c121_244 = arith.constant 121 : index
    %1417 = memref.load %arg0[%c121_244] : memref<144xf32, #tpu.memory_space<smem>>
    %1418 = vector.broadcast %1417 : f32 to vector<11x30xf32>
    %1419 = arith.mulf %1418, %864 : vector<11x30xf32>
    %1420 = arith.addf %1416, %1419 : vector<11x30xf32>
    %c122_245 = arith.constant 122 : index
    %1421 = memref.load %arg0[%c122_245] : memref<144xf32, #tpu.memory_space<smem>>
    %1422 = vector.broadcast %1421 : f32 to vector<11x30xf32>
    %1423 = arith.mulf %1422, %868 : vector<11x30xf32>
    %1424 = arith.addf %1420, %1423 : vector<11x30xf32>
    %c123_246 = arith.constant 123 : index
    %1425 = memref.load %arg0[%c123_246] : memref<144xf32, #tpu.memory_space<smem>>
    %1426 = vector.broadcast %1425 : f32 to vector<11x30xf32>
    %1427 = arith.mulf %1426, %861 : vector<11x30xf32>
    %1428 = arith.addf %1424, %1427 : vector<11x30xf32>
    %c124_247 = arith.constant 124 : index
    %1429 = memref.load %arg0[%c124_247] : memref<144xf32, #tpu.memory_space<smem>>
    %1430 = vector.broadcast %1429 : f32 to vector<11x30xf32>
    %1431 = arith.mulf %1430, %865 : vector<11x30xf32>
    %1432 = arith.addf %1428, %1431 : vector<11x30xf32>
    %c125_248 = arith.constant 125 : index
    %1433 = memref.load %arg0[%c125_248] : memref<144xf32, #tpu.memory_space<smem>>
    %1434 = vector.broadcast %1433 : f32 to vector<11x30xf32>
    %1435 = arith.mulf %1434, %869 : vector<11x30xf32>
    %1436 = arith.addf %1432, %1435 : vector<11x30xf32>
    %c126_249 = arith.constant 126 : index
    %1437 = memref.load %arg0[%c126_249] : memref<144xf32, #tpu.memory_space<smem>>
    %1438 = vector.broadcast %1437 : f32 to vector<11x30xf32>
    %1439 = arith.mulf %1438, %873 : vector<11x30xf32>
    %1440 = arith.addf %1436, %1439 : vector<11x30xf32>
    %c127_250 = arith.constant 127 : index
    %1441 = memref.load %arg0[%c127_250] : memref<144xf32, #tpu.memory_space<smem>>
    %1442 = vector.broadcast %1441 : f32 to vector<11x30xf32>
    %1443 = arith.mulf %1442, %877 : vector<11x30xf32>
    %1444 = arith.addf %1440, %1443 : vector<11x30xf32>
    %c128_251 = arith.constant 128 : index
    %1445 = memref.load %arg0[%c128_251] : memref<144xf32, #tpu.memory_space<smem>>
    %1446 = vector.broadcast %1445 : f32 to vector<11x30xf32>
    %1447 = arith.mulf %1446, %881 : vector<11x30xf32>
    %1448 = arith.addf %1444, %1447 : vector<11x30xf32>
    %c129_252 = arith.constant 129 : index
    %1449 = memref.load %arg0[%c129_252] : memref<144xf32, #tpu.memory_space<smem>>
    %1450 = vector.broadcast %1449 : f32 to vector<11x30xf32>
    %1451 = arith.mulf %1450, %874 : vector<11x30xf32>
    %1452 = arith.addf %1448, %1451 : vector<11x30xf32>
    %c130_253 = arith.constant 130 : index
    %1453 = memref.load %arg0[%c130_253] : memref<144xf32, #tpu.memory_space<smem>>
    %1454 = vector.broadcast %1453 : f32 to vector<11x30xf32>
    %1455 = arith.mulf %1454, %878 : vector<11x30xf32>
    %1456 = arith.addf %1452, %1455 : vector<11x30xf32>
    %c131_254 = arith.constant 131 : index
    %1457 = memref.load %arg0[%c131_254] : memref<144xf32, #tpu.memory_space<smem>>
    %1458 = vector.broadcast %1457 : f32 to vector<11x30xf32>
    %1459 = arith.mulf %1458, %882 : vector<11x30xf32>
    %1460 = arith.addf %1456, %1459 : vector<11x30xf32>
    %c132_255 = arith.constant 132 : index
    %1461 = memref.load %arg0[%c132_255] : memref<144xf32, #tpu.memory_space<smem>>
    %1462 = vector.broadcast %1461 : f32 to vector<11x30xf32>
    %1463 = arith.mulf %1462, %875 : vector<11x30xf32>
    %1464 = arith.addf %1460, %1463 : vector<11x30xf32>
    %c133_256 = arith.constant 133 : index
    %1465 = memref.load %arg0[%c133_256] : memref<144xf32, #tpu.memory_space<smem>>
    %1466 = vector.broadcast %1465 : f32 to vector<11x30xf32>
    %1467 = arith.mulf %1466, %879 : vector<11x30xf32>
    %1468 = arith.addf %1464, %1467 : vector<11x30xf32>
    %c134_257 = arith.constant 134 : index
    %1469 = memref.load %arg0[%c134_257] : memref<144xf32, #tpu.memory_space<smem>>
    %1470 = vector.broadcast %1469 : f32 to vector<11x30xf32>
    %1471 = arith.mulf %1470, %883 : vector<11x30xf32>
    %1472 = arith.addf %1468, %1471 : vector<11x30xf32>
    %c135_258 = arith.constant 135 : index
    %1473 = memref.load %arg0[%c135_258] : memref<144xf32, #tpu.memory_space<smem>>
    %1474 = vector.broadcast %1473 : f32 to vector<11x30xf32>
    %1475 = arith.mulf %1474, %887 : vector<11x30xf32>
    %1476 = arith.addf %1472, %1475 : vector<11x30xf32>
    %c136_259 = arith.constant 136 : index
    %1477 = memref.load %arg0[%c136_259] : memref<144xf32, #tpu.memory_space<smem>>
    %1478 = vector.broadcast %1477 : f32 to vector<11x30xf32>
    %1479 = arith.mulf %1478, %891 : vector<11x30xf32>
    %1480 = arith.addf %1476, %1479 : vector<11x30xf32>
    %c137_260 = arith.constant 137 : index
    %1481 = memref.load %arg0[%c137_260] : memref<144xf32, #tpu.memory_space<smem>>
    %1482 = vector.broadcast %1481 : f32 to vector<11x30xf32>
    %1483 = arith.mulf %1482, %895 : vector<11x30xf32>
    %1484 = arith.addf %1480, %1483 : vector<11x30xf32>
    %c138_261 = arith.constant 138 : index
    %1485 = memref.load %arg0[%c138_261] : memref<144xf32, #tpu.memory_space<smem>>
    %1486 = vector.broadcast %1485 : f32 to vector<11x30xf32>
    %1487 = arith.mulf %1486, %888 : vector<11x30xf32>
    %1488 = arith.addf %1484, %1487 : vector<11x30xf32>
    %c139_262 = arith.constant 139 : index
    %1489 = memref.load %arg0[%c139_262] : memref<144xf32, #tpu.memory_space<smem>>
    %1490 = vector.broadcast %1489 : f32 to vector<11x30xf32>
    %1491 = arith.mulf %1490, %892 : vector<11x30xf32>
    %1492 = arith.addf %1488, %1491 : vector<11x30xf32>
    %c140_263 = arith.constant 140 : index
    %1493 = memref.load %arg0[%c140_263] : memref<144xf32, #tpu.memory_space<smem>>
    %1494 = vector.broadcast %1493 : f32 to vector<11x30xf32>
    %1495 = arith.mulf %1494, %896 : vector<11x30xf32>
    %1496 = arith.addf %1492, %1495 : vector<11x30xf32>
    %c141_264 = arith.constant 141 : index
    %1497 = memref.load %arg0[%c141_264] : memref<144xf32, #tpu.memory_space<smem>>
    %1498 = vector.broadcast %1497 : f32 to vector<11x30xf32>
    %1499 = arith.mulf %1498, %889 : vector<11x30xf32>
    %1500 = arith.addf %1496, %1499 : vector<11x30xf32>
    %c142_265 = arith.constant 142 : index
    %1501 = memref.load %arg0[%c142_265] : memref<144xf32, #tpu.memory_space<smem>>
    %1502 = vector.broadcast %1501 : f32 to vector<11x30xf32>
    %1503 = arith.mulf %1502, %893 : vector<11x30xf32>
    %1504 = arith.addf %1500, %1503 : vector<11x30xf32>
    %c143_266 = arith.constant 143 : index
    %1505 = memref.load %arg0[%c143_266] : memref<144xf32, #tpu.memory_space<smem>>
    %1506 = vector.broadcast %1505 : f32 to vector<11x30xf32>
    %1507 = arith.mulf %1506, %897 : vector<11x30xf32>
    %1508 = arith.addf %1504, %1507 : vector<11x30xf32>
    %cst_267 = arith.constant 0.000000e+00 : f32
    %1509 = vector.broadcast %cst_267 : f32 to vector<11x30xf32>
    %1510 = arith.subf %1509, %1508 : vector<11x30xf32>
    %1511 = math.exp %1510 : vector<11x30xf32>
    %cst_268 = arith.constant 1.000000e+00 : f32
    %1512 = vector.broadcast %cst_268 : f32 to vector<11x30xf32>
    %1513 = arith.addf %1512, %1511 : vector<11x30xf32>
    %cst_269 = arith.constant 1.000000e+00 : f32
    %1514 = vector.broadcast %cst_269 : f32 to vector<11x30xf32>
    %1515 = arith.divf %1514, %1513 : vector<11x30xf32>
    %cst_270 = arith.constant 0.000000e+00 : f32
    %1516 = vector.broadcast %cst_270 : f32 to vector<11x30xf32>
    %1517 = arith.select %5, %1515, %1516 : vector<11x30xi1>, vector<11x30xf32>
    %1518 = vector.extract_strided_slice %1052 {offsets = [2, 0], sizes = [7, 30], strides = [1, 1]} : vector<11x30xf32> to vector<7x30xf32>
    %1519 = vector.extract_strided_slice %1518 {offsets = [0, 0], sizes = [7, 28], strides = [1, 1]} : vector<7x30xf32> to vector<7x28xf32>
    %1520 = vector.extract_strided_slice %1518 {offsets = [0, 1], sizes = [7, 28], strides = [1, 1]} : vector<7x30xf32> to vector<7x28xf32>
    %1521 = vector.extract_strided_slice %1518 {offsets = [0, 2], sizes = [7, 28], strides = [1, 1]} : vector<7x30xf32> to vector<7x28xf32>
    %1522 = vector.extract_strided_slice %1207 {offsets = [2, 0], sizes = [7, 30], strides = [1, 1]} : vector<11x30xf32> to vector<7x30xf32>
    %1523 = vector.extract_strided_slice %1522 {offsets = [0, 0], sizes = [7, 28], strides = [1, 1]} : vector<7x30xf32> to vector<7x28xf32>
    %1524 = vector.extract_strided_slice %1522 {offsets = [0, 1], sizes = [7, 28], strides = [1, 1]} : vector<7x30xf32> to vector<7x28xf32>
    %1525 = vector.extract_strided_slice %1522 {offsets = [0, 2], sizes = [7, 28], strides = [1, 1]} : vector<7x30xf32> to vector<7x28xf32>
    %1526 = vector.extract_strided_slice %1362 {offsets = [2, 0], sizes = [7, 30], strides = [1, 1]} : vector<11x30xf32> to vector<7x30xf32>
    %1527 = vector.extract_strided_slice %1526 {offsets = [0, 0], sizes = [7, 28], strides = [1, 1]} : vector<7x30xf32> to vector<7x28xf32>
    %1528 = vector.extract_strided_slice %1526 {offsets = [0, 1], sizes = [7, 28], strides = [1, 1]} : vector<7x30xf32> to vector<7x28xf32>
    %1529 = vector.extract_strided_slice %1526 {offsets = [0, 2], sizes = [7, 28], strides = [1, 1]} : vector<7x30xf32> to vector<7x28xf32>
    %1530 = vector.extract_strided_slice %1517 {offsets = [2, 0], sizes = [7, 30], strides = [1, 1]} : vector<11x30xf32> to vector<7x30xf32>
    %1531 = vector.extract_strided_slice %1530 {offsets = [0, 0], sizes = [7, 28], strides = [1, 1]} : vector<7x30xf32> to vector<7x28xf32>
    %1532 = vector.extract_strided_slice %1530 {offsets = [0, 1], sizes = [7, 28], strides = [1, 1]} : vector<7x30xf32> to vector<7x28xf32>
    %1533 = vector.extract_strided_slice %1530 {offsets = [0, 2], sizes = [7, 28], strides = [1, 1]} : vector<7x30xf32> to vector<7x28xf32>
    %c0_271 = arith.constant 0 : index
    %1534 = memref.load %arg3[%c0_271] : memref<4xf32, #tpu.memory_space<smem>>
    %1535 = vector.broadcast %1534 : f32 to vector<7x28xf32>
    %c0_272 = arith.constant 0 : index
    %1536 = memref.load %arg2[%c0_272] : memref<24xf32, #tpu.memory_space<smem>>
    %1537 = vector.broadcast %1536 : f32 to vector<7x28xf32>
    %1538 = arith.mulf %1537, %1521 : vector<7x28xf32>
    %1539 = arith.addf %1535, %1538 : vector<7x28xf32>
    %c1_273 = arith.constant 1 : index
    %1540 = memref.load %arg2[%c1_273] : memref<24xf32, #tpu.memory_space<smem>>
    %1541 = vector.broadcast %1540 : f32 to vector<7x28xf32>
    %1542 = arith.mulf %1541, %1520 : vector<7x28xf32>
    %1543 = arith.addf %1539, %1542 : vector<7x28xf32>
    %c2_274 = arith.constant 2 : index
    %1544 = memref.load %arg2[%c2_274] : memref<24xf32, #tpu.memory_space<smem>>
    %1545 = vector.broadcast %1544 : f32 to vector<7x28xf32>
    %1546 = arith.mulf %1545, %1519 : vector<7x28xf32>
    %1547 = arith.addf %1543, %1546 : vector<7x28xf32>
    %c6_275 = arith.constant 6 : index
    %1548 = memref.load %arg2[%c6_275] : memref<24xf32, #tpu.memory_space<smem>>
    %1549 = vector.broadcast %1548 : f32 to vector<7x28xf32>
    %1550 = arith.mulf %1549, %1525 : vector<7x28xf32>
    %1551 = arith.addf %1547, %1550 : vector<7x28xf32>
    %c7_276 = arith.constant 7 : index
    %1552 = memref.load %arg2[%c7_276] : memref<24xf32, #tpu.memory_space<smem>>
    %1553 = vector.broadcast %1552 : f32 to vector<7x28xf32>
    %1554 = arith.mulf %1553, %1524 : vector<7x28xf32>
    %1555 = arith.addf %1551, %1554 : vector<7x28xf32>
    %c8_277 = arith.constant 8 : index
    %1556 = memref.load %arg2[%c8_277] : memref<24xf32, #tpu.memory_space<smem>>
    %1557 = vector.broadcast %1556 : f32 to vector<7x28xf32>
    %1558 = arith.mulf %1557, %1523 : vector<7x28xf32>
    %1559 = arith.addf %1555, %1558 : vector<7x28xf32>
    %cst_278 = arith.constant 0.000000e+00 : f32
    %1560 = vector.broadcast %cst_278 : f32 to vector<7x28xf32>
    %1561 = arith.subf %1560, %1559 : vector<7x28xf32>
    %1562 = math.exp %1561 : vector<7x28xf32>
    %cst_279 = arith.constant 1.000000e+00 : f32
    %1563 = vector.broadcast %cst_279 : f32 to vector<7x28xf32>
    %1564 = arith.addf %1563, %1562 : vector<7x28xf32>
    %cst_280 = arith.constant 1.000000e+00 : f32
    %1565 = vector.broadcast %cst_280 : f32 to vector<7x28xf32>
    %1566 = arith.divf %1565, %1564 : vector<7x28xf32>
    %c1_281 = arith.constant 1 : index
    %c0_282 = arith.constant 0 : index
    %c0_283 = arith.constant 0 : index
    %c0_284 = arith.constant 0 : index
    %1567 = vector.load %arg5[%c1_281, %c0_282, %c0_283, %c0_284] : memref<2x4x7x28xf32, #tpu.memory_space<vmem>>, vector<1x1x7x28xf32>
    %1568 = vector.shape_cast %1567 : vector<1x1x7x28xf32> to vector<7x28xf32>
    %1569 = vector.shape_cast %1566 : vector<7x28xf32> to vector<1x1x7x28xf32>
    tpu.vector_store %arg5[%c1_281, %c0_282, %c0_283, %c0_284], %1569 {strides = array<i32>} : memref<2x4x7x28xf32, #tpu.memory_space<vmem>>, vector<1x1x7x28xf32>,
    %c1_285 = arith.constant 1 : index
    %1570 = memref.load %arg3[%c1_285] : memref<4xf32, #tpu.memory_space<smem>>
    %1571 = vector.broadcast %1570 : f32 to vector<7x28xf32>
    %c3_286 = arith.constant 3 : index
    %1572 = memref.load %arg2[%c3_286] : memref<24xf32, #tpu.memory_space<smem>>
    %1573 = vector.broadcast %1572 : f32 to vector<7x28xf32>
    %1574 = arith.mulf %1573, %1521 : vector<7x28xf32>
    %1575 = arith.addf %1571, %1574 : vector<7x28xf32>
    %c4_287 = arith.constant 4 : index
    %1576 = memref.load %arg2[%c4_287] : memref<24xf32, #tpu.memory_space<smem>>
    %1577 = vector.broadcast %1576 : f32 to vector<7x28xf32>
    %1578 = arith.mulf %1577, %1520 : vector<7x28xf32>
    %1579 = arith.addf %1575, %1578 : vector<7x28xf32>
    %c5_288 = arith.constant 5 : index
    %1580 = memref.load %arg2[%c5_288] : memref<24xf32, #tpu.memory_space<smem>>
    %1581 = vector.broadcast %1580 : f32 to vector<7x28xf32>
    %1582 = arith.mulf %1581, %1519 : vector<7x28xf32>
    %1583 = arith.addf %1579, %1582 : vector<7x28xf32>
    %c9_289 = arith.constant 9 : index
    %1584 = memref.load %arg2[%c9_289] : memref<24xf32, #tpu.memory_space<smem>>
    %1585 = vector.broadcast %1584 : f32 to vector<7x28xf32>
    %1586 = arith.mulf %1585, %1525 : vector<7x28xf32>
    %1587 = arith.addf %1583, %1586 : vector<7x28xf32>
    %c10_290 = arith.constant 10 : index
    %1588 = memref.load %arg2[%c10_290] : memref<24xf32, #tpu.memory_space<smem>>
    %1589 = vector.broadcast %1588 : f32 to vector<7x28xf32>
    %1590 = arith.mulf %1589, %1524 : vector<7x28xf32>
    %1591 = arith.addf %1587, %1590 : vector<7x28xf32>
    %c11_291 = arith.constant 11 : index
    %1592 = memref.load %arg2[%c11_291] : memref<24xf32, #tpu.memory_space<smem>>
    %1593 = vector.broadcast %1592 : f32 to vector<7x28xf32>
    %1594 = arith.mulf %1593, %1523 : vector<7x28xf32>
    %1595 = arith.addf %1591, %1594 : vector<7x28xf32>
    %cst_292 = arith.constant 0.000000e+00 : f32
    %1596 = vector.broadcast %cst_292 : f32 to vector<7x28xf32>
    %1597 = arith.subf %1596, %1595 : vector<7x28xf32>
    %1598 = math.exp %1597 : vector<7x28xf32>
    %cst_293 = arith.constant 1.000000e+00 : f32
    %1599 = vector.broadcast %cst_293 : f32 to vector<7x28xf32>
    %1600 = arith.addf %1599, %1598 : vector<7x28xf32>
    %cst_294 = arith.constant 1.000000e+00 : f32
    %1601 = vector.broadcast %cst_294 : f32 to vector<7x28xf32>
    %1602 = arith.divf %1601, %1600 : vector<7x28xf32>
    %c1_295 = arith.constant 1 : index
    %c1_296 = arith.constant 1 : index
    %c0_297 = arith.constant 0 : index
    %c0_298 = arith.constant 0 : index
    %1603 = vector.load %arg5[%c1_295, %c1_296, %c0_297, %c0_298] : memref<2x4x7x28xf32, #tpu.memory_space<vmem>>, vector<1x1x7x28xf32>
    %1604 = vector.shape_cast %1603 : vector<1x1x7x28xf32> to vector<7x28xf32>
    %1605 = vector.shape_cast %1602 : vector<7x28xf32> to vector<1x1x7x28xf32>
    tpu.vector_store %arg5[%c1_295, %c1_296, %c0_297, %c0_298], %1605 {strides = array<i32>} : memref<2x4x7x28xf32, #tpu.memory_space<vmem>>, vector<1x1x7x28xf32>,
    %c2_299 = arith.constant 2 : index
    %1606 = memref.load %arg3[%c2_299] : memref<4xf32, #tpu.memory_space<smem>>
    %1607 = vector.broadcast %1606 : f32 to vector<7x28xf32>
    %c12_300 = arith.constant 12 : index
    %1608 = memref.load %arg2[%c12_300] : memref<24xf32, #tpu.memory_space<smem>>
    %1609 = vector.broadcast %1608 : f32 to vector<7x28xf32>
    %1610 = arith.mulf %1609, %1529 : vector<7x28xf32>
    %1611 = arith.addf %1607, %1610 : vector<7x28xf32>
    %c13_301 = arith.constant 13 : index
    %1612 = memref.load %arg2[%c13_301] : memref<24xf32, #tpu.memory_space<smem>>
    %1613 = vector.broadcast %1612 : f32 to vector<7x28xf32>
    %1614 = arith.mulf %1613, %1528 : vector<7x28xf32>
    %1615 = arith.addf %1611, %1614 : vector<7x28xf32>
    %c14_302 = arith.constant 14 : index
    %1616 = memref.load %arg2[%c14_302] : memref<24xf32, #tpu.memory_space<smem>>
    %1617 = vector.broadcast %1616 : f32 to vector<7x28xf32>
    %1618 = arith.mulf %1617, %1527 : vector<7x28xf32>
    %1619 = arith.addf %1615, %1618 : vector<7x28xf32>
    %c18_303 = arith.constant 18 : index
    %1620 = memref.load %arg2[%c18_303] : memref<24xf32, #tpu.memory_space<smem>>
    %1621 = vector.broadcast %1620 : f32 to vector<7x28xf32>
    %1622 = arith.mulf %1621, %1533 : vector<7x28xf32>
    %1623 = arith.addf %1619, %1622 : vector<7x28xf32>
    %c19_304 = arith.constant 19 : index
    %1624 = memref.load %arg2[%c19_304] : memref<24xf32, #tpu.memory_space<smem>>
    %1625 = vector.broadcast %1624 : f32 to vector<7x28xf32>
    %1626 = arith.mulf %1625, %1532 : vector<7x28xf32>
    %1627 = arith.addf %1623, %1626 : vector<7x28xf32>
    %c20_305 = arith.constant 20 : index
    %1628 = memref.load %arg2[%c20_305] : memref<24xf32, #tpu.memory_space<smem>>
    %1629 = vector.broadcast %1628 : f32 to vector<7x28xf32>
    %1630 = arith.mulf %1629, %1531 : vector<7x28xf32>
    %1631 = arith.addf %1627, %1630 : vector<7x28xf32>
    %cst_306 = arith.constant 0.000000e+00 : f32
    %1632 = vector.broadcast %cst_306 : f32 to vector<7x28xf32>
    %1633 = arith.subf %1632, %1631 : vector<7x28xf32>
    %1634 = math.exp %1633 : vector<7x28xf32>
    %cst_307 = arith.constant 1.000000e+00 : f32
    %1635 = vector.broadcast %cst_307 : f32 to vector<7x28xf32>
    %1636 = arith.addf %1635, %1634 : vector<7x28xf32>
    %cst_308 = arith.constant 1.000000e+00 : f32
    %1637 = vector.broadcast %cst_308 : f32 to vector<7x28xf32>
    %1638 = arith.divf %1637, %1636 : vector<7x28xf32>
    %c1_309 = arith.constant 1 : index
    %c2_310 = arith.constant 2 : index
    %c0_311 = arith.constant 0 : index
    %c0_312 = arith.constant 0 : index
    %1639 = vector.load %arg5[%c1_309, %c2_310, %c0_311, %c0_312] : memref<2x4x7x28xf32, #tpu.memory_space<vmem>>, vector<1x1x7x28xf32>
    %1640 = vector.shape_cast %1639 : vector<1x1x7x28xf32> to vector<7x28xf32>
    %1641 = vector.shape_cast %1638 : vector<7x28xf32> to vector<1x1x7x28xf32>
    tpu.vector_store %arg5[%c1_309, %c2_310, %c0_311, %c0_312], %1641 {strides = array<i32>} : memref<2x4x7x28xf32, #tpu.memory_space<vmem>>, vector<1x1x7x28xf32>,
    %c3_313 = arith.constant 3 : index
    %1642 = memref.load %arg3[%c3_313] : memref<4xf32, #tpu.memory_space<smem>>
    %1643 = vector.broadcast %1642 : f32 to vector<7x28xf32>
    %c15_314 = arith.constant 15 : index
    %1644 = memref.load %arg2[%c15_314] : memref<24xf32, #tpu.memory_space<smem>>
    %1645 = vector.broadcast %1644 : f32 to vector<7x28xf32>
    %1646 = arith.mulf %1645, %1529 : vector<7x28xf32>
    %1647 = arith.addf %1643, %1646 : vector<7x28xf32>
    %c16_315 = arith.constant 16 : index
    %1648 = memref.load %arg2[%c16_315] : memref<24xf32, #tpu.memory_space<smem>>
    %1649 = vector.broadcast %1648 : f32 to vector<7x28xf32>
    %1650 = arith.mulf %1649, %1528 : vector<7x28xf32>
    %1651 = arith.addf %1647, %1650 : vector<7x28xf32>
    %c17_316 = arith.constant 17 : index
    %1652 = memref.load %arg2[%c17_316] : memref<24xf32, #tpu.memory_space<smem>>
    %1653 = vector.broadcast %1652 : f32 to vector<7x28xf32>
    %1654 = arith.mulf %1653, %1527 : vector<7x28xf32>
    %1655 = arith.addf %1651, %1654 : vector<7x28xf32>
    %c21_317 = arith.constant 21 : index
    %1656 = memref.load %arg2[%c21_317] : memref<24xf32, #tpu.memory_space<smem>>
    %1657 = vector.broadcast %1656 : f32 to vector<7x28xf32>
    %1658 = arith.mulf %1657, %1533 : vector<7x28xf32>
    %1659 = arith.addf %1655, %1658 : vector<7x28xf32>
    %c22_318 = arith.constant 22 : index
    %1660 = memref.load %arg2[%c22_318] : memref<24xf32, #tpu.memory_space<smem>>
    %1661 = vector.broadcast %1660 : f32 to vector<7x28xf32>
    %1662 = arith.mulf %1661, %1532 : vector<7x28xf32>
    %1663 = arith.addf %1659, %1662 : vector<7x28xf32>
    %c23_319 = arith.constant 23 : index
    %1664 = memref.load %arg2[%c23_319] : memref<24xf32, #tpu.memory_space<smem>>
    %1665 = vector.broadcast %1664 : f32 to vector<7x28xf32>
    %1666 = arith.mulf %1665, %1531 : vector<7x28xf32>
    %1667 = arith.addf %1663, %1666 : vector<7x28xf32>
    %cst_320 = arith.constant 0.000000e+00 : f32
    %1668 = vector.broadcast %cst_320 : f32 to vector<7x28xf32>
    %1669 = arith.subf %1668, %1667 : vector<7x28xf32>
    %1670 = math.exp %1669 : vector<7x28xf32>
    %cst_321 = arith.constant 1.000000e+00 : f32
    %1671 = vector.broadcast %cst_321 : f32 to vector<7x28xf32>
    %1672 = arith.addf %1671, %1670 : vector<7x28xf32>
    %cst_322 = arith.constant 1.000000e+00 : f32
    %1673 = vector.broadcast %cst_322 : f32 to vector<7x28xf32>
    %1674 = arith.divf %1673, %1672 : vector<7x28xf32>
    %c1_323 = arith.constant 1 : index
    %c3_324 = arith.constant 3 : index
    %c0_325 = arith.constant 0 : index
    %c0_326 = arith.constant 0 : index
    %1675 = vector.load %arg5[%c1_323, %c3_324, %c0_325, %c0_326] : memref<2x4x7x28xf32, #tpu.memory_space<vmem>>, vector<1x1x7x28xf32>
    %1676 = vector.shape_cast %1675 : vector<1x1x7x28xf32> to vector<7x28xf32>
    %1677 = vector.shape_cast %1674 : vector<7x28xf32> to vector<1x1x7x28xf32>
    tpu.vector_store %arg5[%c1_323, %c3_324, %c0_325, %c0_326], %1677 {strides = array<i32>} : memref<2x4x7x28xf32, #tpu.memory_space<vmem>>, vector<1x1x7x28xf32>,
    return
  }
}

</mosaic_0001>

<llo_original>
// kernel: tpu_custom_call.1
$region0: #{tpu_custom_call.1}
  #allocation0 [shape = 'u32[]', space=smem, size = 0x4, offset = 0x4, fixed_abs, tag = 'smem constant byte address 0x4 - core index']
  #allocation1 [shape = 'u32[144,128]{1,0:T(1,128)}', space=vmem, size = 0x12000, scoped, tag = 'internal scratch']
  %s0 = inlined_call_operand.vmem [shape: f32[144], index: 0, kind: input, shape index: {}]
  %s1 = inlined_call_operand.vmem [shape: f32[4], index: 1, kind: input, shape index: {}]
  %s2 = inlined_call_operand.vmem [shape: f32[24], index: 2, kind: input, shape index: {}]
  %s3 = inlined_call_operand.vmem [shape: f32[4], index: 3, kind: input, shape index: {}]
  %s4 = inlined_call_operand.vmem [shape: f32[2,4,13,32], index: 4, kind: input, shape index: {}]
  %s5 = inlined_call_operand.vmem [shape: f32[2,4,7,28], index: 5, kind: output, shape index: {}]
  %s6 = sld [smem:[#allocation0]]
  $region46: #{tpu_custom_call.1} parent=0
    _
  %s8 = ssub.s32 1, %s6
  %s9 = scalar_select 0, %s8, %s6
  $region1: #{tpu_custom_call.1} parent=0
    #allocation2 [shape = 'u8[1024]{0}', space=smem, size = 0x400, scoped, tag = 'input window, operand 0, single buffered']
    #allocation3 [shape = 's32[1]{0}', space=sflag, size = 0x4, scoped, tag = 'scoped memory for tpu_custom_call.1']
    #allocation4 [shape = 'u8[512]{0}', space=smem, size = 0x200, scoped, tag = 'input window, operand 1, single buffered']
    #allocation5 [shape = 's32[1]{0}', space=sflag, size = 0x4, scoped, tag = 'scoped memory for tpu_custom_call.1']
    #allocation6 [shape = 'u8[512]{0}', space=smem, size = 0x200, scoped, tag = 'input window, operand 2, single buffered']
    #allocation7 [shape = 'u8[512]{0}', space=smem, size = 0x200, scoped, tag = 'input window, operand 3, single buffered']
    #allocation8 [shape = 's32[1]{0}', space=sflag, size = 0x4, scoped, tag = 'scoped memory for tpu_custom_call.1']
    %10 = vsyncpa [#allocation3], 0
    %11 = vsyncpa [#allocation5], 0
    %12 = vsyncpa [#allocation8], 0
    // Predicated region
    $region2: #{tpu_custom_call.1} parent=1 // pred_check
      _
    $region3: #{tpu_custom_call.1} parent=1 // pred_check_branch
      %14 = sbr.rel (0) target = $region5
    $region4: #{tpu_custom_call.1} parent=1 // pred_region
      %s16 = ssub.s32 32, 32
      %17 = vsyncadd [#allocation3], %s16
      %s19 = sshll.u32 %s0, 4
      %s20 = int_to_ptr.vmem [resolvable:$true] %s19
      %22 = dma.vmem_to_smem %s20, 32, [#allocation2], [#allocation3]
    $region5: #{tpu_custom_call.1} parent=1 // pred_fallthru
      _
    // Predicated region
    $region6: #{tpu_custom_call.1} parent=1 // pred_check
      _
    $region7: #{tpu_custom_call.1} parent=1 // pred_check_branch
      %24 = sbr.rel (0) target = $region9
    $region8: #{tpu_custom_call.1} parent=1 // pred_region
      %s26 = ssub.s32 16, 16
      %27 = vsyncadd [#allocation5], %s26
      %s29 = sshll.u32 %s1, 4
      %s30 = int_to_ptr.vmem [resolvable:$true] %s29
      %32 = dma.vmem_to_smem %s30, 16, [#allocation4], [#allocation5]
    $region9: #{tpu_custom_call.1} parent=1 // pred_fallthru
      _
    // Predicated region
    $region10: #{tpu_custom_call.1} parent=1 // pred_check
      _
    $region11: #{tpu_custom_call.1} parent=1 // pred_check_branch
      %34 = sbr.rel (0) target = $region13
    $region12: #{tpu_custom_call.1} parent=1 // pred_region
      %s36 = ssub.s32 16, 16
      %37 = vsyncadd [#allocation5], %s36
      %s39 = sshll.u32 %s2, 4
      %s40 = int_to_ptr.vmem [resolvable:$true] %s39
      %42 = dma.vmem_to_smem %s40, 16, [#allocation6], [#allocation5]
    $region13: #{tpu_custom_call.1} parent=1 // pred_fallthru
      _
    // Predicated region
    $region14: #{tpu_custom_call.1} parent=1 // pred_check
      _
    $region15: #{tpu_custom_call.1} parent=1 // pred_check_branch
      %44 = sbr.rel (0) target = $region17
    $region16: #{tpu_custom_call.1} parent=1 // pred_region
      %s46 = ssub.s32 16, 16
      %47 = vsyncadd [#allocation8], %s46
      %s49 = sshll.u32 %s3, 4
      %s50 = int_to_ptr.vmem [resolvable:$true] %s49
      %52 = dma.vmem_to_smem %s50, 16, [#allocation7], [#allocation8]
    $region17: #{tpu_custom_call.1} parent=1 // pred_fallthru
      _
    // Predicated region
    $region18: #{tpu_custom_call.1} parent=1 // pred_check
      _
    $region19: #{tpu_custom_call.1} parent=1 // pred_check_branch
      %54 = sbr.rel (0) target = $region21
    $region20: #{tpu_custom_call.1} parent=1 // pred_region
      _
    $region21: #{tpu_custom_call.1} parent=1 // pred_fallthru
      _
    // Predicated region
    $region22: #{tpu_custom_call.1} parent=1 // pred_check
      _
    $region23: #{tpu_custom_call.1} parent=1 // pred_check_branch
      %56 = sbr.rel (0) target = $region25
    $region24: #{tpu_custom_call.1} parent=1 // pred_region
      %57 = dma.done [#allocation3], 32
    $region25: #{tpu_custom_call.1} parent=1 // pred_fallthru
      _
    // Predicated region
    $region26: #{tpu_custom_call.1} parent=1 // pred_check
      _
    $region27: #{tpu_custom_call.1} parent=1 // pred_check_branch
      %59 = sbr.rel (0) target = $region29
    $region28: #{tpu_custom_call.1} parent=1 // pred_region
      %60 = dma.done [#allocation5], 16
    $region29: #{tpu_custom_call.1} parent=1 // pred_fallthru
      _
    // Predicated region
    $region30: #{tpu_custom_call.1} parent=1 // pred_check
      _
    $region31: #{tpu_custom_call.1} parent=1 // pred_check_branch
      %62 = sbr.rel (0) target = $region33
    $region32: #{tpu_custom_call.1} parent=1 // pred_region
      %63 = dma.done [#allocation5], 16
    $region33: #{tpu_custom_call.1} parent=1 // pred_fallthru
      _
    // Predicated region
    $region34: #{tpu_custom_call.1} parent=1 // pred_check
      _
    $region35: #{tpu_custom_call.1} parent=1 // pred_check_branch
      %65 = sbr.rel (0) target = $region37
    $region36: #{tpu_custom_call.1} parent=1 // pred_region
      %66 = dma.done [#allocation8], 16
    $region37: #{tpu_custom_call.1} parent=1 // pred_fallthru
      _
    %67 = sfence
    %v68 = vlaneseq
    %v69 = vand.u32 %v68, 127
    %vm70 = vcmp.ge.s32.totalorder %v69, 1
    %vm71 = vcmp.lt.s32.totalorder %v69, 29
    %vm72 = vmand %vm70, %vm71
    %v73 = vld [vmem:[%s4] sm:$0xff]
    %v74 = vld [vmem:[%s4 + $0x8] sm:$0x1f]
    %s75 = scalar_lea.vmem %s4, 16
    %v76 = vld [vmem:[%s75] sm:$0xff]
    %v77 = vld [vmem:[%s75 + $0x8] sm:$0x1f]
    %s78 = scalar_lea.vmem %s4, 32
    %v79 = vld [vmem:[%s78] sm:$0xff]
    %v80 = vld [vmem:[%s78 + $0x8] sm:$0x1f]
    %s81 = scalar_lea.vmem %s4, 48
    %v82 = vld [vmem:[%s81] sm:$0xff]
    %v83 = vld [vmem:[%s81 + $0x8] sm:$0x1f]
    %s84 = sld [smem:[#allocation4]]
    %v85 = vstv %s84
    %s86 = sld [smem:[#allocation2]]
    %v87 = vstv %s86
    %v88 = vmul.f32 %v87, %v73
    %v89 = vmul.f32 %v87, %v74
    %v90 = vadd.f32 %v85, %v88
    %v91 = vadd.f32 %v85, %v89
    %s92 = sld [smem:[#allocation2 + $0x1]]
    %v93 = vstv %s92
    %v94 = vmul.f32 %v93, %v73
    %v95 = vmul.f32 %v93, %v74
    %98 = vrot.lane.b32.xlu0 %v94, 127
    %v99 = vpop.permute.xlu0 %98
    %100 = vrot.lane.b32.xlu0 %v95, 127
    %v101 = vpop.permute.xlu0 %100
    %v104 = vadd.f32 %v90, %v99
    %v105 = vadd.f32 %v91, %v101
    %s106 = sld [smem:[#allocation2 + $0x2]]
    %v107 = vstv %s106
    %v108 = vmul.f32 %v107, %v73
    %v109 = vmul.f32 %v107, %v74
    %112 = vrot.lane.b32.xlu0 %v108, 126
    %v113 = vpop.permute.xlu0 %112
    %114 = vrot.lane.b32.xlu0 %v109, 126
    %v115 = vpop.permute.xlu0 %114
    %v118 = vadd.f32 %v104, %v113
    %v119 = vadd.f32 %v105, %v115
    %s120 = sld [smem:[#allocation2 + $0x3]]
    %v121 = vstv %s120
    %v122 = vmul.f32 %v121, %v73
    %v123 = vmul.f32 %v121, %v74
    %vm126 = vcmask 1046528
    %v127 = vrot.slane %v122, 1
    %v128 = vrot.slane %v123, 1
    %v129 = vsel %vm126, %v127, %v128
    %v132 = vadd.f32 %v118, %v129
    %v133 = vadd.f32 %v119, %v128
    %s134 = sld [smem:[#allocation2 + $0x4]]
    %v135 = vstv %s134
    %v136 = vmul.f32 %v135, %v73
    %v137 = vmul.f32 %v135, %v74
    %v140 = vrot.slane %v136, 1
    %v141 = vrot.slane %v137, 1
    %v142 = vsel %vm126, %v140, %v141
    %143 = vrot.lane.b32.xlu0 %v142, 127
    %v144 = vpop.permute.xlu0 %143
    %145 = vrot.lane.b32.xlu0 %v141, 127
    %v146 = vpop.permute.xlu0 %145
    %v149 = vadd.f32 %v132, %v144
    %v150 = vadd.f32 %v133, %v146
    %s151 = sld [smem:[#allocation2 + $0x5]]
    %v152 = vstv %s151
    %v153 = vmul.f32 %v152, %v73
    %v154 = vmul.f32 %v152, %v74
    %v157 = vrot.slane %v153, 1
    %v158 = vrot.slane %v154, 1
    %v159 = vsel %vm126, %v157, %v158
    %160 = vrot.lane.b32.xlu0 %v159, 126
    %v161 = vpop.permute.xlu0 %160
    %162 = vrot.lane.b32.xlu0 %v158, 126
    %v163 = vpop.permute.xlu0 %162
    %v166 = vadd.f32 %v149, %v161
    %v167 = vadd.f32 %v150, %v163
    %s168 = sld [smem:[#allocation2 + $0x6]]
    %v169 = vstv %s168
    %v170 = vmul.f32 %v169, %v73
    %v171 = vmul.f32 %v169, %v74
    %vm174 = vcmask 1045504
    %v175 = vrot.slane %v170, 2
    %v176 = vrot.slane %v171, 2
    %v177 = vsel %vm174, %v175, %v176
    %v180 = vadd.f32 %v166, %v177
    %v181 = vadd.f32 %v167, %v176
    %s182 = sld [smem:[#allocation2 + $0x7]]
    %v183 = vstv %s182
    %v184 = vmul.f32 %v183, %v73
    %v185 = vmul.f32 %v183, %v74
    %v188 = vrot.slane %v184, 2
    %v189 = vrot.slane %v185, 2
    %v190 = vsel %vm174, %v188, %v189
    %191 = vrot.lane.b32.xlu0 %v190, 127
    %v192 = vpop.permute.xlu0 %191
    %193 = vrot.lane.b32.xlu0 %v189, 127
    %v194 = vpop.permute.xlu0 %193
    %v197 = vadd.f32 %v180, %v192
    %v198 = vadd.f32 %v181, %v194
    %s199 = sld [smem:[#allocation2 + $0x8]]
    %v200 = vstv %s199
    %v201 = vmul.f32 %v200, %v73
    %v202 = vmul.f32 %v200, %v74
    %v205 = vrot.slane %v201, 2
    %v206 = vrot.slane %v202, 2
    %v207 = vsel %vm174, %v205, %v206
    %208 = vrot.lane.b32.xlu0 %v207, 126
    %v209 = vpop.permute.xlu0 %208
    %210 = vrot.lane.b32.xlu0 %v206, 126
    %v211 = vpop.permute.xlu0 %210
    %v214 = vadd.f32 %v197, %v209
    %v215 = vadd.f32 %v198, %v211
    %s216 = sld [smem:[#allocation2 + $0x9]]
    %v217 = vstv %s216
    %v218 = vmul.f32 %v217, %v76
    %v219 = vmul.f32 %v217, %v77
    %v220 = vadd.f32 %v214, %v218
    %v221 = vadd.f32 %v215, %v219
    %s222 = sld [smem:[#allocation2 + $0xa]]
    %v223 = vstv %s222
    %v224 = vmul.f32 %v223, %v76
    %v225 = vmul.f32 %v223, %v77
    %228 = vrot.lane.b32.xlu0 %v224, 127
    %v229 = vpop.permute.xlu0 %228
    %230 = vrot.lane.b32.xlu0 %v225, 127
    %v231 = vpop.permute.xlu0 %230
    %v234 = vadd.f32 %v220, %v229
    %v235 = vadd.f32 %v221, %v231
    %s236 = sld [smem:[#allocation2 + $0xb]]
    %v237 = vstv %s236
    %v238 = vmul.f32 %v237, %v76
    %v239 = vmul.f32 %v237, %v77
    %242 = vrot.lane.b32.xlu0 %v238, 126
    %v243 = vpop.permute.xlu0 %242
    %244 = vrot.lane.b32.xlu0 %v239, 126
    %v245 = vpop.permute.xlu0 %244
    %v248 = vadd.f32 %v234, %v243
    %v249 = vadd.f32 %v235, %v245
    %s250 = sld [smem:[#allocation2 + $0xc]]
    %v251 = vstv %s250
    %v252 = vmul.f32 %v251, %v76
    %v253 = vmul.f32 %v251, %v77
    %v256 = vrot.slane %v252, 1
    %v257 = vrot.slane %v253, 1
    %v258 = vsel %vm126, %v256, %v257
    %v261 = vadd.f32 %v248, %v258
    %v262 = vadd.f32 %v249, %v257
    %s263 = sld [smem:[#allocation2 + $0xd]]
    %v264 = vstv %s263
    %v265 = vmul.f32 %v264, %v76
    %v266 = vmul.f32 %v264, %v77
    %v269 = vrot.slane %v265, 1
    %v270 = vrot.slane %v266, 1
    %v271 = vsel %vm126, %v269, %v270
    %272 = vrot.lane.b32.xlu0 %v271, 127
    %v273 = vpop.permute.xlu0 %272
    %274 = vrot.lane.b32.xlu0 %v270, 127
    %v275 = vpop.permute.xlu0 %274
    %v278 = vadd.f32 %v261, %v273
    %v279 = vadd.f32 %v262, %v275
    %s280 = sld [smem:[#allocation2 + $0xe]]
    %v281 = vstv %s280
    %v282 = vmul.f32 %v281, %v76
    %v283 = vmul.f32 %v281, %v77
    %v286 = vrot.slane %v282, 1
    %v287 = vrot.slane %v283, 1
    %v288 = vsel %vm126, %v286, %v287
    %289 = vrot.lane.b32.xlu0 %v288, 126
    %v290 = vpop.permute.xlu0 %289
    %291 = vrot.lane.b32.xlu0 %v287, 126
    %v292 = vpop.permute.xlu0 %291
    %v295 = vadd.f32 %v278, %v290
    %v296 = vadd.f32 %v279, %v292
    %s297 = sld [smem:[#allocation2 + $0xf]]
    %v298 = vstv %s297
    %v299 = vmul.f32 %v298, %v76
    %v300 = vmul.f32 %v298, %v77
    %v303 = vrot.slane %v299, 2
    %v304 = vrot.slane %v300, 2
    %v305 = vsel %vm174, %v303, %v304
    %v308 = vadd.f32 %v295, %v305
    %v309 = vadd.f32 %v296, %v304
    %s310 = sld [smem:[#allocation2 + $0x10]]
    %v311 = vstv %s310
    %v312 = vmul.f32 %v311, %v76
    %v313 = vmul.f32 %v311, %v77
    %v316 = vrot.slane %v312, 2
    %v317 = vrot.slane %v313, 2
    %v318 = vsel %vm174, %v316, %v317
    %319 = vrot.lane.b32.xlu0 %v318, 127
    %v320 = vpop.permute.xlu0 %319
    %321 = vrot.lane.b32.xlu0 %v317, 127
    %v322 = vpop.permute.xlu0 %321
    %v325 = vadd.f32 %v308, %v320
    %v326 = vadd.f32 %v309, %v322
    %s327 = sld [smem:[#allocation2 + $0x11]]
    %v328 = vstv %s327
    %v329 = vmul.f32 %v328, %v76
    %v330 = vmul.f32 %v328, %v77
    %v333 = vrot.slane %v329, 2
    %v334 = vrot.slane %v330, 2
    %v335 = vsel %vm174, %v333, %v334
    %336 = vrot.lane.b32.xlu0 %v335, 126
    %v337 = vpop.permute.xlu0 %336
    %338 = vrot.lane.b32.xlu0 %v334, 126
    %v339 = vpop.permute.xlu0 %338
    %v342 = vadd.f32 %v325, %v337
    %v343 = vadd.f32 %v326, %v339
    %s344 = sld [smem:[#allocation2 + $0x12]]
    %v345 = vstv %s344
    %v346 = vmul.f32 %v345, %v79
    %v347 = vmul.f32 %v345, %v80
    %v348 = vadd.f32 %v342, %v346
    %v349 = vadd.f32 %v343, %v347
    %s350 = sld [smem:[#allocation2 + $0x13]]
    %v351 = vstv %s350
    %v352 = vmul.f32 %v351, %v79
    %v353 = vmul.f32 %v351, %v80
    %356 = vrot.lane.b32.xlu0 %v352, 127
    %v357 = vpop.permute.xlu0 %356
    %358 = vrot.lane.b32.xlu0 %v353, 127
    %v359 = vpop.permute.xlu0 %358
    %v362 = vadd.f32 %v348, %v357
    %v363 = vadd.f32 %v349, %v359
    %s364 = sld [smem:[#allocation2 + $0x14]]
    %v365 = vstv %s364
    %v366 = vmul.f32 %v365, %v79
    %v367 = vmul.f32 %v365, %v80
    %370 = vrot.lane.b32.xlu0 %v366, 126
    %v371 = vpop.permute.xlu0 %370
    %372 = vrot.lane.b32.xlu0 %v367, 126
    %v373 = vpop.permute.xlu0 %372
    %v376 = vadd.f32 %v362, %v371
    %v377 = vadd.f32 %v363, %v373
    %s378 = sld [smem:[#allocation2 + $0x15]]
    %v379 = vstv %s378
    %v380 = vmul.f32 %v379, %v79
    %v381 = vmul.f32 %v379, %v80
    %v384 = vrot.slane %v380, 1
    %v385 = vrot.slane %v381, 1
    %v386 = vsel %vm126, %v384, %v385
    %v389 = vadd.f32 %v376, %v386
    %v390 = vadd.f32 %v377, %v385
    %s391 = sld [smem:[#allocation2 + $0x16]]
    %v392 = vstv %s391
    %v393 = vmul.f32 %v392, %v79
    %v394 = vmul.f32 %v392, %v80
    %v397 = vrot.slane %v393, 1
    %v398 = vrot.slane %v394, 1
    %v399 = vsel %vm126, %v397, %v398
    %400 = vrot.lane.b32.xlu0 %v399, 127
    %v401 = vpop.permute.xlu0 %400
    %402 = vrot.lane.b32.xlu0 %v398, 127
    %v403 = vpop.permute.xlu0 %402
    %v406 = vadd.f32 %v389, %v401
    %v407 = vadd.f32 %v390, %v403
    %s408 = sld [smem:[#allocation2 + $0x17]]
    %v409 = vstv %s408
    %v410 = vmul.f32 %v409, %v79
    %v411 = vmul.f32 %v409, %v80
    %v414 = vrot.slane %v410, 1
    %v415 = vrot.slane %v411, 1
    %v416 = vsel %vm126, %v414, %v415
    %417 = vrot.lane.b32.xlu0 %v416, 126
    %v418 = vpop.permute.xlu0 %417
    %419 = vrot.lane.b32.xlu0 %v415, 126
    %v420 = vpop.permute.xlu0 %419
    %v423 = vadd.f32 %v406, %v418
    %v424 = vadd.f32 %v407, %v420
    %s425 = sld [smem:[#allocation2 + $0x18]]
    %v426 = vstv %s425
    %v427 = vmul.f32 %v426, %v79
    %v428 = vmul.f32 %v426, %v80
    %v431 = vrot.slane %v427, 2
    %v432 = vrot.slane %v428, 2
    %v433 = vsel %vm174, %v431, %v432
    %v436 = vadd.f32 %v423, %v433
    %v437 = vadd.f32 %v424, %v432
    %s438 = sld [smem:[#allocation2 + $0x19]]
    %v439 = vstv %s438
    %v440 = vmul.f32 %v439, %v79
    %v441 = vmul.f32 %v439, %v80
    %v444 = vrot.slane %v440, 2
    %v445 = vrot.slane %v441, 2
    %v446 = vsel %vm174, %v444, %v445
    %447 = vrot.lane.b32.xlu0 %v446, 127
    %v448 = vpop.permute.xlu0 %447
    %449 = vrot.lane.b32.xlu0 %v445, 127
    %v450 = vpop.permute.xlu0 %449
    %v453 = vadd.f32 %v436, %v448
    %v454 = vadd.f32 %v437, %v450
    %s455 = sld [smem:[#allocation2 + $0x1a]]
    %v456 = vstv %s455
    %v457 = vmul.f32 %v456, %v79
    %v458 = vmul.f32 %v456, %v80
    %v461 = vrot.slane %v457, 2
    %v462 = vrot.slane %v458, 2
    %v463 = vsel %vm174, %v461, %v462
    %464 = vrot.lane.b32.xlu0 %v463, 126
    %v465 = vpop.permute.xlu0 %464
    %466 = vrot.lane.b32.xlu0 %v462, 126
    %v467 = vpop.permute.xlu0 %466
    %v470 = vadd.f32 %v453, %v465
    %v471 = vadd.f32 %v454, %v467
    %s472 = sld [smem:[#allocation2 + $0x1b]]
    %v473 = vstv %s472
    %v474 = vmul.f32 %v473, %v82
    %v475 = vmul.f32 %v473, %v83
    %v476 = vadd.f32 %v470, %v474
    %v477 = vadd.f32 %v471, %v475
    %s478 = sld [smem:[#allocation2 + $0x1c]]
    %v479 = vstv %s478
    %v480 = vmul.f32 %v479, %v82
    %v481 = vmul.f32 %v479, %v83
    %484 = vrot.lane.b32.xlu0 %v480, 127
    %v485 = vpop.permute.xlu0 %484
    %486 = vrot.lane.b32.xlu0 %v481, 127
    %v487 = vpop.permute.xlu0 %486
    %v490 = vadd.f32 %v476, %v485
    %v491 = vadd.f32 %v477, %v487
    %s492 = sld [smem:[#allocation2 + $0x1d]]
    %v493 = vstv %s492
    %v494 = vmul.f32 %v493, %v82
    %v495 = vmul.f32 %v493, %v83
    %498 = vrot.lane.b32.xlu0 %v494, 126
    %v499 = vpop.permute.xlu0 %498
    %500 = vrot.lane.b32.xlu0 %v495, 126
    %v501 = vpop.permute.xlu0 %500
    %v504 = vadd.f32 %v490, %v499
    %v505 = vadd.f32 %v491, %v501
    %s506 = sld [smem:[#allocation2 + $0x1e]]
    %v507 = vstv %s506
    %v508 = vmul.f32 %v507, %v82
    %v509 = vmul.f32 %v507, %v83
    %v512 = vrot.slane %v508, 1
    %v513 = vrot.slane %v509, 1
    %v514 = vsel %vm126, %v512, %v513
    %v517 = vadd.f32 %v504, %v514
    %v518 = vadd.f32 %v505, %v513
    %s519 = sld [smem:[#allocation2 + $0x1f]]
    %v520 = vstv %s519
    %v521 = vmul.f32 %v520, %v82
    %v522 = vmul.f32 %v520, %v83
    %v525 = vrot.slane %v521, 1
    %v526 = vrot.slane %v522, 1
    %v527 = vsel %vm126, %v525, %v526
    %528 = vrot.lane.b32.xlu0 %v527, 127
    %v529 = vpop.permute.xlu0 %528
    %530 = vrot.lane.b32.xlu0 %v526, 127
    %v531 = vpop.permute.xlu0 %530
    %v534 = vadd.f32 %v517, %v529
    %v535 = vadd.f32 %v518, %v531
    %s536 = sld [smem:[#allocation2 + $0x20]]
    %v537 = vstv %s536
    %v538 = vmul.f32 %v537, %v82
    %v539 = vmul.f32 %v537, %v83
    %v542 = vrot.slane %v538, 1
    %v543 = vrot.slane %v539, 1
    %v544 = vsel %vm126, %v542, %v543
    %545 = vrot.lane.b32.xlu0 %v544, 126
    %v546 = vpop.permute.xlu0 %545
    %547 = vrot.lane.b32.xlu0 %v543, 126
    %v548 = vpop.permute.xlu0 %547
    %v551 = vadd.f32 %v534, %v546
    %v552 = vadd.f32 %v535, %v548
    %s553 = sld [smem:[#allocation2 + $0x21]]
    %v554 = vstv %s553
    %v555 = vmul.f32 %v554, %v82
    %v556 = vmul.f32 %v554, %v83
    %v559 = vrot.slane %v555, 2
    %v560 = vrot.slane %v556, 2
    %v561 = vsel %vm174, %v559, %v560
    %v564 = vadd.f32 %v551, %v561
    %v565 = vadd.f32 %v552, %v560
    %s566 = sld [smem:[#allocation2 + $0x22]]
    %v567 = vstv %s566
    %v568 = vmul.f32 %v567, %v82
    %v569 = vmul.f32 %v567, %v83
    %v572 = vrot.slane %v568, 2
    %v573 = vrot.slane %v569, 2
    %v574 = vsel %vm174, %v572, %v573
    %575 = vrot.lane.b32.xlu0 %v574, 127
    %v576 = vpop.permute.xlu0 %575
    %577 = vrot.lane.b32.xlu0 %v573, 127
    %v578 = vpop.permute.xlu0 %577
    %v581 = vadd.f32 %v564, %v576
    %v582 = vadd.f32 %v565, %v578
    %s583 = sld [smem:[#allocation2 + $0x23]]
    %v584 = vstv %s583
    %v585 = vmul.f32 %v584, %v82
    %v586 = vmul.f32 %v584, %v83
    %v589 = vrot.slane %v585, 2
    %v590 = vrot.slane %v586, 2
    %v591 = vsel %vm174, %v589, %v590
    %592 = vrot.lane.b32.xlu0 %v591, 126
    %v593 = vpop.permute.xlu0 %592
    %594 = vrot.lane.b32.xlu0 %v590, 126
    %v595 = vpop.permute.xlu0 %594
    %v598 = vadd.f32 %v581, %v593
    %v599 = vadd.f32 %v582, %v595
    %v600 = vsub.f32 0.0, %v598
    %v601 = vsub.f32 0.0, %v599
    %v602 = vmul.f32 %v600, 1.442695
    %v603 = vpow.pop %v602
    %v604 = vmul.f32 %v601, 1.442695
    %v605 = vpow.pop %v604
    %v606 = vadd.f32 %v603, 1.0
    %v607 = vadd.f32 %v605, 1.0
    %v608 = vrcp.pop %v606
    %v609 = vmul.f32 1.0, %v608
    %v610 = vrcp.pop %v607
    %v611 = vmul.f32 1.0, %v610
    %v612 = vsel %vm72, %v609, 0.0
    %v613 = vsel %vm72, %v611, 0.0
    %s614 = sld [smem:[#allocation4 + $0x1]]
    %v615 = vstv %s614
    %s616 = sld [smem:[#allocation2 + $0x24]]
    %v617 = vstv %s616
    %v618 = vmul.f32 %v617, %v73
    %v619 = vmul.f32 %v617, %v74
    %v620 = vadd.f32 %v615, %v618
    %v621 = vadd.f32 %v615, %v619
    %s622 = sld [smem:[#allocation2 + $0x25]]
    %v623 = vstv %s622
    %v624 = vmul.f32 %v623, %v73
    %v625 = vmul.f32 %v623, %v74
    %628 = vrot.lane.b32.xlu0 %v624, 127
    %v629 = vpop.permute.xlu0 %628
    %630 = vrot.lane.b32.xlu0 %v625, 127
    %v631 = vpop.permute.xlu0 %630
    %v634 = vadd.f32 %v620, %v629
    %v635 = vadd.f32 %v621, %v631
    %s636 = sld [smem:[#allocation2 + $0x26]]
    %v637 = vstv %s636
    %v638 = vmul.f32 %v637, %v73
    %v639 = vmul.f32 %v637, %v74
    %642 = vrot.lane.b32.xlu0 %v638, 126
    %v643 = vpop.permute.xlu0 %642
    %644 = vrot.lane.b32.xlu0 %v639, 126
    %v645 = vpop.permute.xlu0 %644
    %v648 = vadd.f32 %v634, %v643
    %v649 = vadd.f32 %v635, %v645
    %s650 = sld [smem:[#allocation2 + $0x27]]
    %v651 = vstv %s650
    %v652 = vmul.f32 %v651, %v73
    %v653 = vmul.f32 %v651, %v74
    %v656 = vrot.slane %v652, 1
    %v657 = vrot.slane %v653, 1
    %v658 = vsel %vm126, %v656, %v657
    %v661 = vadd.f32 %v648, %v658
    %v662 = vadd.f32 %v649, %v657
    %s663 = sld [smem:[#allocation2 + $0x28]]
    %v664 = vstv %s663
    %v665 = vmul.f32 %v664, %v73
    %v666 = vmul.f32 %v664, %v74
    %v669 = vrot.slane %v665, 1
    %v670 = vrot.slane %v666, 1
    %v671 = vsel %vm126, %v669, %v670
    %672 = vrot.lane.b32.xlu0 %v671, 127
    %v673 = vpop.permute.xlu0 %672
    %674 = vrot.lane.b32.xlu0 %v670, 127
    %v675 = vpop.permute.xlu0 %674
    %v678 = vadd.f32 %v661, %v673
    %v679 = vadd.f32 %v662, %v675
    %s680 = sld [smem:[#allocation2 + $0x29]]
    %v681 = vstv %s680
    %v682 = vmul.f32 %v681, %v73
    %v683 = vmul.f32 %v681, %v74
    %v686 = vrot.slane %v682, 1
    %v687 = vrot.slane %v683, 1
    %v688 = vsel %vm126, %v686, %v687
    %689 = vrot.lane.b32.xlu0 %v688, 126
    %v690 = vpop.permute.xlu0 %689
    %691 = vrot.lane.b32.xlu0 %v687, 126
    %v692 = vpop.permute.xlu0 %691
    %v695 = vadd.f32 %v678, %v690
    %v696 = vadd.f32 %v679, %v692
    %s697 = sld [smem:[#allocation2 + $0x2a]]
    %v698 = vstv %s697
    %v699 = vmul.f32 %v698, %v73
    %v700 = vmul.f32 %v698, %v74
    %v703 = vrot.slane %v699, 2
    %v704 = vrot.slane %v700, 2
    %v705 = vsel %vm174, %v703, %v704
    %v708 = vadd.f32 %v695, %v705
    %v709 = vadd.f32 %v696, %v704
    %s710 = sld [smem:[#allocation2 + $0x2b]]
    %v711 = vstv %s710
    %v712 = vmul.f32 %v711, %v73
    %v713 = vmul.f32 %v711, %v74
    %v716 = vrot.slane %v712, 2
    %v717 = vrot.slane %v713, 2
    %v718 = vsel %vm174, %v716, %v717
    %719 = vrot.lane.b32.xlu0 %v718, 127
    %v720 = vpop.permute.xlu0 %719
    %721 = vrot.lane.b32.xlu0 %v717, 127
    %v722 = vpop.permute.xlu0 %721
    %v725 = vadd.f32 %v708, %v720
    %v726 = vadd.f32 %v709, %v722
    %s727 = sld [smem:[#allocation2 + $0x2c]]
    %v728 = vstv %s727
    %v729 = vmul.f32 %v728, %v73
    %v730 = vmul.f32 %v728, %v74
    %v733 = vrot.slane %v729, 2
    %v734 = vrot.slane %v730, 2
    %v735 = vsel %vm174, %v733, %v734
    %736 = vrot.lane.b32.xlu0 %v735, 126
    %v737 = vpop.permute.xlu0 %736
    %738 = vrot.lane.b32.xlu0 %v734, 126
    %v739 = vpop.permute.xlu0 %738
    %v742 = vadd.f32 %v725, %v737
    %v743 = vadd.f32 %v726, %v739
    %s744 = sld [smem:[#allocation2 + $0x2d]]
    %v745 = vstv %s744
    %v746 = vmul.f32 %v745, %v76
    %v747 = vmul.f32 %v745, %v77
    %v748 = vadd.f32 %v742, %v746
    %v749 = vadd.f32 %v743, %v747
    %s750 = sld [smem:[#allocation2 + $0x2e]]
    %v751 = vstv %s750
    %v752 = vmul.f32 %v751, %v76
    %v753 = vmul.f32 %v751, %v77
    %756 = vrot.lane.b32.xlu0 %v752, 127
    %v757 = vpop.permute.xlu0 %756
    %758 = vrot.lane.b32.xlu0 %v753, 127
    %v759 = vpop.permute.xlu0 %758
    %v762 = vadd.f32 %v748, %v757
    %v763 = vadd.f32 %v749, %v759
    %s764 = sld [smem:[#allocation2 + $0x2f]]
    %v765 = vstv %s764
    %v766 = vmul.f32 %v765, %v76
    %v767 = vmul.f32 %v765, %v77
    %770 = vrot.lane.b32.xlu0 %v766, 126
    %v771 = vpop.permute.xlu0 %770
    %772 = vrot.lane.b32.xlu0 %v767, 126
    %v773 = vpop.permute.xlu0 %772
    %v776 = vadd.f32 %v762, %v771
    %v777 = vadd.f32 %v763, %v773
    %s778 = sld [smem:[#allocation2 + $0x30]]
    %v779 = vstv %s778
    %v780 = vmul.f32 %v779, %v76
    %v781 = vmul.f32 %v779, %v77
    %v784 = vrot.slane %v780, 1
    %v785 = vrot.slane %v781, 1
    %v786 = vsel %vm126, %v784, %v785
    %v789 = vadd.f32 %v776, %v786
    %v790 = vadd.f32 %v777, %v785
    %s791 = sld [smem:[#allocation2 + $0x31]]
    %v792 = vstv %s791
    %v793 = vmul.f32 %v792, %v76
    %v794 = vmul.f32 %v792, %v77
    %v797 = vrot.slane %v793, 1
    %v798 = vrot.slane %v794, 1
    %v799 = vsel %vm126, %v797, %v798
    %800 = vrot.lane.b32.xlu0 %v799, 127
    %v801 = vpop.permute.xlu0 %800
    %802 = vrot.lane.b32.xlu0 %v798, 127
    %v803 = vpop.permute.xlu0 %802
    %v806 = vadd.f32 %v789, %v801
    %v807 = vadd.f32 %v790, %v803
    %s808 = sld [smem:[#allocation2 + $0x32]]
    %v809 = vstv %s808
    %v810 = vmul.f32 %v809, %v76
    %v811 = vmul.f32 %v809, %v77
    %v814 = vrot.slane %v810, 1
    %v815 = vrot.slane %v811, 1
    %v816 = vsel %vm126, %v814, %v815
    %817 = vrot.lane.b32.xlu0 %v816, 126
    %v818 = vpop.permute.xlu0 %817
    %819 = vrot.lane.b32.xlu0 %v815, 126
    %v820 = vpop.permute.xlu0 %819
    %v823 = vadd.f32 %v806, %v818
    %v824 = vadd.f32 %v807, %v820
    %s825 = sld [smem:[#allocation2 + $0x33]]
    %v826 = vstv %s825
    %v827 = vmul.f32 %v826, %v76
    %v828 = vmul.f32 %v826, %v77
    %v831 = vrot.slane %v827, 2
    %v832 = vrot.slane %v828, 2
    %v833 = vsel %vm174, %v831, %v832
    %v836 = vadd.f32 %v823, %v833
    %v837 = vadd.f32 %v824, %v832
    %s838 = sld [smem:[#allocation2 + $0x34]]
    %v839 = vstv %s838
    %v840 = vmul.f32 %v839, %v76
    %v841 = vmul.f32 %v839, %v77
    %v844 = vrot.slane %v840, 2
    %v845 = vrot.slane %v841, 2
    %v846 = vsel %vm174, %v844, %v845
    %847 = vrot.lane.b32.xlu0 %v846, 127
    %v848 = vpop.permute.xlu0 %847
    %849 = vrot.lane.b32.xlu0 %v845, 127
    %v850 = vpop.permute.xlu0 %849
    %v853 = vadd.f32 %v836, %v848
    %v854 = vadd.f32 %v837, %v850
    %s855 = sld [smem:[#allocation2 + $0x35]]
    %v856 = vstv %s855
    %v857 = vmul.f32 %v856, %v76
    %v858 = vmul.f32 %v856, %v77
    %v861 = vrot.slane %v857, 2
    %v862 = vrot.slane %v858, 2
    %v863 = vsel %vm174, %v861, %v862
    %864 = vrot.lane.b32.xlu0 %v863, 126
    %v865 = vpop.permute.xlu0 %864
    %866 = vrot.lane.b32.xlu0 %v862, 126
    %v867 = vpop.permute.xlu0 %866
    %v870 = vadd.f32 %v853, %v865
    %v871 = vadd.f32 %v854, %v867
    %s872 = sld [smem:[#allocation2 + $0x36]]
    %v873 = vstv %s872
    %v874 = vmul.f32 %v873, %v79
    %v875 = vmul.f32 %v873, %v80
    %v876 = vadd.f32 %v870, %v874
    %v877 = vadd.f32 %v871, %v875
    %s878 = sld [smem:[#allocation2 + $0x37]]
    %v879 = vstv %s878
    %v880 = vmul.f32 %v879, %v79
    %v881 = vmul.f32 %v879, %v80
    %884 = vrot.lane.b32.xlu0 %v880, 127
    %v885 = vpop.permute.xlu0 %884
    %886 = vrot.lane.b32.xlu0 %v881, 127
    %v887 = vpop.permute.xlu0 %886
    %v890 = vadd.f32 %v876, %v885
    %v891 = vadd.f32 %v877, %v887
    %s892 = sld [smem:[#allocation2 + $0x38]]
    %v893 = vstv %s892
    %v894 = vmul.f32 %v893, %v79
    %v895 = vmul.f32 %v893, %v80
    %898 = vrot.lane.b32.xlu0 %v894, 126
    %v899 = vpop.permute.xlu0 %898
    %900 = vrot.lane.b32.xlu0 %v895, 126
    %v901 = vpop.permute.xlu0 %900
    %v904 = vadd.f32 %v890, %v899
    %v905 = vadd.f32 %v891, %v901
    %s906 = sld [smem:[#allocation2 + $0x39]]
    %v907 = vstv %s906
    %v908 = vmul.f32 %v907, %v79
    %v909 = vmul.f32 %v907, %v80
    %v912 = vrot.slane %v908, 1
    %v913 = vrot.slane %v909, 1
    %v914 = vsel %vm126, %v912, %v913
    %v917 = vadd.f32 %v904, %v914
    %v918 = vadd.f32 %v905, %v913
    %s919 = sld [smem:[#allocation2 + $0x3a]]
    %v920 = vstv %s919
    %v921 = vmul.f32 %v920, %v79
    %v922 = vmul.f32 %v920, %v80
    %v925 = vrot.slane %v921, 1
    %v926 = vrot.slane %v922, 1
    %v927 = vsel %vm126, %v925, %v926
    %928 = vrot.lane.b32.xlu0 %v927, 127
    %v929 = vpop.permute.xlu0 %928
    %930 = vrot.lane.b32.xlu0 %v926, 127
    %v931 = vpop.permute.xlu0 %930
    %v934 = vadd.f32 %v917, %v929
    %v935 = vadd.f32 %v918, %v931
    %s936 = sld [smem:[#allocation2 + $0x3b]]
    %v937 = vstv %s936
    %v938 = vmul.f32 %v937, %v79
    %v939 = vmul.f32 %v937, %v80
    %v942 = vrot.slane %v938, 1
    %v943 = vrot.slane %v939, 1
    %v944 = vsel %vm126, %v942, %v943
    %945 = vrot.lane.b32.xlu0 %v944, 126
    %v946 = vpop.permute.xlu0 %945
    %947 = vrot.lane.b32.xlu0 %v943, 126
    %v948 = vpop.permute.xlu0 %947
    %v951 = vadd.f32 %v934, %v946
    %v952 = vadd.f32 %v935, %v948
    %s953 = sld [smem:[#allocation2 + $0x3c]]
    %v954 = vstv %s953
    %v955 = vmul.f32 %v954, %v79
    %v956 = vmul.f32 %v954, %v80
    %v959 = vrot.slane %v955, 2
    %v960 = vrot.slane %v956, 2
    %v961 = vsel %vm174, %v959, %v960
    %v964 = vadd.f32 %v951, %v961
    %v965 = vadd.f32 %v952, %v960
    %s966 = sld [smem:[#allocation2 + $0x3d]]
    %v967 = vstv %s966
    %v968 = vmul.f32 %v967, %v79
    %v969 = vmul.f32 %v967, %v80
    %v972 = vrot.slane %v968, 2
    %v973 = vrot.slane %v969, 2
    %v974 = vsel %vm174, %v972, %v973
    %975 = vrot.lane.b32.xlu0 %v974, 127
    %v976 = vpop.permute.xlu0 %975
    %977 = vrot.lane.b32.xlu0 %v973, 127
    %v978 = vpop.permute.xlu0 %977
    %v981 = vadd.f32 %v964, %v976
    %v982 = vadd.f32 %v965, %v978
    %s983 = sld [smem:[#allocation2 + $0x3e]]
    %v984 = vstv %s983
    %v985 = vmul.f32 %v984, %v79
    %v986 = vmul.f32 %v984, %v80
    %v989 = vrot.slane %v985, 2
    %v990 = vrot.slane %v986, 2
    %v991 = vsel %vm174, %v989, %v990
    %992 = vrot.lane.b32.xlu0 %v991, 126
    %v993 = vpop.permute.xlu0 %992
    %994 = vrot.lane.b32.xlu0 %v990, 126
    %v995 = vpop.permute.xlu0 %994
    %v998 = vadd.f32 %v981, %v993
    %v999 = vadd.f32 %v982, %v995
    %s1000 = sld [smem:[#allocation2 + $0x3f]]
    %v1001 = vstv %s1000
    %v1002 = vmul.f32 %v1001, %v82
    %v1003 = vmul.f32 %v1001, %v83
    %v1004 = vadd.f32 %v998, %v1002
    %v1005 = vadd.f32 %v999, %v1003
    %s1006 = sld [smem:[#allocation2 + $0x40]]
    %v1007 = vstv %s1006
    %v1008 = vmul.f32 %v1007, %v82
    %v1009 = vmul.f32 %v1007, %v83
    %1012 = vrot.lane.b32.xlu0 %v1008, 127
    %v1013 = vpop.permute.xlu0 %1012
    %1014 = vrot.lane.b32.xlu0 %v1009, 127
    %v1015 = vpop.permute.xlu0 %1014
    %v1018 = vadd.f32 %v1004, %v1013
    %v1019 = vadd.f32 %v1005, %v1015
    %s1020 = sld [smem:[#allocation2 + $0x41]]
    %v1021 = vstv %s1020
    %v1022 = vmul.f32 %v1021, %v82
    %v1023 = vmul.f32 %v1021, %v83
    %1026 = vrot.lane.b32.xlu0 %v1022, 126
    %v1027 = vpop.permute.xlu0 %1026
    %1028 = vrot.lane.b32.xlu0 %v1023, 126
    %v1029 = vpop.permute.xlu0 %1028
    %v1032 = vadd.f32 %v1018, %v1027
    %v1033 = vadd.f32 %v1019, %v1029
    %s1034 = sld [smem:[#allocation2 + $0x42]]
    %v1035 = vstv %s1034
    %v1036 = vmul.f32 %v1035, %v82
    %v1037 = vmul.f32 %v1035, %v83
    %v1040 = vrot.slane %v1036, 1
    %v1041 = vrot.slane %v1037, 1
    %v1042 = vsel %vm126, %v1040, %v1041
    %v1045 = vadd.f32 %v1032, %v1042
    %v1046 = vadd.f32 %v1033, %v1041
    %s1047 = sld [smem:[#allocation2 + $0x43]]
    %v1048 = vstv %s1047
    %v1049 = vmul.f32 %v1048, %v82
    %v1050 = vmul.f32 %v1048, %v83
    %v1053 = vrot.slane %v1049, 1
    %v1054 = vrot.slane %v1050, 1
    %v1055 = vsel %vm126, %v1053, %v1054
    %1056 = vrot.lane.b32.xlu0 %v1055, 127
    %v1057 = vpop.permute.xlu0 %1056
    %1058 = vrot.lane.b32.xlu0 %v1054, 127
    %v1059 = vpop.permute.xlu0 %1058
    %v1062 = vadd.f32 %v1045, %v1057
    %v1063 = vadd.f32 %v1046, %v1059
    %s1064 = sld [smem:[#allocation2 + $0x44]]
    %v1065 = vstv %s1064
    %v1066 = vmul.f32 %v1065, %v82
    %v1067 = vmul.f32 %v1065, %v83
    %v1070 = vrot.slane %v1066, 1
    %v1071 = vrot.slane %v1067, 1
    %v1072 = vsel %vm126, %v1070, %v1071
    %1073 = vrot.lane.b32.xlu0 %v1072, 126
    %v1074 = vpop.permute.xlu0 %1073
    %1075 = vrot.lane.b32.xlu0 %v1071, 126
    %v1076 = vpop.permute.xlu0 %1075
    %v1079 = vadd.f32 %v1062, %v1074
    %v1080 = vadd.f32 %v1063, %v1076
    %s1081 = sld [smem:[#allocation2 + $0x45]]
    %v1082 = vstv %s1081
    %v1083 = vmul.f32 %v1082, %v82
    %v1084 = vmul.f32 %v1082, %v83
    %v1087 = vrot.slane %v1083, 2
    %v1088 = vrot.slane %v1084, 2
    %v1089 = vsel %vm174, %v1087, %v1088
    %v1092 = vadd.f32 %v1079, %v1089
    %v1093 = vadd.f32 %v1080, %v1088
    %s1094 = sld [smem:[#allocation2 + $0x46]]
    %v1095 = vstv %s1094
    %v1096 = vmul.f32 %v1095, %v82
    %v1097 = vmul.f32 %v1095, %v83
    %v1100 = vrot.slane %v1096, 2
    %v1101 = vrot.slane %v1097, 2
    %v1102 = vsel %vm174, %v1100, %v1101
    %1103 = vrot.lane.b32.xlu0 %v1102, 127
    %v1104 = vpop.permute.xlu0 %1103
    %1105 = vrot.lane.b32.xlu0 %v1101, 127
    %v1106 = vpop.permute.xlu0 %1105
    %v1109 = vadd.f32 %v1092, %v1104
    %v1110 = vadd.f32 %v1093, %v1106
    %s1111 = sld [smem:[#allocation2 + $0x47]]
    %v1112 = vstv %s1111
    %v1113 = vmul.f32 %v1112, %v82
    %v1114 = vmul.f32 %v1112, %v83
    %v1117 = vrot.slane %v1113, 2
    %v1118 = vrot.slane %v1114, 2
    %v1119 = vsel %vm174, %v1117, %v1118
    %1120 = vrot.lane.b32.xlu0 %v1119, 126
    %v1121 = vpop.permute.xlu0 %1120
    %1122 = vrot.lane.b32.xlu0 %v1118, 126
    %v1123 = vpop.permute.xlu0 %1122
    %v1126 = vadd.f32 %v1109, %v1121
    %v1127 = vadd.f32 %v1110, %v1123
    %v1128 = vsub.f32 0.0, %v1126
    %v1129 = vsub.f32 0.0, %v1127
    %v1130 = vmul.f32 %v1128, 1.442695
    %v1131 = vpow.pop %v1130
    %v1132 = vmul.f32 %v1129, 1.442695
    %v1133 = vpow.pop %v1132
    %v1134 = vadd.f32 %v1131, 1.0
    %v1135 = vadd.f32 %v1133, 1.0
    %v1136 = vrcp.pop %v1134
    %v1137 = vmul.f32 1.0, %v1136
    %v1138 = vrcp.pop %v1135
    %v1139 = vmul.f32 1.0, %v1138
    %v1140 = vsel %vm72, %v1137, 0.0
    %v1141 = vsel %vm72, %v1139, 0.0
    %s1142 = sld [smem:[#allocation4 + $0x2]]
    %v1143 = vstv %s1142
    %s1144 = sld [smem:[#allocation2 + $0x48]]
    %v1145 = vstv %s1144
    %v1146 = vmul.f32 %v1145, %v73
    %v1147 = vmul.f32 %v1145, %v74
    %v1148 = vadd.f32 %v1143, %v1146
    %v1149 = vadd.f32 %v1143, %v1147
    %s1150 = sld [smem:[#allocation2 + $0x49]]
    %v1151 = vstv %s1150
    %v1152 = vmul.f32 %v1151, %v73
    %v1153 = vmul.f32 %v1151, %v74
    %1156 = vrot.lane.b32.xlu0 %v1152, 127
    %v1157 = vpop.permute.xlu0 %1156
    %1158 = vrot.lane.b32.xlu0 %v1153, 127
    %v1159 = vpop.permute.xlu0 %1158
    %v1162 = vadd.f32 %v1148, %v1157
    %v1163 = vadd.f32 %v1149, %v1159
    %s1164 = sld [smem:[#allocation2 + $0x4a]]
    %v1165 = vstv %s1164
    %v1166 = vmul.f32 %v1165, %v73
    %v1167 = vmul.f32 %v1165, %v74
    %1170 = vrot.lane.b32.xlu0 %v1166, 126
    %v1171 = vpop.permute.xlu0 %1170
    %1172 = vrot.lane.b32.xlu0 %v1167, 126
    %v1173 = vpop.permute.xlu0 %1172
    %v1176 = vadd.f32 %v1162, %v1171
    %v1177 = vadd.f32 %v1163, %v1173
    %s1178 = sld [smem:[#allocation2 + $0x4b]]
    %v1179 = vstv %s1178
    %v1180 = vmul.f32 %v1179, %v73
    %v1181 = vmul.f32 %v1179, %v74
    %v1184 = vrot.slane %v1180, 1
    %v1185 = vrot.slane %v1181, 1
    %v1186 = vsel %vm126, %v1184, %v1185
    %v1189 = vadd.f32 %v1176, %v1186
    %v1190 = vadd.f32 %v1177, %v1185
    %s1191 = sld [smem:[#allocation2 + $0x4c]]
    %v1192 = vstv %s1191
    %v1193 = vmul.f32 %v1192, %v73
    %v1194 = vmul.f32 %v1192, %v74
    %v1197 = vrot.slane %v1193, 1
    %v1198 = vrot.slane %v1194, 1
    %v1199 = vsel %vm126, %v1197, %v1198
    %1200 = vrot.lane.b32.xlu0 %v1199, 127
    %v1201 = vpop.permute.xlu0 %1200
    %1202 = vrot.lane.b32.xlu0 %v1198, 127
    %v1203 = vpop.permute.xlu0 %1202
    %v1206 = vadd.f32 %v1189, %v1201
    %v1207 = vadd.f32 %v1190, %v1203
    %s1208 = sld [smem:[#allocation2 + $0x4d]]
    %v1209 = vstv %s1208
    %v1210 = vmul.f32 %v1209, %v73
    %v1211 = vmul.f32 %v1209, %v74
    %v1214 = vrot.slane %v1210, 1
    %v1215 = vrot.slane %v1211, 1
    %v1216 = vsel %vm126, %v1214, %v1215
    %1217 = vrot.lane.b32.xlu0 %v1216, 126
    %v1218 = vpop.permute.xlu0 %1217
    %1219 = vrot.lane.b32.xlu0 %v1215, 126
    %v1220 = vpop.permute.xlu0 %1219
    %v1223 = vadd.f32 %v1206, %v1218
    %v1224 = vadd.f32 %v1207, %v1220
    %s1225 = sld [smem:[#allocation2 + $0x4e]]
    %v1226 = vstv %s1225
    %v1227 = vmul.f32 %v1226, %v73
    %v1228 = vmul.f32 %v1226, %v74
    %v1231 = vrot.slane %v1227, 2
    %v1232 = vrot.slane %v1228, 2
    %v1233 = vsel %vm174, %v1231, %v1232
    %v1236 = vadd.f32 %v1223, %v1233
    %v1237 = vadd.f32 %v1224, %v1232
    %s1238 = sld [smem:[#allocation2 + $0x4f]]
    %v1239 = vstv %s1238
    %v1240 = vmul.f32 %v1239, %v73
    %v1241 = vmul.f32 %v1239, %v74
    %v1244 = vrot.slane %v1240, 2
    %v1245 = vrot.slane %v1241, 2
    %v1246 = vsel %vm174, %v1244, %v1245
    %1247 = vrot.lane.b32.xlu0 %v1246, 127
    %v1248 = vpop.permute.xlu0 %1247
    %1249 = vrot.lane.b32.xlu0 %v1245, 127
    %v1250 = vpop.permute.xlu0 %1249
    %v1253 = vadd.f32 %v1236, %v1248
    %v1254 = vadd.f32 %v1237, %v1250
    %s1255 = sld [smem:[#allocation2 + $0x50]]
    %v1256 = vstv %s1255
    %v1257 = vmul.f32 %v1256, %v73
    %v1258 = vmul.f32 %v1256, %v74
    %v1261 = vrot.slane %v1257, 2
    %v1262 = vrot.slane %v1258, 2
    %v1263 = vsel %vm174, %v1261, %v1262
    %1264 = vrot.lane.b32.xlu0 %v1263, 126
    %v1265 = vpop.permute.xlu0 %1264
    %1266 = vrot.lane.b32.xlu0 %v1262, 126
    %v1267 = vpop.permute.xlu0 %1266
    %v1270 = vadd.f32 %v1253, %v1265
    %v1271 = vadd.f32 %v1254, %v1267
    %s1272 = sld [smem:[#allocation2 + $0x51]]
    %v1273 = vstv %s1272
    %v1274 = vmul.f32 %v1273, %v76
    %v1275 = vmul.f32 %v1273, %v77
    %v1276 = vadd.f32 %v1270, %v1274
    %v1277 = vadd.f32 %v1271, %v1275
    %s1278 = sld [smem:[#allocation2 + $0x52]]
    %v1279 = vstv %s1278
    %v1280 = vmul.f32 %v1279, %v76
    %v1281 = vmul.f32 %v1279, %v77
    %1284 = vrot.lane.b32.xlu0 %v1280, 127
    %v1285 = vpop.permute.xlu0 %1284
    %1286 = vrot.lane.b32.xlu0 %v1281, 127
    %v1287 = vpop.permute.xlu0 %1286
    %v1290 = vadd.f32 %v1276, %v1285
    %v1291 = vadd.f32 %v1277, %v1287
    %s1292 = sld [smem:[#allocation2 + $0x53]]
    %v1293 = vstv %s1292
    %v1294 = vmul.f32 %v1293, %v76
    %v1295 = vmul.f32 %v1293, %v77
    %1298 = vrot.lane.b32.xlu0 %v1294, 126
    %v1299 = vpop.permute.xlu0 %1298
    %1300 = vrot.lane.b32.xlu0 %v1295, 126
    %v1301 = vpop.permute.xlu0 %1300
    %v1304 = vadd.f32 %v1290, %v1299
    %v1305 = vadd.f32 %v1291, %v1301
    %s1306 = sld [smem:[#allocation2 + $0x54]]
    %v1307 = vstv %s1306
    %v1308 = vmul.f32 %v1307, %v76
    %v1309 = vmul.f32 %v1307, %v77
    %v1312 = vrot.slane %v1308, 1
    %v1313 = vrot.slane %v1309, 1
    %v1314 = vsel %vm126, %v1312, %v1313
    %v1317 = vadd.f32 %v1304, %v1314
    %v1318 = vadd.f32 %v1305, %v1313
    %s1319 = sld [smem:[#allocation2 + $0x55]]
    %v1320 = vstv %s1319
    %v1321 = vmul.f32 %v1320, %v76
    %v1322 = vmul.f32 %v1320, %v77
    %v1325 = vrot.slane %v1321, 1
    %v1326 = vrot.slane %v1322, 1
    %v1327 = vsel %vm126, %v1325, %v1326
    %1328 = vrot.lane.b32.xlu0 %v1327, 127
    %v1329 = vpop.permute.xlu0 %1328
    %1330 = vrot.lane.b32.xlu0 %v1326, 127
    %v1331 = vpop.permute.xlu0 %1330
    %v1334 = vadd.f32 %v1317, %v1329
    %v1335 = vadd.f32 %v1318, %v1331
    %s1336 = sld [smem:[#allocation2 + $0x56]]
    %v1337 = vstv %s1336
    %v1338 = vmul.f32 %v1337, %v76
    %v1339 = vmul.f32 %v1337, %v77
    %v1342 = vrot.slane %v1338, 1
    %v1343 = vrot.slane %v1339, 1
    %v1344 = vsel %vm126, %v1342, %v1343
    %1345 = vrot.lane.b32.xlu0 %v1344, 126
    %v1346 = vpop.permute.xlu0 %1345
    %1347 = vrot.lane.b32.xlu0 %v1343, 126
    %v1348 = vpop.permute.xlu0 %1347
    %v1351 = vadd.f32 %v1334, %v1346
    %v1352 = vadd.f32 %v1335, %v1348
    %s1353 = sld [smem:[#allocation2 + $0x57]]
    %v1354 = vstv %s1353
    %v1355 = vmul.f32 %v1354, %v76
    %v1356 = vmul.f32 %v1354, %v77
    %v1359 = vrot.slane %v1355, 2
    %v1360 = vrot.slane %v1356, 2
    %v1361 = vsel %vm174, %v1359, %v1360
    %v1364 = vadd.f32 %v1351, %v1361
    %v1365 = vadd.f32 %v1352, %v1360
    %s1366 = sld [smem:[#allocation2 + $0x58]]
    %v1367 = vstv %s1366
    %v1368 = vmul.f32 %v1367, %v76
    %v1369 = vmul.f32 %v1367, %v77
    %v1372 = vrot.slane %v1368, 2
    %v1373 = vrot.slane %v1369, 2
    %v1374 = vsel %vm174, %v1372, %v1373
    %1375 = vrot.lane.b32.xlu0 %v1374, 127
    %v1376 = vpop.permute.xlu0 %1375
    %1377 = vrot.lane.b32.xlu0 %v1373, 127
    %v1378 = vpop.permute.xlu0 %1377
    %v1381 = vadd.f32 %v1364, %v1376
    %v1382 = vadd.f32 %v1365, %v1378
    %s1383 = sld [smem:[#allocation2 + $0x59]]
    %v1384 = vstv %s1383
    %v1385 = vmul.f32 %v1384, %v76
    %v1386 = vmul.f32 %v1384, %v77
    %v1389 = vrot.slane %v1385, 2
    %v1390 = vrot.slane %v1386, 2
    %v1391 = vsel %vm174, %v1389, %v1390
    %1392 = vrot.lane.b32.xlu0 %v1391, 126
    %v1393 = vpop.permute.xlu0 %1392
    %1394 = vrot.lane.b32.xlu0 %v1390, 126
    %v1395 = vpop.permute.xlu0 %1394
    %v1398 = vadd.f32 %v1381, %v1393
    %v1399 = vadd.f32 %v1382, %v1395
    %s1400 = sld [smem:[#allocation2 + $0x5a]]
    %v1401 = vstv %s1400
    %v1402 = vmul.f32 %v1401, %v79
    %v1403 = vmul.f32 %v1401, %v80
    %v1404 = vadd.f32 %v1398, %v1402
    %v1405 = vadd.f32 %v1399, %v1403
    %s1406 = sld [smem:[#allocation2 + $0x5b]]
    %v1407 = vstv %s1406
    %v1408 = vmul.f32 %v1407, %v79
    %v1409 = vmul.f32 %v1407, %v80
    %1412 = vrot.lane.b32.xlu0 %v1408, 127
    %v1413 = vpop.permute.xlu0 %1412
    %1414 = vrot.lane.b32.xlu0 %v1409, 127
    %v1415 = vpop.permute.xlu0 %1414
    %v1418 = vadd.f32 %v1404, %v1413
    %v1419 = vadd.f32 %v1405, %v1415
    %s1420 = sld [smem:[#allocation2 + $0x5c]]
    %v1421 = vstv %s1420
    %v1422 = vmul.f32 %v1421, %v79
    %v1423 = vmul.f32 %v1421, %v80
    %1426 = vrot.lane.b32.xlu0 %v1422, 126
    %v1427 = vpop.permute.xlu0 %1426
    %1428 = vrot.lane.b32.xlu0 %v1423, 126
    %v1429 = vpop.permute.xlu0 %1428
    %v1432 = vadd.f32 %v1418, %v1427
    %v1433 = vadd.f32 %v1419, %v1429
    %s1434 = sld [smem:[#allocation2 + $0x5d]]
    %v1435 = vstv %s1434
    %v1436 = vmul.f32 %v1435, %v79
    %v1437 = vmul.f32 %v1435, %v80
    %v1440 = vrot.slane %v1436, 1
    %v1441 = vrot.slane %v1437, 1
    %v1442 = vsel %vm126, %v1440, %v1441
    %v1445 = vadd.f32 %v1432, %v1442
    %v1446 = vadd.f32 %v1433, %v1441
    %s1447 = sld [smem:[#allocation2 + $0x5e]]
    %v1448 = vstv %s1447
    %v1449 = vmul.f32 %v1448, %v79
    %v1450 = vmul.f32 %v1448, %v80
    %v1453 = vrot.slane %v1449, 1
    %v1454 = vrot.slane %v1450, 1
    %v1455 = vsel %vm126, %v1453, %v1454
    %1456 = vrot.lane.b32.xlu0 %v1455, 127
    %v1457 = vpop.permute.xlu0 %1456
    %1458 = vrot.lane.b32.xlu0 %v1454, 127
    %v1459 = vpop.permute.xlu0 %1458
    %v1462 = vadd.f32 %v1445, %v1457
    %v1463 = vadd.f32 %v1446, %v1459
    %s1464 = sld [smem:[#allocation2 + $0x5f]]
    %v1465 = vstv %s1464
    %v1466 = vmul.f32 %v1465, %v79
    %v1467 = vmul.f32 %v1465, %v80
    %v1470 = vrot.slane %v1466, 1
    %v1471 = vrot.slane %v1467, 1
    %v1472 = vsel %vm126, %v1470, %v1471
    %1473 = vrot.lane.b32.xlu0 %v1472, 126
    %v1474 = vpop.permute.xlu0 %1473
    %1475 = vrot.lane.b32.xlu0 %v1471, 126
    %v1476 = vpop.permute.xlu0 %1475
    %v1479 = vadd.f32 %v1462, %v1474
    %v1480 = vadd.f32 %v1463, %v1476
    %s1481 = sld [smem:[#allocation2 + $0x60]]
    %v1482 = vstv %s1481
    %v1483 = vmul.f32 %v1482, %v79
    %v1484 = vmul.f32 %v1482, %v80
    %v1487 = vrot.slane %v1483, 2
    %v1488 = vrot.slane %v1484, 2
    %v1489 = vsel %vm174, %v1487, %v1488
    %v1492 = vadd.f32 %v1479, %v1489
    %v1493 = vadd.f32 %v1480, %v1488
    %s1494 = sld [smem:[#allocation2 + $0x61]]
    %v1495 = vstv %s1494
    %v1496 = vmul.f32 %v1495, %v79
    %v1497 = vmul.f32 %v1495, %v80
    %v1500 = vrot.slane %v1496, 2
    %v1501 = vrot.slane %v1497, 2
    %v1502 = vsel %vm174, %v1500, %v1501
    %1503 = vrot.lane.b32.xlu0 %v1502, 127
    %v1504 = vpop.permute.xlu0 %1503
    %1505 = vrot.lane.b32.xlu0 %v1501, 127
    %v1506 = vpop.permute.xlu0 %1505
    %v1509 = vadd.f32 %v1492, %v1504
    %v1510 = vadd.f32 %v1493, %v1506
    %s1511 = sld [smem:[#allocation2 + $0x62]]
    %v1512 = vstv %s1511
    %v1513 = vmul.f32 %v1512, %v79
    %v1514 = vmul.f32 %v1512, %v80
    %v1517 = vrot.slane %v1513, 2
    %v1518 = vrot.slane %v1514, 2
    %v1519 = vsel %vm174, %v1517, %v1518
    %1520 = vrot.lane.b32.xlu0 %v1519, 126
    %v1521 = vpop.permute.xlu0 %1520
    %1522 = vrot.lane.b32.xlu0 %v1518, 126
    %v1523 = vpop.permute.xlu0 %1522
    %v1526 = vadd.f32 %v1509, %v1521
    %v1527 = vadd.f32 %v1510, %v1523
    %s1528 = sld [smem:[#allocation2 + $0x63]]
    %v1529 = vstv %s1528
    %v1530 = vmul.f32 %v1529, %v82
    %v1531 = vmul.f32 %v1529, %v83
    %v1532 = vadd.f32 %v1526, %v1530
    %v1533 = vadd.f32 %v1527, %v1531
    %s1534 = sld [smem:[#allocation2 + $0x64]]
    %v1535 = vstv %s1534
    %v1536 = vmul.f32 %v1535, %v82
    %v1537 = vmul.f32 %v1535, %v83
    %1540 = vrot.lane.b32.xlu0 %v1536, 127
    %v1541 = vpop.permute.xlu0 %1540
    %1542 = vrot.lane.b32.xlu0 %v1537, 127
    %v1543 = vpop.permute.xlu0 %1542
    %v1546 = vadd.f32 %v1532, %v1541
    %v1547 = vadd.f32 %v1533, %v1543
    %s1548 = sld [smem:[#allocation2 + $0x65]]
    %v1549 = vstv %s1548
    %v1550 = vmul.f32 %v1549, %v82
    %v1551 = vmul.f32 %v1549, %v83
    %1554 = vrot.lane.b32.xlu0 %v1550, 126
    %v1555 = vpop.permute.xlu0 %1554
    %1556 = vrot.lane.b32.xlu0 %v1551, 126
    %v1557 = vpop.permute.xlu0 %1556
    %v1560 = vadd.f32 %v1546, %v1555
    %v1561 = vadd.f32 %v1547, %v1557
    %s1562 = sld [smem:[#allocation2 + $0x66]]
    %v1563 = vstv %s1562
    %v1564 = vmul.f32 %v1563, %v82
    %v1565 = vmul.f32 %v1563, %v83
    %v1568 = vrot.slane %v1564, 1
    %v1569 = vrot.slane %v1565, 1
    %v1570 = vsel %vm126, %v1568, %v1569
    %v1573 = vadd.f32 %v1560, %v1570
    %v1574 = vadd.f32 %v1561, %v1569
    %s1575 = sld [smem:[#allocation2 + $0x67]]
    %v1576 = vstv %s1575
    %v1577 = vmul.f32 %v1576, %v82
    %v1578 = vmul.f32 %v1576, %v83
    %v1581 = vrot.slane %v1577, 1
    %v1582 = vrot.slane %v1578, 1
    %v1583 = vsel %vm126, %v1581, %v1582
    %1584 = vrot.lane.b32.xlu0 %v1583, 127
    %v1585 = vpop.permute.xlu0 %1584
    %1586 = vrot.lane.b32.xlu0 %v1582, 127
    %v1587 = vpop.permute.xlu0 %1586
    %v1590 = vadd.f32 %v1573, %v1585
    %v1591 = vadd.f32 %v1574, %v1587
    %s1592 = sld [smem:[#allocation2 + $0x68]]
    %v1593 = vstv %s1592
    %v1594 = vmul.f32 %v1593, %v82
    %v1595 = vmul.f32 %v1593, %v83
    %v1598 = vrot.slane %v1594, 1
    %v1599 = vrot.slane %v1595, 1
    %v1600 = vsel %vm126, %v1598, %v1599
    %1601 = vrot.lane.b32.xlu0 %v1600, 126
    %v1602 = vpop.permute.xlu0 %1601
    %1603 = vrot.lane.b32.xlu0 %v1599, 126
    %v1604 = vpop.permute.xlu0 %1603
    %v1607 = vadd.f32 %v1590, %v1602
    %v1608 = vadd.f32 %v1591, %v1604
    %s1609 = sld [smem:[#allocation2 + $0x69]]
    %v1610 = vstv %s1609
    %v1611 = vmul.f32 %v1610, %v82
    %v1612 = vmul.f32 %v1610, %v83
    %v1615 = vrot.slane %v1611, 2
    %v1616 = vrot.slane %v1612, 2
    %v1617 = vsel %vm174, %v1615, %v1616
    %v1620 = vadd.f32 %v1607, %v1617
    %v1621 = vadd.f32 %v1608, %v1616
    %s1622 = sld [smem:[#allocation2 + $0x6a]]
    %v1623 = vstv %s1622
    %v1624 = vmul.f32 %v1623, %v82
    %v1625 = vmul.f32 %v1623, %v83
    %v1628 = vrot.slane %v1624, 2
    %v1629 = vrot.slane %v1625, 2
    %v1630 = vsel %vm174, %v1628, %v1629
    %1631 = vrot.lane.b32.xlu0 %v1630, 127
    %v1632 = vpop.permute.xlu0 %1631
    %1633 = vrot.lane.b32.xlu0 %v1629, 127
    %v1634 = vpop.permute.xlu0 %1633
    %v1637 = vadd.f32 %v1620, %v1632
    %v1638 = vadd.f32 %v1621, %v1634
    %s1639 = sld [smem:[#allocation2 + $0x6b]]
    %v1640 = vstv %s1639
    %v1641 = vmul.f32 %v1640, %v82
    %v1642 = vmul.f32 %v1640, %v83
    %v1645 = vrot.slane %v1641, 2
    %v1646 = vrot.slane %v1642, 2
    %v1647 = vsel %vm174, %v1645, %v1646
    %1648 = vrot.lane.b32.xlu0 %v1647, 126
    %v1649 = vpop.permute.xlu0 %1648
    %1650 = vrot.lane.b32.xlu0 %v1646, 126
    %v1651 = vpop.permute.xlu0 %1650
    %v1654 = vadd.f32 %v1637, %v1649
    %v1655 = vadd.f32 %v1638, %v1651
    %v1656 = vsub.f32 0.0, %v1654
    %v1657 = vsub.f32 0.0, %v1655
    %v1658 = vmul.f32 %v1656, 1.442695
    %v1659 = vpow.pop %v1658
    %v1660 = vmul.f32 %v1657, 1.442695
    %v1661 = vpow.pop %v1660
    %v1662 = vadd.f32 %v1659, 1.0
    %v1663 = vadd.f32 %v1661, 1.0
    %v1664 = vrcp.pop %v1662
    %v1665 = vmul.f32 1.0, %v1664
    %v1666 = vrcp.pop %v1663
    %v1667 = vmul.f32 1.0, %v1666
    %v1668 = vsel %vm72, %v1665, 0.0
    %v1669 = vsel %vm72, %v1667, 0.0
    %s1670 = sld [smem:[#allocation4 + $0x3]]
    %v1671 = vstv %s1670
    %s1672 = sld [smem:[#allocation2 + $0x6c]]
    %v1673 = vstv %s1672
    %v1674 = vmul.f32 %v1673, %v73
    %v1675 = vmul.f32 %v1673, %v74
    %v1676 = vadd.f32 %v1671, %v1674
    %v1677 = vadd.f32 %v1671, %v1675
    %s1678 = sld [smem:[#allocation2 + $0x6d]]
    %v1679 = vstv %s1678
    %v1680 = vmul.f32 %v1679, %v73
    %v1681 = vmul.f32 %v1679, %v74
    %1684 = vrot.lane.b32.xlu0 %v1680, 127
    %v1685 = vpop.permute.xlu0 %1684
    %1686 = vrot.lane.b32.xlu0 %v1681, 127
    %v1687 = vpop.permute.xlu0 %1686
    %v1690 = vadd.f32 %v1676, %v1685
    %v1691 = vadd.f32 %v1677, %v1687
    %s1692 = sld [smem:[#allocation2 + $0x6e]]
    %v1693 = vstv %s1692
    %v1694 = vmul.f32 %v1693, %v73
    %v1695 = vmul.f32 %v1693, %v74
    %1698 = vrot.lane.b32.xlu0 %v1694, 126
    %v1699 = vpop.permute.xlu0 %1698
    %1700 = vrot.lane.b32.xlu0 %v1695, 126
    %v1701 = vpop.permute.xlu0 %1700
    %v1704 = vadd.f32 %v1690, %v1699
    %v1705 = vadd.f32 %v1691, %v1701
    %s1706 = sld [smem:[#allocation2 + $0x6f]]
    %v1707 = vstv %s1706
    %v1708 = vmul.f32 %v1707, %v73
    %v1709 = vmul.f32 %v1707, %v74
    %v1712 = vrot.slane %v1708, 1
    %v1713 = vrot.slane %v1709, 1
    %v1714 = vsel %vm126, %v1712, %v1713
    %v1717 = vadd.f32 %v1704, %v1714
    %v1718 = vadd.f32 %v1705, %v1713
    %s1719 = sld [smem:[#allocation2 + $0x70]]
    %v1720 = vstv %s1719
    %v1721 = vmul.f32 %v1720, %v73
    %v1722 = vmul.f32 %v1720, %v74
    %v1725 = vrot.slane %v1721, 1
    %v1726 = vrot.slane %v1722, 1
    %v1727 = vsel %vm126, %v1725, %v1726
    %1728 = vrot.lane.b32.xlu0 %v1727, 127
    %v1729 = vpop.permute.xlu0 %1728
    %1730 = vrot.lane.b32.xlu0 %v1726, 127
    %v1731 = vpop.permute.xlu0 %1730
    %v1734 = vadd.f32 %v1717, %v1729
    %v1735 = vadd.f32 %v1718, %v1731
    %s1736 = sld [smem:[#allocation2 + $0x71]]
    %v1737 = vstv %s1736
    %v1738 = vmul.f32 %v1737, %v73
    %v1739 = vmul.f32 %v1737, %v74
    %v1742 = vrot.slane %v1738, 1
    %v1743 = vrot.slane %v1739, 1
    %v1744 = vsel %vm126, %v1742, %v1743
    %1745 = vrot.lane.b32.xlu0 %v1744, 126
    %v1746 = vpop.permute.xlu0 %1745
    %1747 = vrot.lane.b32.xlu0 %v1743, 126
    %v1748 = vpop.permute.xlu0 %1747
    %v1751 = vadd.f32 %v1734, %v1746
    %v1752 = vadd.f32 %v1735, %v1748
    %s1753 = sld [smem:[#allocation2 + $0x72]]
    %v1754 = vstv %s1753
    %v1755 = vmul.f32 %v1754, %v73
    %v1756 = vmul.f32 %v1754, %v74
    %v1759 = vrot.slane %v1755, 2
    %v1760 = vrot.slane %v1756, 2
    %v1761 = vsel %vm174, %v1759, %v1760
    %v1764 = vadd.f32 %v1751, %v1761
    %v1765 = vadd.f32 %v1752, %v1760
    %s1766 = sld [smem:[#allocation2 + $0x73]]
    %v1767 = vstv %s1766
    %v1768 = vmul.f32 %v1767, %v73
    %v1769 = vmul.f32 %v1767, %v74
    %v1772 = vrot.slane %v1768, 2
    %v1773 = vrot.slane %v1769, 2
    %v1774 = vsel %vm174, %v1772, %v1773
    %1775 = vrot.lane.b32.xlu0 %v1774, 127
    %v1776 = vpop.permute.xlu0 %1775
    %1777 = vrot.lane.b32.xlu0 %v1773, 127
    %v1778 = vpop.permute.xlu0 %1777
    %v1781 = vadd.f32 %v1764, %v1776
    %v1782 = vadd.f32 %v1765, %v1778
    %s1783 = sld [smem:[#allocation2 + $0x74]]
    %v1784 = vstv %s1783
    %v1785 = vmul.f32 %v1784, %v73
    %v1786 = vmul.f32 %v1784, %v74
    %v1789 = vrot.slane %v1785, 2
    %v1790 = vrot.slane %v1786, 2
    %v1791 = vsel %vm174, %v1789, %v1790
    %1792 = vrot.lane.b32.xlu0 %v1791, 126
    %v1793 = vpop.permute.xlu0 %1792
    %1794 = vrot.lane.b32.xlu0 %v1790, 126
    %v1795 = vpop.permute.xlu0 %1794
    %v1798 = vadd.f32 %v1781, %v1793
    %v1799 = vadd.f32 %v1782, %v1795
    %s1800 = sld [smem:[#allocation2 + $0x75]]
    %v1801 = vstv %s1800
    %v1802 = vmul.f32 %v1801, %v76
    %v1803 = vmul.f32 %v1801, %v77
    %v1804 = vadd.f32 %v1798, %v1802
    %v1805 = vadd.f32 %v1799, %v1803
    %s1806 = sld [smem:[#allocation2 + $0x76]]
    %v1807 = vstv %s1806
    %v1808 = vmul.f32 %v1807, %v76
    %v1809 = vmul.f32 %v1807, %v77
    %1812 = vrot.lane.b32.xlu0 %v1808, 127
    %v1813 = vpop.permute.xlu0 %1812
    %1814 = vrot.lane.b32.xlu0 %v1809, 127
    %v1815 = vpop.permute.xlu0 %1814
    %v1818 = vadd.f32 %v1804, %v1813
    %v1819 = vadd.f32 %v1805, %v1815
    %s1820 = sld [smem:[#allocation2 + $0x77]]
    %v1821 = vstv %s1820
    %v1822 = vmul.f32 %v1821, %v76
    %v1823 = vmul.f32 %v1821, %v77
    %1826 = vrot.lane.b32.xlu0 %v1822, 126
    %v1827 = vpop.permute.xlu0 %1826
    %1828 = vrot.lane.b32.xlu0 %v1823, 126
    %v1829 = vpop.permute.xlu0 %1828
    %v1832 = vadd.f32 %v1818, %v1827
    %v1833 = vadd.f32 %v1819, %v1829
    %s1834 = sld [smem:[#allocation2 + $0x78]]
    %v1835 = vstv %s1834
    %v1836 = vmul.f32 %v1835, %v76
    %v1837 = vmul.f32 %v1835, %v77
    %v1840 = vrot.slane %v1836, 1
    %v1841 = vrot.slane %v1837, 1
    %v1842 = vsel %vm126, %v1840, %v1841
    %v1845 = vadd.f32 %v1832, %v1842
    %v1846 = vadd.f32 %v1833, %v1841
    %s1847 = sld [smem:[#allocation2 + $0x79]]
    %v1848 = vstv %s1847
    %v1849 = vmul.f32 %v1848, %v76
    %v1850 = vmul.f32 %v1848, %v77
    %v1853 = vrot.slane %v1849, 1
    %v1854 = vrot.slane %v1850, 1
    %v1855 = vsel %vm126, %v1853, %v1854
    %1856 = vrot.lane.b32.xlu0 %v1855, 127
    %v1857 = vpop.permute.xlu0 %1856
    %1858 = vrot.lane.b32.xlu0 %v1854, 127
    %v1859 = vpop.permute.xlu0 %1858
    %v1862 = vadd.f32 %v1845, %v1857
    %v1863 = vadd.f32 %v1846, %v1859
    %s1864 = sld [smem:[#allocation2 + $0x7a]]
    %v1865 = vstv %s1864
    %v1866 = vmul.f32 %v1865, %v76
    %v1867 = vmul.f32 %v1865, %v77
    %v1870 = vrot.slane %v1866, 1
    %v1871 = vrot.slane %v1867, 1
    %v1872 = vsel %vm126, %v1870, %v1871
    %1873 = vrot.lane.b32.xlu0 %v1872, 126
    %v1874 = vpop.permute.xlu0 %1873
    %1875 = vrot.lane.b32.xlu0 %v1871, 126
    %v1876 = vpop.permute.xlu0 %1875
    %v1879 = vadd.f32 %v1862, %v1874
    %v1880 = vadd.f32 %v1863, %v1876
    %s1881 = sld [smem:[#allocation2 + $0x7b]]
    %v1882 = vstv %s1881
    %v1883 = vmul.f32 %v1882, %v76
    %v1884 = vmul.f32 %v1882, %v77
    %v1887 = vrot.slane %v1883, 2
    %v1888 = vrot.slane %v1884, 2
    %v1889 = vsel %vm174, %v1887, %v1888
    %v1892 = vadd.f32 %v1879, %v1889
    %v1893 = vadd.f32 %v1880, %v1888
    %s1894 = sld [smem:[#allocation2 + $0x7c]]
    %v1895 = vstv %s1894
    %v1896 = vmul.f32 %v1895, %v76
    %v1897 = vmul.f32 %v1895, %v77
    %v1900 = vrot.slane %v1896, 2
    %v1901 = vrot.slane %v1897, 2
    %v1902 = vsel %vm174, %v1900, %v1901
    %1903 = vrot.lane.b32.xlu0 %v1902, 127
    %v1904 = vpop.permute.xlu0 %1903
    %1905 = vrot.lane.b32.xlu0 %v1901, 127
    %v1906 = vpop.permute.xlu0 %1905
    %v1909 = vadd.f32 %v1892, %v1904
    %v1910 = vadd.f32 %v1893, %v1906
    %s1911 = sld [smem:[#allocation2 + $0x7d]]
    %v1912 = vstv %s1911
    %v1913 = vmul.f32 %v1912, %v76
    %v1914 = vmul.f32 %v1912, %v77
    %v1917 = vrot.slane %v1913, 2
    %v1918 = vrot.slane %v1914, 2
    %v1919 = vsel %vm174, %v1917, %v1918
    %1920 = vrot.lane.b32.xlu0 %v1919, 126
    %v1921 = vpop.permute.xlu0 %1920
    %1922 = vrot.lane.b32.xlu0 %v1918, 126
    %v1923 = vpop.permute.xlu0 %1922
    %v1926 = vadd.f32 %v1909, %v1921
    %v1927 = vadd.f32 %v1910, %v1923
    %s1928 = sld [smem:[#allocation2 + $0x7e]]
    %v1929 = vstv %s1928
    %v1930 = vmul.f32 %v1929, %v79
    %v1931 = vmul.f32 %v1929, %v80
    %v1932 = vadd.f32 %v1926, %v1930
    %v1933 = vadd.f32 %v1927, %v1931
    %s1934 = sld [smem:[#allocation2 + $0x7f]]
    %v1935 = vstv %s1934
    %v1936 = vmul.f32 %v1935, %v79
    %v1937 = vmul.f32 %v1935, %v80
    %1940 = vrot.lane.b32.xlu0 %v1936, 127
    %v1941 = vpop.permute.xlu0 %1940
    %1942 = vrot.lane.b32.xlu0 %v1937, 127
    %v1943 = vpop.permute.xlu0 %1942
    %v1946 = vadd.f32 %v1932, %v1941
    %v1947 = vadd.f32 %v1933, %v1943
    %s1948 = sld [smem:[#allocation2 + $0x80]]
    %v1949 = vstv %s1948
    %v1950 = vmul.f32 %v1949, %v79
    %v1951 = vmul.f32 %v1949, %v80
    %1954 = vrot.lane.b32.xlu0 %v1950, 126
    %v1955 = vpop.permute.xlu0 %1954
    %1956 = vrot.lane.b32.xlu0 %v1951, 126
    %v1957 = vpop.permute.xlu0 %1956
    %v1960 = vadd.f32 %v1946, %v1955
    %v1961 = vadd.f32 %v1947, %v1957
    %s1962 = sld [smem:[#allocation2 + $0x81]]
    %v1963 = vstv %s1962
    %v1964 = vmul.f32 %v1963, %v79
    %v1965 = vmul.f32 %v1963, %v80
    %v1968 = vrot.slane %v1964, 1
    %v1969 = vrot.slane %v1965, 1
    %v1970 = vsel %vm126, %v1968, %v1969
    %v1973 = vadd.f32 %v1960, %v1970
    %v1974 = vadd.f32 %v1961, %v1969
    %s1975 = sld [smem:[#allocation2 + $0x82]]
    %v1976 = vstv %s1975
    %v1977 = vmul.f32 %v1976, %v79
    %v1978 = vmul.f32 %v1976, %v80
    %v1981 = vrot.slane %v1977, 1
    %v1982 = vrot.slane %v1978, 1
    %v1983 = vsel %vm126, %v1981, %v1982
    %1984 = vrot.lane.b32.xlu0 %v1983, 127
    %v1985 = vpop.permute.xlu0 %1984
    %1986 = vrot.lane.b32.xlu0 %v1982, 127
    %v1987 = vpop.permute.xlu0 %1986
    %v1990 = vadd.f32 %v1973, %v1985
    %v1991 = vadd.f32 %v1974, %v1987
    %s1992 = sld [smem:[#allocation2 + $0x83]]
    %v1993 = vstv %s1992
    %v1994 = vmul.f32 %v1993, %v79
    %v1995 = vmul.f32 %v1993, %v80
    %v1998 = vrot.slane %v1994, 1
    %v1999 = vrot.slane %v1995, 1
    %v2000 = vsel %vm126, %v1998, %v1999
    %2001 = vrot.lane.b32.xlu0 %v2000, 126
    %v2002 = vpop.permute.xlu0 %2001
    %2003 = vrot.lane.b32.xlu0 %v1999, 126
    %v2004 = vpop.permute.xlu0 %2003
    %v2007 = vadd.f32 %v1990, %v2002
    %v2008 = vadd.f32 %v1991, %v2004
    %s2009 = sld [smem:[#allocation2 + $0x84]]
    %v2010 = vstv %s2009
    %v2011 = vmul.f32 %v2010, %v79
    %v2012 = vmul.f32 %v2010, %v80
    %v2015 = vrot.slane %v2011, 2
    %v2016 = vrot.slane %v2012, 2
    %v2017 = vsel %vm174, %v2015, %v2016
    %v2020 = vadd.f32 %v2007, %v2017
    %v2021 = vadd.f32 %v2008, %v2016
    %s2022 = sld [smem:[#allocation2 + $0x85]]
    %v2023 = vstv %s2022
    %v2024 = vmul.f32 %v2023, %v79
    %v2025 = vmul.f32 %v2023, %v80
    %v2028 = vrot.slane %v2024, 2
    %v2029 = vrot.slane %v2025, 2
    %v2030 = vsel %vm174, %v2028, %v2029
    %2031 = vrot.lane.b32.xlu0 %v2030, 127
    %v2032 = vpop.permute.xlu0 %2031
    %2033 = vrot.lane.b32.xlu0 %v2029, 127
    %v2034 = vpop.permute.xlu0 %2033
    %v2037 = vadd.f32 %v2020, %v2032
    %v2038 = vadd.f32 %v2021, %v2034
    %s2039 = sld [smem:[#allocation2 + $0x86]]
    %v2040 = vstv %s2039
    %v2041 = vmul.f32 %v2040, %v79
    %v2042 = vmul.f32 %v2040, %v80
    %v2045 = vrot.slane %v2041, 2
    %v2046 = vrot.slane %v2042, 2
    %v2047 = vsel %vm174, %v2045, %v2046
    %2048 = vrot.lane.b32.xlu0 %v2047, 126
    %v2049 = vpop.permute.xlu0 %2048
    %2050 = vrot.lane.b32.xlu0 %v2046, 126
    %v2051 = vpop.permute.xlu0 %2050
    %v2054 = vadd.f32 %v2037, %v2049
    %v2055 = vadd.f32 %v2038, %v2051
    %s2056 = sld [smem:[#allocation2 + $0x87]]
    %v2057 = vstv %s2056
    %v2058 = vmul.f32 %v2057, %v82
    %v2059 = vmul.f32 %v2057, %v83
    %v2060 = vadd.f32 %v2054, %v2058
    %v2061 = vadd.f32 %v2055, %v2059
    %s2062 = sld [smem:[#allocation2 + $0x88]]
    %v2063 = vstv %s2062
    %v2064 = vmul.f32 %v2063, %v82
    %v2065 = vmul.f32 %v2063, %v83
    %2068 = vrot.lane.b32.xlu0 %v2064, 127
    %v2069 = vpop.permute.xlu0 %2068
    %2070 = vrot.lane.b32.xlu0 %v2065, 127
    %v2071 = vpop.permute.xlu0 %2070
    %v2074 = vadd.f32 %v2060, %v2069
    %v2075 = vadd.f32 %v2061, %v2071
    %s2076 = sld [smem:[#allocation2 + $0x89]]
    %v2077 = vstv %s2076
    %v2078 = vmul.f32 %v2077, %v82
    %v2079 = vmul.f32 %v2077, %v83
    %2082 = vrot.lane.b32.xlu0 %v2078, 126
    %v2083 = vpop.permute.xlu0 %2082
    %2084 = vrot.lane.b32.xlu0 %v2079, 126
    %v2085 = vpop.permute.xlu0 %2084
    %v2088 = vadd.f32 %v2074, %v2083
    %v2089 = vadd.f32 %v2075, %v2085
    %s2090 = sld [smem:[#allocation2 + $0x8a]]
    %v2091 = vstv %s2090
    %v2092 = vmul.f32 %v2091, %v82
    %v2093 = vmul.f32 %v2091, %v83
    %v2096 = vrot.slane %v2092, 1
    %v2097 = vrot.slane %v2093, 1
    %v2098 = vsel %vm126, %v2096, %v2097
    %v2101 = vadd.f32 %v2088, %v2098
    %v2102 = vadd.f32 %v2089, %v2097
    %s2103 = sld [smem:[#allocation2 + $0x8b]]
    %v2104 = vstv %s2103
    %v2105 = vmul.f32 %v2104, %v82
    %v2106 = vmul.f32 %v2104, %v83
    %v2109 = vrot.slane %v2105, 1
    %v2110 = vrot.slane %v2106, 1
    %v2111 = vsel %vm126, %v2109, %v2110
    %2112 = vrot.lane.b32.xlu0 %v2111, 127
    %v2113 = vpop.permute.xlu0 %2112
    %2114 = vrot.lane.b32.xlu0 %v2110, 127
    %v2115 = vpop.permute.xlu0 %2114
    %v2118 = vadd.f32 %v2101, %v2113
    %v2119 = vadd.f32 %v2102, %v2115
    %s2120 = sld [smem:[#allocation2 + $0x8c]]
    %v2121 = vstv %s2120
    %v2122 = vmul.f32 %v2121, %v82
    %v2123 = vmul.f32 %v2121, %v83
    %v2126 = vrot.slane %v2122, 1
    %v2127 = vrot.slane %v2123, 1
    %v2128 = vsel %vm126, %v2126, %v2127
    %2129 = vrot.lane.b32.xlu0 %v2128, 126
    %v2130 = vpop.permute.xlu0 %2129
    %2131 = vrot.lane.b32.xlu0 %v2127, 126
    %v2132 = vpop.permute.xlu0 %2131
    %v2135 = vadd.f32 %v2118, %v2130
    %v2136 = vadd.f32 %v2119, %v2132
    %s2137 = sld [smem:[#allocation2 + $0x8d]]
    %v2138 = vstv %s2137
    %v2139 = vmul.f32 %v2138, %v82
    %v2140 = vmul.f32 %v2138, %v83
    %v2143 = vrot.slane %v2139, 2
    %v2144 = vrot.slane %v2140, 2
    %v2145 = vsel %vm174, %v2143, %v2144
    %v2148 = vadd.f32 %v2135, %v2145
    %v2149 = vadd.f32 %v2136, %v2144
    %s2150 = sld [smem:[#allocation2 + $0x8e]]
    %v2151 = vstv %s2150
    %v2152 = vmul.f32 %v2151, %v82
    %v2153 = vmul.f32 %v2151, %v83
    %v2156 = vrot.slane %v2152, 2
    %v2157 = vrot.slane %v2153, 2
    %v2158 = vsel %vm174, %v2156, %v2157
    %2159 = vrot.lane.b32.xlu0 %v2158, 127
    %v2160 = vpop.permute.xlu0 %2159
    %2161 = vrot.lane.b32.xlu0 %v2157, 127
    %v2162 = vpop.permute.xlu0 %2161
    %v2165 = vadd.f32 %v2148, %v2160
    %v2166 = vadd.f32 %v2149, %v2162
    %s2167 = sld [smem:[#allocation2 + $0x8f]]
    %v2168 = vstv %s2167
    %v2169 = vmul.f32 %v2168, %v82
    %v2170 = vmul.f32 %v2168, %v83
    %v2173 = vrot.slane %v2169, 2
    %v2174 = vrot.slane %v2170, 2
    %v2175 = vsel %vm174, %v2173, %v2174
    %2176 = vrot.lane.b32.xlu0 %v2175, 126
    %v2177 = vpop.permute.xlu0 %2176
    %2178 = vrot.lane.b32.xlu0 %v2174, 126
    %v2179 = vpop.permute.xlu0 %2178
    %v2182 = vadd.f32 %v2165, %v2177
    %v2183 = vadd.f32 %v2166, %v2179
    %v2184 = vsub.f32 0.0, %v2182
    %v2185 = vsub.f32 0.0, %v2183
    %v2186 = vmul.f32 %v2184, 1.442695
    %v2187 = vpow.pop %v2186
    %v2188 = vmul.f32 %v2185, 1.442695
    %v2189 = vpow.pop %v2188
    %v2190 = vadd.f32 %v2187, 1.0
    %v2191 = vadd.f32 %v2189, 1.0
    %v2192 = vrcp.pop %v2190
    %v2193 = vmul.f32 1.0, %v2192
    %v2194 = vrcp.pop %v2191
    %v2195 = vmul.f32 1.0, %v2194
    %v2196 = vsel %vm72, %v2193, 0.0
    %v2197 = vsel %vm72, %v2195, 0.0
    %s2198 = sld [smem:[#allocation7]]
    %v2199 = vstv %s2198
    %s2200 = sld [smem:[#allocation6]]
    %v2201 = vstv %s2200
    %v2202 = vmul.f32 %v2201, %v612
    %v2203 = vmul.f32 %v2201, %v613
    %v2204 = vadd.f32 %v2199, %v2202
    %v2205 = vadd.f32 %v2199, %v2203
    %s2206 = sld [smem:[#allocation6 + $0x1]]
    %v2207 = vstv %s2206
    %v2208 = vmul.f32 %v2207, %v612
    %v2209 = vmul.f32 %v2207, %v613
    %2212 = vrot.lane.b32.xlu0 %v2208, 1
    %v2213 = vpop.permute.xlu0 %2212
    %2214 = vrot.lane.b32.xlu0 %v2209, 1
    %v2215 = vpop.permute.xlu0 %2214
    %v2218 = vadd.f32 %v2204, %v2213
    %v2219 = vadd.f32 %v2205, %v2215
    %s2220 = sld [smem:[#allocation6 + $0x2]]
    %v2221 = vstv %s2220
    %v2222 = vmul.f32 %v2221, %v612
    %v2223 = vmul.f32 %v2221, %v613
    %2226 = vrot.lane.b32.xlu0 %v2222, 2
    %v2227 = vpop.permute.xlu0 %2226
    %2228 = vrot.lane.b32.xlu0 %v2223, 2
    %v2229 = vpop.permute.xlu0 %2228
    %v2232 = vadd.f32 %v2218, %v2227
    %v2233 = vadd.f32 %v2219, %v2229
    %s2234 = sld [smem:[#allocation6 + $0x6]]
    %v2235 = vstv %s2234
    %v2236 = vmul.f32 %v2235, %v1140
    %v2237 = vmul.f32 %v2235, %v1141
    %v2238 = vadd.f32 %v2232, %v2236
    %v2239 = vadd.f32 %v2233, %v2237
    %s2240 = sld [smem:[#allocation6 + $0x7]]
    %v2241 = vstv %s2240
    %v2242 = vmul.f32 %v2241, %v1140
    %v2243 = vmul.f32 %v2241, %v1141
    %2246 = vrot.lane.b32.xlu0 %v2242, 1
    %v2247 = vpop.permute.xlu0 %2246
    %2248 = vrot.lane.b32.xlu0 %v2243, 1
    %v2249 = vpop.permute.xlu0 %2248
    %v2252 = vadd.f32 %v2238, %v2247
    %v2253 = vadd.f32 %v2239, %v2249
    %s2254 = sld [smem:[#allocation6 + $0x8]]
    %v2255 = vstv %s2254
    %v2256 = vmul.f32 %v2255, %v1140
    %v2257 = vmul.f32 %v2255, %v1141
    %2260 = vrot.lane.b32.xlu0 %v2256, 2
    %v2261 = vpop.permute.xlu0 %2260
    %2262 = vrot.lane.b32.xlu0 %v2257, 2
    %v2263 = vpop.permute.xlu0 %2262
    %v2266 = vadd.f32 %v2252, %v2261
    %v2267 = vadd.f32 %v2253, %v2263
    %v2268 = vsub.f32 0.0, %v2266
    %v2269 = vsub.f32 0.0, %v2267
    %v2270 = vmul.f32 %v2268, 1.442695
    %v2271 = vpow.pop %v2270
    %v2272 = vmul.f32 %v2269, 1.442695
    %v2273 = vpow.pop %v2272
    %v2274 = vadd.f32 %v2271, 1.0
    %v2275 = vadd.f32 %v2273, 1.0
    %v2276 = vrcp.pop %v2274
    %v2277 = vmul.f32 1.0, %v2276
    %v2278 = vrcp.pop %v2275
    %v2279 = vmul.f32 1.0, %v2278
    %2282 = vrot.lane.b32.xlu0 %v2277, 126
    %v2283 = vpop.permute.xlu0 %2282
    %2284 = vrot.lane.b32.xlu0 %v2279, 126
    %v2285 = vpop.permute.xlu0 %2284
    %vm2288 = vcmask 228354
    %2289 = vst.msk [vmem:[%s5 - $0x2] sm:$0xfc] %vm2288, %v2283
    %vm2290 = vcmask 221184
    %2291 = vst.msk [vmem:[%s5 + $0x6] sm:$0x1] %vm2290, %v2285
    %s2292 = sld [smem:[#allocation7 + $0x1]]
    %v2293 = vstv %s2292
    %s2294 = sld [smem:[#allocation6 + $0x3]]
    %v2295 = vstv %s2294
    %v2296 = vmul.f32 %v2295, %v612
    %v2297 = vmul.f32 %v2295, %v613
    %v2298 = vadd.f32 %v2293, %v2296
    %v2299 = vadd.f32 %v2293, %v2297
    %s2300 = sld [smem:[#allocation6 + $0x4]]
    %v2301 = vstv %s2300
    %v2302 = vmul.f32 %v2301, %v612
    %v2303 = vmul.f32 %v2301, %v613
    %2306 = vrot.lane.b32.xlu0 %v2302, 1
    %v2307 = vpop.permute.xlu0 %2306
    %2308 = vrot.lane.b32.xlu0 %v2303, 1
    %v2309 = vpop.permute.xlu0 %2308
    %v2312 = vadd.f32 %v2298, %v2307
    %v2313 = vadd.f32 %v2299, %v2309
    %s2314 = sld [smem:[#allocation6 + $0x5]]
    %v2315 = vstv %s2314
    %v2316 = vmul.f32 %v2315, %v612
    %v2317 = vmul.f32 %v2315, %v613
    %2320 = vrot.lane.b32.xlu0 %v2316, 2
    %v2321 = vpop.permute.xlu0 %2320
    %2322 = vrot.lane.b32.xlu0 %v2317, 2
    %v2323 = vpop.permute.xlu0 %2322
    %v2326 = vadd.f32 %v2312, %v2321
    %v2327 = vadd.f32 %v2313, %v2323
    %s2328 = sld [smem:[#allocation6 + $0x9]]
    %v2329 = vstv %s2328
    %v2330 = vmul.f32 %v2329, %v1140
    %v2331 = vmul.f32 %v2329, %v1141
    %v2332 = vadd.f32 %v2326, %v2330
    %v2333 = vadd.f32 %v2327, %v2331
    %s2334 = sld [smem:[#allocation6 + $0xa]]
    %v2335 = vstv %s2334
    %v2336 = vmul.f32 %v2335, %v1140
    %v2337 = vmul.f32 %v2335, %v1141
    %2340 = vrot.lane.b32.xlu0 %v2336, 1
    %v2341 = vpop.permute.xlu0 %2340
    %2342 = vrot.lane.b32.xlu0 %v2337, 1
    %v2343 = vpop.permute.xlu0 %2342
    %v2346 = vadd.f32 %v2332, %v2341
    %v2347 = vadd.f32 %v2333, %v2343
    %s2348 = sld [smem:[#allocation6 + $0xb]]
    %v2349 = vstv %s2348
    %v2350 = vmul.f32 %v2349, %v1140
    %v2351 = vmul.f32 %v2349, %v1141
    %2354 = vrot.lane.b32.xlu0 %v2350, 2
    %v2355 = vpop.permute.xlu0 %2354
    %2356 = vrot.lane.b32.xlu0 %v2351, 2
    %v2357 = vpop.permute.xlu0 %2356
    %v2360 = vadd.f32 %v2346, %v2355
    %v2361 = vadd.f32 %v2347, %v2357
    %v2362 = vsub.f32 0.0, %v2360
    %v2363 = vsub.f32 0.0, %v2361
    %v2364 = vmul.f32 %v2362, 1.442695
    %v2365 = vpow.pop %v2364
    %v2366 = vmul.f32 %v2363, 1.442695
    %v2367 = vpow.pop %v2366
    %v2368 = vadd.f32 %v2365, 1.0
    %v2369 = vadd.f32 %v2367, 1.0
    %v2370 = vrcp.pop %v2368
    %v2371 = vmul.f32 1.0, %v2370
    %v2372 = vrcp.pop %v2369
    %v2373 = vmul.f32 1.0, %v2372
    %2376 = vrot.lane.b32.xlu0 %v2371, 126
    %v2377 = vpop.permute.xlu0 %2376
    %2378 = vrot.lane.b32.xlu0 %v2373, 126
    %v2379 = vpop.permute.xlu0 %2378
    %s2382 = scalar_lea.vmem %s5, 8
    %2383 = vst.msk [vmem:[%s2382 - $0x2] sm:$0xfc] %vm2288, %v2377
    %2384 = vst.msk [vmem:[%s2382 + $0x6] sm:$0x1] %vm2290, %v2379
    %s2385 = sld [smem:[#allocation7 + $0x2]]
    %v2386 = vstv %s2385
    %s2387 = sld [smem:[#allocation6 + $0xc]]
    %v2388 = vstv %s2387
    %v2389 = vmul.f32 %v2388, %v1668
    %v2390 = vmul.f32 %v2388, %v1669
    %v2391 = vadd.f32 %v2386, %v2389
    %v2392 = vadd.f32 %v2386, %v2390
    %s2393 = sld [smem:[#allocation6 + $0xd]]
    %v2394 = vstv %s2393
    %v2395 = vmul.f32 %v2394, %v1668
    %v2396 = vmul.f32 %v2394, %v1669
    %2399 = vrot.lane.b32.xlu0 %v2395, 1
    %v2400 = vpop.permute.xlu0 %2399
    %2401 = vrot.lane.b32.xlu0 %v2396, 1
    %v2402 = vpop.permute.xlu0 %2401
    %v2405 = vadd.f32 %v2391, %v2400
    %v2406 = vadd.f32 %v2392, %v2402
    %s2407 = sld [smem:[#allocation6 + $0xe]]
    %v2408 = vstv %s2407
    %v2409 = vmul.f32 %v2408, %v1668
    %v2410 = vmul.f32 %v2408, %v1669
    %2413 = vrot.lane.b32.xlu0 %v2409, 2
    %v2414 = vpop.permute.xlu0 %2413
    %2415 = vrot.lane.b32.xlu0 %v2410, 2
    %v2416 = vpop.permute.xlu0 %2415
    %v2419 = vadd.f32 %v2405, %v2414
    %v2420 = vadd.f32 %v2406, %v2416
    %s2421 = sld [smem:[#allocation6 + $0x12]]
    %v2422 = vstv %s2421
    %v2423 = vmul.f32 %v2422, %v2196
    %v2424 = vmul.f32 %v2422, %v2197
    %v2425 = vadd.f32 %v2419, %v2423
    %v2426 = vadd.f32 %v2420, %v2424
    %s2427 = sld [smem:[#allocation6 + $0x13]]
    %v2428 = vstv %s2427
    %v2429 = vmul.f32 %v2428, %v2196
    %v2430 = vmul.f32 %v2428, %v2197
    %2433 = vrot.lane.b32.xlu0 %v2429, 1
    %v2434 = vpop.permute.xlu0 %2433
    %2435 = vrot.lane.b32.xlu0 %v2430, 1
    %v2436 = vpop.permute.xlu0 %2435
    %v2439 = vadd.f32 %v2425, %v2434
    %v2440 = vadd.f32 %v2426, %v2436
    %s2441 = sld [smem:[#allocation6 + $0x14]]
    %v2442 = vstv %s2441
    %v2443 = vmul.f32 %v2442, %v2196
    %v2444 = vmul.f32 %v2442, %v2197
    %2447 = vrot.lane.b32.xlu0 %v2443, 2
    %v2448 = vpop.permute.xlu0 %2447
    %2449 = vrot.lane.b32.xlu0 %v2444, 2
    %v2450 = vpop.permute.xlu0 %2449
    %v2453 = vadd.f32 %v2439, %v2448
    %v2454 = vadd.f32 %v2440, %v2450
    %v2455 = vsub.f32 0.0, %v2453
    %v2456 = vsub.f32 0.0, %v2454
    %v2457 = vmul.f32 %v2455, 1.442695
    %v2458 = vpow.pop %v2457
    %v2459 = vmul.f32 %v2456, 1.442695
    %v2460 = vpow.pop %v2459
    %v2461 = vadd.f32 %v2458, 1.0
    %v2462 = vadd.f32 %v2460, 1.0
    %v2463 = vrcp.pop %v2461
    %v2464 = vmul.f32 1.0, %v2463
    %v2465 = vrcp.pop %v2462
    %v2466 = vmul.f32 1.0, %v2465
    %2469 = vrot.lane.b32.xlu0 %v2464, 126
    %v2470 = vpop.permute.xlu0 %2469
    %2471 = vrot.lane.b32.xlu0 %v2466, 126
    %v2472 = vpop.permute.xlu0 %2471
    %s2475 = scalar_lea.vmem %s5, 16
    %2476 = vst.msk [vmem:[%s2475 - $0x2] sm:$0xfc] %vm2288, %v2470
    %2477 = vst.msk [vmem:[%s2475 + $0x6] sm:$0x1] %vm2290, %v2472
    %s2478 = sld [smem:[#allocation7 + $0x3]]
    %v2479 = vstv %s2478
    %s2480 = sld [smem:[#allocation6 + $0xf]]
    %v2481 = vstv %s2480
    %v2482 = vmul.f32 %v2481, %v1668
    %v2483 = vmul.f32 %v2481, %v1669
    %v2484 = vadd.f32 %v2479, %v2482
    %v2485 = vadd.f32 %v2479, %v2483
    %s2486 = sld [smem:[#allocation6 + $0x10]]
    %v2487 = vstv %s2486
    %v2488 = vmul.f32 %v2487, %v1668
    %v2489 = vmul.f32 %v2487, %v1669
    %2492 = vrot.lane.b32.xlu0 %v2488, 1
    %v2493 = vpop.permute.xlu0 %2492
    %2494 = vrot.lane.b32.xlu0 %v2489, 1
    %v2495 = vpop.permute.xlu0 %2494
    %v2498 = vadd.f32 %v2484, %v2493
    %v2499 = vadd.f32 %v2485, %v2495
    %s2500 = sld [smem:[#allocation6 + $0x11]]
    %v2501 = vstv %s2500
    %v2502 = vmul.f32 %v2501, %v1668
    %v2503 = vmul.f32 %v2501, %v1669
    %2506 = vrot.lane.b32.xlu0 %v2502, 2
    %v2507 = vpop.permute.xlu0 %2506
    %2508 = vrot.lane.b32.xlu0 %v2503, 2
    %v2509 = vpop.permute.xlu0 %2508
    %v2512 = vadd.f32 %v2498, %v2507
    %v2513 = vadd.f32 %v2499, %v2509
    %s2514 = sld [smem:[#allocation6 + $0x15]]
    %v2515 = vstv %s2514
    %v2516 = vmul.f32 %v2515, %v2196
    %v2517 = vmul.f32 %v2515, %v2197
    %v2518 = vadd.f32 %v2512, %v2516
    %v2519 = vadd.f32 %v2513, %v2517
    %s2520 = sld [smem:[#allocation6 + $0x16]]
    %v2521 = vstv %s2520
    %v2522 = vmul.f32 %v2521, %v2196
    %v2523 = vmul.f32 %v2521, %v2197
    %2526 = vrot.lane.b32.xlu0 %v2522, 1
    %v2527 = vpop.permute.xlu0 %2526
    %2528 = vrot.lane.b32.xlu0 %v2523, 1
    %v2529 = vpop.permute.xlu0 %2528
    %v2532 = vadd.f32 %v2518, %v2527
    %v2533 = vadd.f32 %v2519, %v2529
    %s2534 = sld [smem:[#allocation6 + $0x17]]
    %v2535 = vstv %s2534
    %v2536 = vmul.f32 %v2535, %v2196
    %v2537 = vmul.f32 %v2535, %v2197
    %2540 = vrot.lane.b32.xlu0 %v2536, 2
    %v2541 = vpop.permute.xlu0 %2540
    %2542 = vrot.lane.b32.xlu0 %v2537, 2
    %v2543 = vpop.permute.xlu0 %2542
    %v2546 = vadd.f32 %v2532, %v2541
    %v2547 = vadd.f32 %v2533, %v2543
    %v2548 = vsub.f32 0.0, %v2546
    %v2549 = vsub.f32 0.0, %v2547
    %v2550 = vmul.f32 %v2548, 1.442695
    %v2551 = vpow.pop %v2550
    %v2552 = vmul.f32 %v2549, 1.442695
    %v2553 = vpow.pop %v2552
    %v2554 = vadd.f32 %v2551, 1.0
    %v2555 = vadd.f32 %v2553, 1.0
    %v2556 = vrcp.pop %v2554
    %v2557 = vmul.f32 1.0, %v2556
    %v2558 = vrcp.pop %v2555
    %v2559 = vmul.f32 1.0, %v2558
    %2562 = vrot.lane.b32.xlu0 %v2557, 126
    %v2563 = vpop.permute.xlu0 %2562
    %2564 = vrot.lane.b32.xlu0 %v2559, 126
    %v2565 = vpop.permute.xlu0 %2564
    %s2568 = scalar_lea.vmem %s5, 24
    %2569 = vst.msk [vmem:[%s2568 - $0x2] sm:$0xfc] %vm2288, %v2563
    %2570 = vst.msk [vmem:[%s2568 + $0x6] sm:$0x1] %vm2290, %v2565
    %s2571 = scalar_lea.vmem %s4, 64
    %v2572 = vld [vmem:[%s2571] sm:$0xff]
    %v2573 = vld [vmem:[%s2571 + $0x8] sm:$0x1f]
    %s2574 = scalar_lea.vmem %s4, 80
    %v2575 = vld [vmem:[%s2574] sm:$0xff]
    %v2576 = vld [vmem:[%s2574 + $0x8] sm:$0x1f]
    %s2577 = scalar_lea.vmem %s4, 96
    %v2578 = vld [vmem:[%s2577] sm:$0xff]
    %v2579 = vld [vmem:[%s2577 + $0x8] sm:$0x1f]
    %s2580 = scalar_lea.vmem %s4, 112
    %v2581 = vld [vmem:[%s2580] sm:$0xff]
    %v2582 = vld [vmem:[%s2580 + $0x8] sm:$0x1f]
    %s2583 = sld [smem:[#allocation4]]
    %v2584 = vstv %s2583
    %s2585 = sld [smem:[#allocation2]]
    %v2586 = vstv %s2585
    %v2587 = vmul.f32 %v2586, %v2572
    %v2588 = vmul.f32 %v2586, %v2573
    %v2589 = vadd.f32 %v2584, %v2587
    %v2590 = vadd.f32 %v2584, %v2588
    %s2591 = sld [smem:[#allocation2 + $0x1]]
    %v2592 = vstv %s2591
    %v2593 = vmul.f32 %v2592, %v2572
    %v2594 = vmul.f32 %v2592, %v2573
    %2597 = vrot.lane.b32.xlu0 %v2593, 127
    %v2598 = vpop.permute.xlu0 %2597
    %2599 = vrot.lane.b32.xlu0 %v2594, 127
    %v2600 = vpop.permute.xlu0 %2599
    %v2603 = vadd.f32 %v2589, %v2598
    %v2604 = vadd.f32 %v2590, %v2600
    %s2605 = sld [smem:[#allocation2 + $0x2]]
    %v2606 = vstv %s2605
    %v2607 = vmul.f32 %v2606, %v2572
    %v2608 = vmul.f32 %v2606, %v2573
    %2611 = vrot.lane.b32.xlu0 %v2607, 126
    %v2612 = vpop.permute.xlu0 %2611
    %2613 = vrot.lane.b32.xlu0 %v2608, 126
    %v2614 = vpop.permute.xlu0 %2613
    %v2617 = vadd.f32 %v2603, %v2612
    %v2618 = vadd.f32 %v2604, %v2614
    %s2619 = sld [smem:[#allocation2 + $0x3]]
    %v2620 = vstv %s2619
    %v2621 = vmul.f32 %v2620, %v2572
    %v2622 = vmul.f32 %v2620, %v2573
    %v2625 = vrot.slane %v2621, 1
    %v2626 = vrot.slane %v2622, 1
    %v2627 = vsel %vm126, %v2625, %v2626
    %v2630 = vadd.f32 %v2617, %v2627
    %v2631 = vadd.f32 %v2618, %v2626
    %s2632 = sld [smem:[#allocation2 + $0x4]]
    %v2633 = vstv %s2632
    %v2634 = vmul.f32 %v2633, %v2572
    %v2635 = vmul.f32 %v2633, %v2573
    %v2638 = vrot.slane %v2634, 1
    %v2639 = vrot.slane %v2635, 1
    %v2640 = vsel %vm126, %v2638, %v2639
    %2641 = vrot.lane.b32.xlu0 %v2640, 127
    %v2642 = vpop.permute.xlu0 %2641
    %2643 = vrot.lane.b32.xlu0 %v2639, 127
    %v2644 = vpop.permute.xlu0 %2643
    %v2647 = vadd.f32 %v2630, %v2642
    %v2648 = vadd.f32 %v2631, %v2644
    %s2649 = sld [smem:[#allocation2 + $0x5]]
    %v2650 = vstv %s2649
    %v2651 = vmul.f32 %v2650, %v2572
    %v2652 = vmul.f32 %v2650, %v2573
    %v2655 = vrot.slane %v2651, 1
    %v2656 = vrot.slane %v2652, 1
    %v2657 = vsel %vm126, %v2655, %v2656
    %2658 = vrot.lane.b32.xlu0 %v2657, 126
    %v2659 = vpop.permute.xlu0 %2658
    %2660 = vrot.lane.b32.xlu0 %v2656, 126
    %v2661 = vpop.permute.xlu0 %2660
    %v2664 = vadd.f32 %v2647, %v2659
    %v2665 = vadd.f32 %v2648, %v2661
    %s2666 = sld [smem:[#allocation2 + $0x6]]
    %v2667 = vstv %s2666
    %v2668 = vmul.f32 %v2667, %v2572
    %v2669 = vmul.f32 %v2667, %v2573
    %v2672 = vrot.slane %v2668, 2
    %v2673 = vrot.slane %v2669, 2
    %v2674 = vsel %vm174, %v2672, %v2673
    %v2677 = vadd.f32 %v2664, %v2674
    %v2678 = vadd.f32 %v2665, %v2673
    %s2679 = sld [smem:[#allocation2 + $0x7]]
    %v2680 = vstv %s2679
    %v2681 = vmul.f32 %v2680, %v2572
    %v2682 = vmul.f32 %v2680, %v2573
    %v2685 = vrot.slane %v2681, 2
    %v2686 = vrot.slane %v2682, 2
    %v2687 = vsel %vm174, %v2685, %v2686
    %2688 = vrot.lane.b32.xlu0 %v2687, 127
    %v2689 = vpop.permute.xlu0 %2688
    %2690 = vrot.lane.b32.xlu0 %v2686, 127
    %v2691 = vpop.permute.xlu0 %2690
    %v2694 = vadd.f32 %v2677, %v2689
    %v2695 = vadd.f32 %v2678, %v2691
    %s2696 = sld [smem:[#allocation2 + $0x8]]
    %v2697 = vstv %s2696
    %v2698 = vmul.f32 %v2697, %v2572
    %v2699 = vmul.f32 %v2697, %v2573
    %v2702 = vrot.slane %v2698, 2
    %v2703 = vrot.slane %v2699, 2
    %v2704 = vsel %vm174, %v2702, %v2703
    %2705 = vrot.lane.b32.xlu0 %v2704, 126
    %v2706 = vpop.permute.xlu0 %2705
    %2707 = vrot.lane.b32.xlu0 %v2703, 126
    %v2708 = vpop.permute.xlu0 %2707
    %v2711 = vadd.f32 %v2694, %v2706
    %v2712 = vadd.f32 %v2695, %v2708
    %s2713 = sld [smem:[#allocation2 + $0x9]]
    %v2714 = vstv %s2713
    %v2715 = vmul.f32 %v2714, %v2575
    %v2716 = vmul.f32 %v2714, %v2576
    %v2717 = vadd.f32 %v2711, %v2715
    %v2718 = vadd.f32 %v2712, %v2716
    %s2719 = sld [smem:[#allocation2 + $0xa]]
    %v2720 = vstv %s2719
    %v2721 = vmul.f32 %v2720, %v2575
    %v2722 = vmul.f32 %v2720, %v2576
    %2725 = vrot.lane.b32.xlu0 %v2721, 127
    %v2726 = vpop.permute.xlu0 %2725
    %2727 = vrot.lane.b32.xlu0 %v2722, 127
    %v2728 = vpop.permute.xlu0 %2727
    %v2731 = vadd.f32 %v2717, %v2726
    %v2732 = vadd.f32 %v2718, %v2728
    %s2733 = sld [smem:[#allocation2 + $0xb]]
    %v2734 = vstv %s2733
    %v2735 = vmul.f32 %v2734, %v2575
    %v2736 = vmul.f32 %v2734, %v2576
    %2739 = vrot.lane.b32.xlu0 %v2735, 126
    %v2740 = vpop.permute.xlu0 %2739
    %2741 = vrot.lane.b32.xlu0 %v2736, 126
    %v2742 = vpop.permute.xlu0 %2741
    %v2745 = vadd.f32 %v2731, %v2740
    %v2746 = vadd.f32 %v2732, %v2742
    %s2747 = sld [smem:[#allocation2 + $0xc]]
    %v2748 = vstv %s2747
    %v2749 = vmul.f32 %v2748, %v2575
    %v2750 = vmul.f32 %v2748, %v2576
    %v2753 = vrot.slane %v2749, 1
    %v2754 = vrot.slane %v2750, 1
    %v2755 = vsel %vm126, %v2753, %v2754
    %v2758 = vadd.f32 %v2745, %v2755
    %v2759 = vadd.f32 %v2746, %v2754
    %s2760 = sld [smem:[#allocation2 + $0xd]]
    %v2761 = vstv %s2760
    %v2762 = vmul.f32 %v2761, %v2575
    %v2763 = vmul.f32 %v2761, %v2576
    %v2766 = vrot.slane %v2762, 1
    %v2767 = vrot.slane %v2763, 1
    %v2768 = vsel %vm126, %v2766, %v2767
    %2769 = vrot.lane.b32.xlu0 %v2768, 127
    %v2770 = vpop.permute.xlu0 %2769
    %2771 = vrot.lane.b32.xlu0 %v2767, 127
    %v2772 = vpop.permute.xlu0 %2771
    %v2775 = vadd.f32 %v2758, %v2770
    %v2776 = vadd.f32 %v2759, %v2772
    %s2777 = sld [smem:[#allocation2 + $0xe]]
    %v2778 = vstv %s2777
    %v2779 = vmul.f32 %v2778, %v2575
    %v2780 = vmul.f32 %v2778, %v2576
    %v2783 = vrot.slane %v2779, 1
    %v2784 = vrot.slane %v2780, 1
    %v2785 = vsel %vm126, %v2783, %v2784
    %2786 = vrot.lane.b32.xlu0 %v2785, 126
    %v2787 = vpop.permute.xlu0 %2786
    %2788 = vrot.lane.b32.xlu0 %v2784, 126
    %v2789 = vpop.permute.xlu0 %2788
    %v2792 = vadd.f32 %v2775, %v2787
    %v2793 = vadd.f32 %v2776, %v2789
    %s2794 = sld [smem:[#allocation2 + $0xf]]
    %v2795 = vstv %s2794
    %v2796 = vmul.f32 %v2795, %v2575
    %v2797 = vmul.f32 %v2795, %v2576
    %v2800 = vrot.slane %v2796, 2
    %v2801 = vrot.slane %v2797, 2
    %v2802 = vsel %vm174, %v2800, %v2801
    %v2805 = vadd.f32 %v2792, %v2802
    %v2806 = vadd.f32 %v2793, %v2801
    %s2807 = sld [smem:[#allocation2 + $0x10]]
    %v2808 = vstv %s2807
    %v2809 = vmul.f32 %v2808, %v2575
    %v2810 = vmul.f32 %v2808, %v2576
    %v2813 = vrot.slane %v2809, 2
    %v2814 = vrot.slane %v2810, 2
    %v2815 = vsel %vm174, %v2813, %v2814
    %2816 = vrot.lane.b32.xlu0 %v2815, 127
    %v2817 = vpop.permute.xlu0 %2816
    %2818 = vrot.lane.b32.xlu0 %v2814, 127
    %v2819 = vpop.permute.xlu0 %2818
    %v2822 = vadd.f32 %v2805, %v2817
    %v2823 = vadd.f32 %v2806, %v2819
    %s2824 = sld [smem:[#allocation2 + $0x11]]
    %v2825 = vstv %s2824
    %v2826 = vmul.f32 %v2825, %v2575
    %v2827 = vmul.f32 %v2825, %v2576
    %v2830 = vrot.slane %v2826, 2
    %v2831 = vrot.slane %v2827, 2
    %v2832 = vsel %vm174, %v2830, %v2831
    %2833 = vrot.lane.b32.xlu0 %v2832, 126
    %v2834 = vpop.permute.xlu0 %2833
    %2835 = vrot.lane.b32.xlu0 %v2831, 126
    %v2836 = vpop.permute.xlu0 %2835
    %v2839 = vadd.f32 %v2822, %v2834
    %v2840 = vadd.f32 %v2823, %v2836
    %s2841 = sld [smem:[#allocation2 + $0x12]]
    %v2842 = vstv %s2841
    %v2843 = vmul.f32 %v2842, %v2578
    %v2844 = vmul.f32 %v2842, %v2579
    %v2845 = vadd.f32 %v2839, %v2843
    %v2846 = vadd.f32 %v2840, %v2844
    %s2847 = sld [smem:[#allocation2 + $0x13]]
    %v2848 = vstv %s2847
    %v2849 = vmul.f32 %v2848, %v2578
    %v2850 = vmul.f32 %v2848, %v2579
    %2853 = vrot.lane.b32.xlu0 %v2849, 127
    %v2854 = vpop.permute.xlu0 %2853
    %2855 = vrot.lane.b32.xlu0 %v2850, 127
    %v2856 = vpop.permute.xlu0 %2855
    %v2859 = vadd.f32 %v2845, %v2854
    %v2860 = vadd.f32 %v2846, %v2856
    %s2861 = sld [smem:[#allocation2 + $0x14]]
    %v2862 = vstv %s2861
    %v2863 = vmul.f32 %v2862, %v2578
    %v2864 = vmul.f32 %v2862, %v2579
    %2867 = vrot.lane.b32.xlu0 %v2863, 126
    %v2868 = vpop.permute.xlu0 %2867
    %2869 = vrot.lane.b32.xlu0 %v2864, 126
    %v2870 = vpop.permute.xlu0 %2869
    %v2873 = vadd.f32 %v2859, %v2868
    %v2874 = vadd.f32 %v2860, %v2870
    %s2875 = sld [smem:[#allocation2 + $0x15]]
    %v2876 = vstv %s2875
    %v2877 = vmul.f32 %v2876, %v2578
    %v2878 = vmul.f32 %v2876, %v2579
    %v2881 = vrot.slane %v2877, 1
    %v2882 = vrot.slane %v2878, 1
    %v2883 = vsel %vm126, %v2881, %v2882
    %v2886 = vadd.f32 %v2873, %v2883
    %v2887 = vadd.f32 %v2874, %v2882
    %s2888 = sld [smem:[#allocation2 + $0x16]]
    %v2889 = vstv %s2888
    %v2890 = vmul.f32 %v2889, %v2578
    %v2891 = vmul.f32 %v2889, %v2579
    %v2894 = vrot.slane %v2890, 1
    %v2895 = vrot.slane %v2891, 1
    %v2896 = vsel %vm126, %v2894, %v2895
    %2897 = vrot.lane.b32.xlu0 %v2896, 127
    %v2898 = vpop.permute.xlu0 %2897
    %2899 = vrot.lane.b32.xlu0 %v2895, 127
    %v2900 = vpop.permute.xlu0 %2899
    %v2903 = vadd.f32 %v2886, %v2898
    %v2904 = vadd.f32 %v2887, %v2900
    %s2905 = sld [smem:[#allocation2 + $0x17]]
    %v2906 = vstv %s2905
    %v2907 = vmul.f32 %v2906, %v2578
    %v2908 = vmul.f32 %v2906, %v2579
    %v2911 = vrot.slane %v2907, 1
    %v2912 = vrot.slane %v2908, 1
    %v2913 = vsel %vm126, %v2911, %v2912
    %2914 = vrot.lane.b32.xlu0 %v2913, 126
    %v2915 = vpop.permute.xlu0 %2914
    %2916 = vrot.lane.b32.xlu0 %v2912, 126
    %v2917 = vpop.permute.xlu0 %2916
    %v2920 = vadd.f32 %v2903, %v2915
    %v2921 = vadd.f32 %v2904, %v2917
    %s2922 = sld [smem:[#allocation2 + $0x18]]
    %v2923 = vstv %s2922
    %v2924 = vmul.f32 %v2923, %v2578
    %v2925 = vmul.f32 %v2923, %v2579
    %v2928 = vrot.slane %v2924, 2
    %v2929 = vrot.slane %v2925, 2
    %v2930 = vsel %vm174, %v2928, %v2929
    %v2933 = vadd.f32 %v2920, %v2930
    %v2934 = vadd.f32 %v2921, %v2929
    %s2935 = sld [smem:[#allocation2 + $0x19]]
    %v2936 = vstv %s2935
    %v2937 = vmul.f32 %v2936, %v2578
    %v2938 = vmul.f32 %v2936, %v2579
    %v2941 = vrot.slane %v2937, 2
    %v2942 = vrot.slane %v2938, 2
    %v2943 = vsel %vm174, %v2941, %v2942
    %2944 = vrot.lane.b32.xlu0 %v2943, 127
    %v2945 = vpop.permute.xlu0 %2944
    %2946 = vrot.lane.b32.xlu0 %v2942, 127
    %v2947 = vpop.permute.xlu0 %2946
    %v2950 = vadd.f32 %v2933, %v2945
    %v2951 = vadd.f32 %v2934, %v2947
    %s2952 = sld [smem:[#allocation2 + $0x1a]]
    %v2953 = vstv %s2952
    %v2954 = vmul.f32 %v2953, %v2578
    %v2955 = vmul.f32 %v2953, %v2579
    %v2958 = vrot.slane %v2954, 2
    %v2959 = vrot.slane %v2955, 2
    %v2960 = vsel %vm174, %v2958, %v2959
    %2961 = vrot.lane.b32.xlu0 %v2960, 126
    %v2962 = vpop.permute.xlu0 %2961
    %2963 = vrot.lane.b32.xlu0 %v2959, 126
    %v2964 = vpop.permute.xlu0 %2963
    %v2967 = vadd.f32 %v2950, %v2962
    %v2968 = vadd.f32 %v2951, %v2964
    %s2969 = sld [smem:[#allocation2 + $0x1b]]
    %v2970 = vstv %s2969
    %v2971 = vmul.f32 %v2970, %v2581
    %v2972 = vmul.f32 %v2970, %v2582
    %v2973 = vadd.f32 %v2967, %v2971
    %v2974 = vadd.f32 %v2968, %v2972
    %s2975 = sld [smem:[#allocation2 + $0x1c]]
    %v2976 = vstv %s2975
    %v2977 = vmul.f32 %v2976, %v2581
    %v2978 = vmul.f32 %v2976, %v2582
    %2981 = vrot.lane.b32.xlu0 %v2977, 127
    %v2982 = vpop.permute.xlu0 %2981
    %2983 = vrot.lane.b32.xlu0 %v2978, 127
    %v2984 = vpop.permute.xlu0 %2983
    %v2987 = vadd.f32 %v2973, %v2982
    %v2988 = vadd.f32 %v2974, %v2984
    %s2989 = sld [smem:[#allocation2 + $0x1d]]
    %v2990 = vstv %s2989
    %v2991 = vmul.f32 %v2990, %v2581
    %v2992 = vmul.f32 %v2990, %v2582
    %2995 = vrot.lane.b32.xlu0 %v2991, 126
    %v2996 = vpop.permute.xlu0 %2995
    %2997 = vrot.lane.b32.xlu0 %v2992, 126
    %v2998 = vpop.permute.xlu0 %2997
    %v3001 = vadd.f32 %v2987, %v2996
    %v3002 = vadd.f32 %v2988, %v2998
    %s3003 = sld [smem:[#allocation2 + $0x1e]]
    %v3004 = vstv %s3003
    %v3005 = vmul.f32 %v3004, %v2581
    %v3006 = vmul.f32 %v3004, %v2582
    %v3009 = vrot.slane %v3005, 1
    %v3010 = vrot.slane %v3006, 1
    %v3011 = vsel %vm126, %v3009, %v3010
    %v3014 = vadd.f32 %v3001, %v3011
    %v3015 = vadd.f32 %v3002, %v3010
    %s3016 = sld [smem:[#allocation2 + $0x1f]]
    %v3017 = vstv %s3016
    %v3018 = vmul.f32 %v3017, %v2581
    %v3019 = vmul.f32 %v3017, %v2582
    %v3022 = vrot.slane %v3018, 1
    %v3023 = vrot.slane %v3019, 1
    %v3024 = vsel %vm126, %v3022, %v3023
    %3025 = vrot.lane.b32.xlu0 %v3024, 127
    %v3026 = vpop.permute.xlu0 %3025
    %3027 = vrot.lane.b32.xlu0 %v3023, 127
    %v3028 = vpop.permute.xlu0 %3027
    %v3031 = vadd.f32 %v3014, %v3026
    %v3032 = vadd.f32 %v3015, %v3028
    %s3033 = sld [smem:[#allocation2 + $0x20]]
    %v3034 = vstv %s3033
    %v3035 = vmul.f32 %v3034, %v2581
    %v3036 = vmul.f32 %v3034, %v2582
    %v3039 = vrot.slane %v3035, 1
    %v3040 = vrot.slane %v3036, 1
    %v3041 = vsel %vm126, %v3039, %v3040
    %3042 = vrot.lane.b32.xlu0 %v3041, 126
    %v3043 = vpop.permute.xlu0 %3042
    %3044 = vrot.lane.b32.xlu0 %v3040, 126
    %v3045 = vpop.permute.xlu0 %3044
    %v3048 = vadd.f32 %v3031, %v3043
    %v3049 = vadd.f32 %v3032, %v3045
    %s3050 = sld [smem:[#allocation2 + $0x21]]
    %v3051 = vstv %s3050
    %v3052 = vmul.f32 %v3051, %v2581
    %v3053 = vmul.f32 %v3051, %v2582
    %v3056 = vrot.slane %v3052, 2
    %v3057 = vrot.slane %v3053, 2
    %v3058 = vsel %vm174, %v3056, %v3057
    %v3061 = vadd.f32 %v3048, %v3058
    %v3062 = vadd.f32 %v3049, %v3057
    %s3063 = sld [smem:[#allocation2 + $0x22]]
    %v3064 = vstv %s3063
    %v3065 = vmul.f32 %v3064, %v2581
    %v3066 = vmul.f32 %v3064, %v2582
    %v3069 = vrot.slane %v3065, 2
    %v3070 = vrot.slane %v3066, 2
    %v3071 = vsel %vm174, %v3069, %v3070
    %3072 = vrot.lane.b32.xlu0 %v3071, 127
    %v3073 = vpop.permute.xlu0 %3072
    %3074 = vrot.lane.b32.xlu0 %v3070, 127
    %v3075 = vpop.permute.xlu0 %3074
    %v3078 = vadd.f32 %v3061, %v3073
    %v3079 = vadd.f32 %v3062, %v3075
    %s3080 = sld [smem:[#allocation2 + $0x23]]
    %v3081 = vstv %s3080
    %v3082 = vmul.f32 %v3081, %v2581
    %v3083 = vmul.f32 %v3081, %v2582
    %v3086 = vrot.slane %v3082, 2
    %v3087 = vrot.slane %v3083, 2
    %v3088 = vsel %vm174, %v3086, %v3087
    %3089 = vrot.lane.b32.xlu0 %v3088, 126
    %v3090 = vpop.permute.xlu0 %3089
    %3091 = vrot.lane.b32.xlu0 %v3087, 126
    %v3092 = vpop.permute.xlu0 %3091
    %v3095 = vadd.f32 %v3078, %v3090
    %v3096 = vadd.f32 %v3079, %v3092
    %v3097 = vsub.f32 0.0, %v3095
    %v3098 = vsub.f32 0.0, %v3096
    %v3099 = vmul.f32 %v3097, 1.442695
    %v3100 = vpow.pop %v3099
    %v3101 = vmul.f32 %v3098, 1.442695
    %v3102 = vpow.pop %v3101
    %v3103 = vadd.f32 %v3100, 1.0
    %v3104 = vadd.f32 %v3102, 1.0
    %v3105 = vrcp.pop %v3103
    %v3106 = vmul.f32 1.0, %v3105
    %v3107 = vrcp.pop %v3104
    %v3108 = vmul.f32 1.0, %v3107
    %v3109 = vsel %vm72, %v3106, 0.0
    %v3110 = vsel %vm72, %v3108, 0.0
    %s3111 = sld [smem:[#allocation4 + $0x1]]
    %v3112 = vstv %s3111
    %s3113 = sld [smem:[#allocation2 + $0x24]]
    %v3114 = vstv %s3113
    %v3115 = vmul.f32 %v3114, %v2572
    %v3116 = vmul.f32 %v3114, %v2573
    %v3117 = vadd.f32 %v3112, %v3115
    %v3118 = vadd.f32 %v3112, %v3116
    %s3119 = sld [smem:[#allocation2 + $0x25]]
    %v3120 = vstv %s3119
    %v3121 = vmul.f32 %v3120, %v2572
    %v3122 = vmul.f32 %v3120, %v2573
    %3125 = vrot.lane.b32.xlu0 %v3121, 127
    %v3126 = vpop.permute.xlu0 %3125
    %3127 = vrot.lane.b32.xlu0 %v3122, 127
    %v3128 = vpop.permute.xlu0 %3127
    %v3131 = vadd.f32 %v3117, %v3126
    %v3132 = vadd.f32 %v3118, %v3128
    %s3133 = sld [smem:[#allocation2 + $0x26]]
    %v3134 = vstv %s3133
    %v3135 = vmul.f32 %v3134, %v2572
    %v3136 = vmul.f32 %v3134, %v2573
    %3139 = vrot.lane.b32.xlu0 %v3135, 126
    %v3140 = vpop.permute.xlu0 %3139
    %3141 = vrot.lane.b32.xlu0 %v3136, 126
    %v3142 = vpop.permute.xlu0 %3141
    %v3145 = vadd.f32 %v3131, %v3140
    %v3146 = vadd.f32 %v3132, %v3142
    %s3147 = sld [smem:[#allocation2 + $0x27]]
    %v3148 = vstv %s3147
    %v3149 = vmul.f32 %v3148, %v2572
    %v3150 = vmul.f32 %v3148, %v2573
    %v3153 = vrot.slane %v3149, 1
    %v3154 = vrot.slane %v3150, 1
    %v3155 = vsel %vm126, %v3153, %v3154
    %v3158 = vadd.f32 %v3145, %v3155
    %v3159 = vadd.f32 %v3146, %v3154
    %s3160 = sld [smem:[#allocation2 + $0x28]]
    %v3161 = vstv %s3160
    %v3162 = vmul.f32 %v3161, %v2572
    %v3163 = vmul.f32 %v3161, %v2573
    %v3166 = vrot.slane %v3162, 1
    %v3167 = vrot.slane %v3163, 1
    %v3168 = vsel %vm126, %v3166, %v3167
    %3169 = vrot.lane.b32.xlu0 %v3168, 127
    %v3170 = vpop.permute.xlu0 %3169
    %3171 = vrot.lane.b32.xlu0 %v3167, 127
    %v3172 = vpop.permute.xlu0 %3171
    %v3175 = vadd.f32 %v3158, %v3170
    %v3176 = vadd.f32 %v3159, %v3172
    %s3177 = sld [smem:[#allocation2 + $0x29]]
    %v3178 = vstv %s3177
    %v3179 = vmul.f32 %v3178, %v2572
    %v3180 = vmul.f32 %v3178, %v2573
    %v3183 = vrot.slane %v3179, 1
    %v3184 = vrot.slane %v3180, 1
    %v3185 = vsel %vm126, %v3183, %v3184
    %3186 = vrot.lane.b32.xlu0 %v3185, 126
    %v3187 = vpop.permute.xlu0 %3186
    %3188 = vrot.lane.b32.xlu0 %v3184, 126
    %v3189 = vpop.permute.xlu0 %3188
    %v3192 = vadd.f32 %v3175, %v3187
    %v3193 = vadd.f32 %v3176, %v3189
    %s3194 = sld [smem:[#allocation2 + $0x2a]]
    %v3195 = vstv %s3194
    %v3196 = vmul.f32 %v3195, %v2572
    %v3197 = vmul.f32 %v3195, %v2573
    %v3200 = vrot.slane %v3196, 2
    %v3201 = vrot.slane %v3197, 2
    %v3202 = vsel %vm174, %v3200, %v3201
    %v3205 = vadd.f32 %v3192, %v3202
    %v3206 = vadd.f32 %v3193, %v3201
    %s3207 = sld [smem:[#allocation2 + $0x2b]]
    %v3208 = vstv %s3207
    %v3209 = vmul.f32 %v3208, %v2572
    %v3210 = vmul.f32 %v3208, %v2573
    %v3213 = vrot.slane %v3209, 2
    %v3214 = vrot.slane %v3210, 2
    %v3215 = vsel %vm174, %v3213, %v3214
    %3216 = vrot.lane.b32.xlu0 %v3215, 127
    %v3217 = vpop.permute.xlu0 %3216
    %3218 = vrot.lane.b32.xlu0 %v3214, 127
    %v3219 = vpop.permute.xlu0 %3218
    %v3222 = vadd.f32 %v3205, %v3217
    %v3223 = vadd.f32 %v3206, %v3219
    %s3224 = sld [smem:[#allocation2 + $0x2c]]
    %v3225 = vstv %s3224
    %v3226 = vmul.f32 %v3225, %v2572
    %v3227 = vmul.f32 %v3225, %v2573
    %v3230 = vrot.slane %v3226, 2
    %v3231 = vrot.slane %v3227, 2
    %v3232 = vsel %vm174, %v3230, %v3231
    %3233 = vrot.lane.b32.xlu0 %v3232, 126
    %v3234 = vpop.permute.xlu0 %3233
    %3235 = vrot.lane.b32.xlu0 %v3231, 126
    %v3236 = vpop.permute.xlu0 %3235
    %v3239 = vadd.f32 %v3222, %v3234
    %v3240 = vadd.f32 %v3223, %v3236
    %s3241 = sld [smem:[#allocation2 + $0x2d]]
    %v3242 = vstv %s3241
    %v3243 = vmul.f32 %v3242, %v2575
    %v3244 = vmul.f32 %v3242, %v2576
    %v3245 = vadd.f32 %v3239, %v3243
    %v3246 = vadd.f32 %v3240, %v3244
    %s3247 = sld [smem:[#allocation2 + $0x2e]]
    %v3248 = vstv %s3247
    %v3249 = vmul.f32 %v3248, %v2575
    %v3250 = vmul.f32 %v3248, %v2576
    %3253 = vrot.lane.b32.xlu0 %v3249, 127
    %v3254 = vpop.permute.xlu0 %3253
    %3255 = vrot.lane.b32.xlu0 %v3250, 127
    %v3256 = vpop.permute.xlu0 %3255
    %v3259 = vadd.f32 %v3245, %v3254
    %v3260 = vadd.f32 %v3246, %v3256
    %s3261 = sld [smem:[#allocation2 + $0x2f]]
    %v3262 = vstv %s3261
    %v3263 = vmul.f32 %v3262, %v2575
    %v3264 = vmul.f32 %v3262, %v2576
    %3267 = vrot.lane.b32.xlu0 %v3263, 126
    %v3268 = vpop.permute.xlu0 %3267
    %3269 = vrot.lane.b32.xlu0 %v3264, 126
    %v3270 = vpop.permute.xlu0 %3269
    %v3273 = vadd.f32 %v3259, %v3268
    %v3274 = vadd.f32 %v3260, %v3270
    %s3275 = sld [smem:[#allocation2 + $0x30]]
    %v3276 = vstv %s3275
    %v3277 = vmul.f32 %v3276, %v2575
    %v3278 = vmul.f32 %v3276, %v2576
    %v3281 = vrot.slane %v3277, 1
    %v3282 = vrot.slane %v3278, 1
    %v3283 = vsel %vm126, %v3281, %v3282
    %v3286 = vadd.f32 %v3273, %v3283
    %v3287 = vadd.f32 %v3274, %v3282
    %s3288 = sld [smem:[#allocation2 + $0x31]]
    %v3289 = vstv %s3288
    %v3290 = vmul.f32 %v3289, %v2575
    %v3291 = vmul.f32 %v3289, %v2576
    %v3294 = vrot.slane %v3290, 1
    %v3295 = vrot.slane %v3291, 1
    %v3296 = vsel %vm126, %v3294, %v3295
    %3297 = vrot.lane.b32.xlu0 %v3296, 127
    %v3298 = vpop.permute.xlu0 %3297
    %3299 = vrot.lane.b32.xlu0 %v3295, 127
    %v3300 = vpop.permute.xlu0 %3299
    %v3303 = vadd.f32 %v3286, %v3298
    %v3304 = vadd.f32 %v3287, %v3300
    %s3305 = sld [smem:[#allocation2 + $0x32]]
    %v3306 = vstv %s3305
    %v3307 = vmul.f32 %v3306, %v2575
    %v3308 = vmul.f32 %v3306, %v2576
    %v3311 = vrot.slane %v3307, 1
    %v3312 = vrot.slane %v3308, 1
    %v3313 = vsel %vm126, %v3311, %v3312
    %3314 = vrot.lane.b32.xlu0 %v3313, 126
    %v3315 = vpop.permute.xlu0 %3314
    %3316 = vrot.lane.b32.xlu0 %v3312, 126
    %v3317 = vpop.permute.xlu0 %3316
    %v3320 = vadd.f32 %v3303, %v3315
    %v3321 = vadd.f32 %v3304, %v3317
    %s3322 = sld [smem:[#allocation2 + $0x33]]
    %v3323 = vstv %s3322
    %v3324 = vmul.f32 %v3323, %v2575
    %v3325 = vmul.f32 %v3323, %v2576
    %v3328 = vrot.slane %v3324, 2
    %v3329 = vrot.slane %v3325, 2
    %v3330 = vsel %vm174, %v3328, %v3329
    %v3333 = vadd.f32 %v3320, %v3330
    %v3334 = vadd.f32 %v3321, %v3329
    %s3335 = sld [smem:[#allocation2 + $0x34]]
    %v3336 = vstv %s3335
    %v3337 = vmul.f32 %v3336, %v2575
    %v3338 = vmul.f32 %v3336, %v2576
    %v3341 = vrot.slane %v3337, 2
    %v3342 = vrot.slane %v3338, 2
    %v3343 = vsel %vm174, %v3341, %v3342
    %3344 = vrot.lane.b32.xlu0 %v3343, 127
    %v3345 = vpop.permute.xlu0 %3344
    %3346 = vrot.lane.b32.xlu0 %v3342, 127
    %v3347 = vpop.permute.xlu0 %3346
    %v3350 = vadd.f32 %v3333, %v3345
    %v3351 = vadd.f32 %v3334, %v3347
    %s3352 = sld [smem:[#allocation2 + $0x35]]
    %v3353 = vstv %s3352
    %v3354 = vmul.f32 %v3353, %v2575
    %v3355 = vmul.f32 %v3353, %v2576
    %v3358 = vrot.slane %v3354, 2
    %v3359 = vrot.slane %v3355, 2
    %v3360 = vsel %vm174, %v3358, %v3359
    %3361 = vrot.lane.b32.xlu0 %v3360, 126
    %v3362 = vpop.permute.xlu0 %3361
    %3363 = vrot.lane.b32.xlu0 %v3359, 126
    %v3364 = vpop.permute.xlu0 %3363
    %v3367 = vadd.f32 %v3350, %v3362
    %v3368 = vadd.f32 %v3351, %v3364
    %s3369 = sld [smem:[#allocation2 + $0x36]]
    %v3370 = vstv %s3369
    %v3371 = vmul.f32 %v3370, %v2578
    %v3372 = vmul.f32 %v3370, %v2579
    %v3373 = vadd.f32 %v3367, %v3371
    %v3374 = vadd.f32 %v3368, %v3372
    %s3375 = sld [smem:[#allocation2 + $0x37]]
    %v3376 = vstv %s3375
    %v3377 = vmul.f32 %v3376, %v2578
    %v3378 = vmul.f32 %v3376, %v2579
    %3381 = vrot.lane.b32.xlu0 %v3377, 127
    %v3382 = vpop.permute.xlu0 %3381
    %3383 = vrot.lane.b32.xlu0 %v3378, 127
    %v3384 = vpop.permute.xlu0 %3383
    %v3387 = vadd.f32 %v3373, %v3382
    %v3388 = vadd.f32 %v3374, %v3384
    %s3389 = sld [smem:[#allocation2 + $0x38]]
    %v3390 = vstv %s3389
    %v3391 = vmul.f32 %v3390, %v2578
    %v3392 = vmul.f32 %v3390, %v2579
    %3395 = vrot.lane.b32.xlu0 %v3391, 126
    %v3396 = vpop.permute.xlu0 %3395
    %3397 = vrot.lane.b32.xlu0 %v3392, 126
    %v3398 = vpop.permute.xlu0 %3397
    %v3401 = vadd.f32 %v3387, %v3396
    %v3402 = vadd.f32 %v3388, %v3398
    %s3403 = sld [smem:[#allocation2 + $0x39]]
    %v3404 = vstv %s3403
    %v3405 = vmul.f32 %v3404, %v2578
    %v3406 = vmul.f32 %v3404, %v2579
    %v3409 = vrot.slane %v3405, 1
    %v3410 = vrot.slane %v3406, 1
    %v3411 = vsel %vm126, %v3409, %v3410
    %v3414 = vadd.f32 %v3401, %v3411
    %v3415 = vadd.f32 %v3402, %v3410
    %s3416 = sld [smem:[#allocation2 + $0x3a]]
    %v3417 = vstv %s3416
    %v3418 = vmul.f32 %v3417, %v2578
    %v3419 = vmul.f32 %v3417, %v2579
    %v3422 = vrot.slane %v3418, 1
    %v3423 = vrot.slane %v3419, 1
    %v3424 = vsel %vm126, %v3422, %v3423
    %3425 = vrot.lane.b32.xlu0 %v3424, 127
    %v3426 = vpop.permute.xlu0 %3425
    %3427 = vrot.lane.b32.xlu0 %v3423, 127
    %v3428 = vpop.permute.xlu0 %3427
    %v3431 = vadd.f32 %v3414, %v3426
    %v3432 = vadd.f32 %v3415, %v3428
    %s3433 = sld [smem:[#allocation2 + $0x3b]]
    %v3434 = vstv %s3433
    %v3435 = vmul.f32 %v3434, %v2578
    %v3436 = vmul.f32 %v3434, %v2579
    %v3439 = vrot.slane %v3435, 1
    %v3440 = vrot.slane %v3436, 1
    %v3441 = vsel %vm126, %v3439, %v3440
    %3442 = vrot.lane.b32.xlu0 %v3441, 126
    %v3443 = vpop.permute.xlu0 %3442
    %3444 = vrot.lane.b32.xlu0 %v3440, 126
    %v3445 = vpop.permute.xlu0 %3444
    %v3448 = vadd.f32 %v3431, %v3443
    %v3449 = vadd.f32 %v3432, %v3445
    %s3450 = sld [smem:[#allocation2 + $0x3c]]
    %v3451 = vstv %s3450
    %v3452 = vmul.f32 %v3451, %v2578
    %v3453 = vmul.f32 %v3451, %v2579
    %v3456 = vrot.slane %v3452, 2
    %v3457 = vrot.slane %v3453, 2
    %v3458 = vsel %vm174, %v3456, %v3457
    %v3461 = vadd.f32 %v3448, %v3458
    %v3462 = vadd.f32 %v3449, %v3457
    %s3463 = sld [smem:[#allocation2 + $0x3d]]
    %v3464 = vstv %s3463
    %v3465 = vmul.f32 %v3464, %v2578
    %v3466 = vmul.f32 %v3464, %v2579
    %v3469 = vrot.slane %v3465, 2
    %v3470 = vrot.slane %v3466, 2
    %v3471 = vsel %vm174, %v3469, %v3470
    %3472 = vrot.lane.b32.xlu0 %v3471, 127
    %v3473 = vpop.permute.xlu0 %3472
    %3474 = vrot.lane.b32.xlu0 %v3470, 127
    %v3475 = vpop.permute.xlu0 %3474
    %v3478 = vadd.f32 %v3461, %v3473
    %v3479 = vadd.f32 %v3462, %v3475
    %s3480 = sld [smem:[#allocation2 + $0x3e]]
    %v3481 = vstv %s3480
    %v3482 = vmul.f32 %v3481, %v2578
    %v3483 = vmul.f32 %v3481, %v2579
    %v3486 = vrot.slane %v3482, 2
    %v3487 = vrot.slane %v3483, 2
    %v3488 = vsel %vm174, %v3486, %v3487
    %3489 = vrot.lane.b32.xlu0 %v3488, 126
    %v3490 = vpop.permute.xlu0 %3489
    %3491 = vrot.lane.b32.xlu0 %v3487, 126
    %v3492 = vpop.permute.xlu0 %3491
    %v3495 = vadd.f32 %v3478, %v3490
    %v3496 = vadd.f32 %v3479, %v3492
    %s3497 = sld [smem:[#allocation2 + $0x3f]]
    %v3498 = vstv %s3497
    %v3499 = vmul.f32 %v3498, %v2581
    %v3500 = vmul.f32 %v3498, %v2582
    %v3501 = vadd.f32 %v3495, %v3499
    %v3502 = vadd.f32 %v3496, %v3500
    %s3503 = sld [smem:[#allocation2 + $0x40]]
    %v3504 = vstv %s3503
    %v3505 = vmul.f32 %v3504, %v2581
    %v3506 = vmul.f32 %v3504, %v2582
    %3509 = vrot.lane.b32.xlu0 %v3505, 127
    %v3510 = vpop.permute.xlu0 %3509
    %3511 = vrot.lane.b32.xlu0 %v3506, 127
    %v3512 = vpop.permute.xlu0 %3511
    %v3515 = vadd.f32 %v3501, %v3510
    %v3516 = vadd.f32 %v3502, %v3512
    %s3517 = sld [smem:[#allocation2 + $0x41]]
    %v3518 = vstv %s3517
    %v3519 = vmul.f32 %v3518, %v2581
    %v3520 = vmul.f32 %v3518, %v2582
    %3523 = vrot.lane.b32.xlu0 %v3519, 126
    %v3524 = vpop.permute.xlu0 %3523
    %3525 = vrot.lane.b32.xlu0 %v3520, 126
    %v3526 = vpop.permute.xlu0 %3525
    %v3529 = vadd.f32 %v3515, %v3524
    %v3530 = vadd.f32 %v3516, %v3526
    %s3531 = sld [smem:[#allocation2 + $0x42]]
    %v3532 = vstv %s3531
    %v3533 = vmul.f32 %v3532, %v2581
    %v3534 = vmul.f32 %v3532, %v2582
    %v3537 = vrot.slane %v3533, 1
    %v3538 = vrot.slane %v3534, 1
    %v3539 = vsel %vm126, %v3537, %v3538
    %v3542 = vadd.f32 %v3529, %v3539
    %v3543 = vadd.f32 %v3530, %v3538
    %s3544 = sld [smem:[#allocation2 + $0x43]]
    %v3545 = vstv %s3544
    %v3546 = vmul.f32 %v3545, %v2581
    %v3547 = vmul.f32 %v3545, %v2582
    %v3550 = vrot.slane %v3546, 1
    %v3551 = vrot.slane %v3547, 1
    %v3552 = vsel %vm126, %v3550, %v3551
    %3553 = vrot.lane.b32.xlu0 %v3552, 127
    %v3554 = vpop.permute.xlu0 %3553
    %3555 = vrot.lane.b32.xlu0 %v3551, 127
    %v3556 = vpop.permute.xlu0 %3555
    %v3559 = vadd.f32 %v3542, %v3554
    %v3560 = vadd.f32 %v3543, %v3556
    %s3561 = sld [smem:[#allocation2 + $0x44]]
    %v3562 = vstv %s3561
    %v3563 = vmul.f32 %v3562, %v2581
    %v3564 = vmul.f32 %v3562, %v2582
    %v3567 = vrot.slane %v3563, 1
    %v3568 = vrot.slane %v3564, 1
    %v3569 = vsel %vm126, %v3567, %v3568
    %3570 = vrot.lane.b32.xlu0 %v3569, 126
    %v3571 = vpop.permute.xlu0 %3570
    %3572 = vrot.lane.b32.xlu0 %v3568, 126
    %v3573 = vpop.permute.xlu0 %3572
    %v3576 = vadd.f32 %v3559, %v3571
    %v3577 = vadd.f32 %v3560, %v3573
    %s3578 = sld [smem:[#allocation2 + $0x45]]
    %v3579 = vstv %s3578
    %v3580 = vmul.f32 %v3579, %v2581
    %v3581 = vmul.f32 %v3579, %v2582
    %v3584 = vrot.slane %v3580, 2
    %v3585 = vrot.slane %v3581, 2
    %v3586 = vsel %vm174, %v3584, %v3585
    %v3589 = vadd.f32 %v3576, %v3586
    %v3590 = vadd.f32 %v3577, %v3585
    %s3591 = sld [smem:[#allocation2 + $0x46]]
    %v3592 = vstv %s3591
    %v3593 = vmul.f32 %v3592, %v2581
    %v3594 = vmul.f32 %v3592, %v2582
    %v3597 = vrot.slane %v3593, 2
    %v3598 = vrot.slane %v3594, 2
    %v3599 = vsel %vm174, %v3597, %v3598
    %3600 = vrot.lane.b32.xlu0 %v3599, 127
    %v3601 = vpop.permute.xlu0 %3600
    %3602 = vrot.lane.b32.xlu0 %v3598, 127
    %v3603 = vpop.permute.xlu0 %3602
    %v3606 = vadd.f32 %v3589, %v3601
    %v3607 = vadd.f32 %v3590, %v3603
    %s3608 = sld [smem:[#allocation2 + $0x47]]
    %v3609 = vstv %s3608
    %v3610 = vmul.f32 %v3609, %v2581
    %v3611 = vmul.f32 %v3609, %v2582
    %v3614 = vrot.slane %v3610, 2
    %v3615 = vrot.slane %v3611, 2
    %v3616 = vsel %vm174, %v3614, %v3615
    %3617 = vrot.lane.b32.xlu0 %v3616, 126
    %v3618 = vpop.permute.xlu0 %3617
    %3619 = vrot.lane.b32.xlu0 %v3615, 126
    %v3620 = vpop.permute.xlu0 %3619
    %v3623 = vadd.f32 %v3606, %v3618
    %v3624 = vadd.f32 %v3607, %v3620
    %v3625 = vsub.f32 0.0, %v3623
    %v3626 = vsub.f32 0.0, %v3624
    %v3627 = vmul.f32 %v3625, 1.442695
    %v3628 = vpow.pop %v3627
    %v3629 = vmul.f32 %v3626, 1.442695
    %v3630 = vpow.pop %v3629
    %v3631 = vadd.f32 %v3628, 1.0
    %v3632 = vadd.f32 %v3630, 1.0
    %v3633 = vrcp.pop %v3631
    %v3634 = vmul.f32 1.0, %v3633
    %v3635 = vrcp.pop %v3632
    %v3636 = vmul.f32 1.0, %v3635
    %v3637 = vsel %vm72, %v3634, 0.0
    %v3638 = vsel %vm72, %v3636, 0.0
    %s3639 = sld [smem:[#allocation4 + $0x2]]
    %v3640 = vstv %s3639
    %s3641 = sld [smem:[#allocation2 + $0x48]]
    %v3642 = vstv %s3641
    %v3643 = vmul.f32 %v3642, %v2572
    %v3644 = vmul.f32 %v3642, %v2573
    %v3645 = vadd.f32 %v3640, %v3643
    %v3646 = vadd.f32 %v3640, %v3644
    %s3647 = sld [smem:[#allocation2 + $0x49]]
    %v3648 = vstv %s3647
    %v3649 = vmul.f32 %v3648, %v2572
    %v3650 = vmul.f32 %v3648, %v2573
    %3653 = vrot.lane.b32.xlu0 %v3649, 127
    %v3654 = vpop.permute.xlu0 %3653
    %3655 = vrot.lane.b32.xlu0 %v3650, 127
    %v3656 = vpop.permute.xlu0 %3655
    %v3659 = vadd.f32 %v3645, %v3654
    %v3660 = vadd.f32 %v3646, %v3656
    %s3661 = sld [smem:[#allocation2 + $0x4a]]
    %v3662 = vstv %s3661
    %v3663 = vmul.f32 %v3662, %v2572
    %v3664 = vmul.f32 %v3662, %v2573
    %3667 = vrot.lane.b32.xlu0 %v3663, 126
    %v3668 = vpop.permute.xlu0 %3667
    %3669 = vrot.lane.b32.xlu0 %v3664, 126
    %v3670 = vpop.permute.xlu0 %3669
    %v3673 = vadd.f32 %v3659, %v3668
    %v3674 = vadd.f32 %v3660, %v3670
    %s3675 = sld [smem:[#allocation2 + $0x4b]]
    %v3676 = vstv %s3675
    %v3677 = vmul.f32 %v3676, %v2572
    %v3678 = vmul.f32 %v3676, %v2573
    %v3681 = vrot.slane %v3677, 1
    %v3682 = vrot.slane %v3678, 1
    %v3683 = vsel %vm126, %v3681, %v3682
    %v3686 = vadd.f32 %v3673, %v3683
    %v3687 = vadd.f32 %v3674, %v3682
    %s3688 = sld [smem:[#allocation2 + $0x4c]]
    %v3689 = vstv %s3688
    %v3690 = vmul.f32 %v3689, %v2572
    %v3691 = vmul.f32 %v3689, %v2573
    %v3694 = vrot.slane %v3690, 1
    %v3695 = vrot.slane %v3691, 1
    %v3696 = vsel %vm126, %v3694, %v3695
    %3697 = vrot.lane.b32.xlu0 %v3696, 127
    %v3698 = vpop.permute.xlu0 %3697
    %3699 = vrot.lane.b32.xlu0 %v3695, 127
    %v3700 = vpop.permute.xlu0 %3699
    %v3703 = vadd.f32 %v3686, %v3698
    %v3704 = vadd.f32 %v3687, %v3700
    %s3705 = sld [smem:[#allocation2 + $0x4d]]
    %v3706 = vstv %s3705
    %v3707 = vmul.f32 %v3706, %v2572
    %v3708 = vmul.f32 %v3706, %v2573
    %v3711 = vrot.slane %v3707, 1
    %v3712 = vrot.slane %v3708, 1
    %v3713 = vsel %vm126, %v3711, %v3712
    %3714 = vrot.lane.b32.xlu0 %v3713, 126
    %v3715 = vpop.permute.xlu0 %3714
    %3716 = vrot.lane.b32.xlu0 %v3712, 126
    %v3717 = vpop.permute.xlu0 %3716
    %v3720 = vadd.f32 %v3703, %v3715
    %v3721 = vadd.f32 %v3704, %v3717
    %s3722 = sld [smem:[#allocation2 + $0x4e]]
    %v3723 = vstv %s3722
    %v3724 = vmul.f32 %v3723, %v2572
    %v3725 = vmul.f32 %v3723, %v2573
    %v3728 = vrot.slane %v3724, 2
    %v3729 = vrot.slane %v3725, 2
    %v3730 = vsel %vm174, %v3728, %v3729
    %v3733 = vadd.f32 %v3720, %v3730
    %v3734 = vadd.f32 %v3721, %v3729
    %s3735 = sld [smem:[#allocation2 + $0x4f]]
    %v3736 = vstv %s3735
    %v3737 = vmul.f32 %v3736, %v2572
    %v3738 = vmul.f32 %v3736, %v2573
    %v3741 = vrot.slane %v3737, 2
    %v3742 = vrot.slane %v3738, 2
    %v3743 = vsel %vm174, %v3741, %v3742
    %3744 = vrot.lane.b32.xlu0 %v3743, 127
    %v3745 = vpop.permute.xlu0 %3744
    %3746 = vrot.lane.b32.xlu0 %v3742, 127
    %v3747 = vpop.permute.xlu0 %3746
    %v3750 = vadd.f32 %v3733, %v3745
    %v3751 = vadd.f32 %v3734, %v3747
    %s3752 = sld [smem:[#allocation2 + $0x50]]
    %v3753 = vstv %s3752
    %v3754 = vmul.f32 %v3753, %v2572
    %v3755 = vmul.f32 %v3753, %v2573
    %v3758 = vrot.slane %v3754, 2
    %v3759 = vrot.slane %v3755, 2
    %v3760 = vsel %vm174, %v3758, %v3759
    %3761 = vrot.lane.b32.xlu0 %v3760, 126
    %v3762 = vpop.permute.xlu0 %3761
    %3763 = vrot.lane.b32.xlu0 %v3759, 126
    %v3764 = vpop.permute.xlu0 %3763
    %v3767 = vadd.f32 %v3750, %v3762
    %v3768 = vadd.f32 %v3751, %v3764
    %s3769 = sld [smem:[#allocation2 + $0x51]]
    %v3770 = vstv %s3769
    %v3771 = vmul.f32 %v3770, %v2575
    %v3772 = vmul.f32 %v3770, %v2576
    %v3773 = vadd.f32 %v3767, %v3771
    %v3774 = vadd.f32 %v3768, %v3772
    %s3775 = sld [smem:[#allocation2 + $0x52]]
    %v3776 = vstv %s3775
    %v3777 = vmul.f32 %v3776, %v2575
    %v3778 = vmul.f32 %v3776, %v2576
    %3781 = vrot.lane.b32.xlu0 %v3777, 127
    %v3782 = vpop.permute.xlu0 %3781
    %3783 = vrot.lane.b32.xlu0 %v3778, 127
    %v3784 = vpop.permute.xlu0 %3783
    %v3787 = vadd.f32 %v3773, %v3782
    %v3788 = vadd.f32 %v3774, %v3784
    %s3789 = sld [smem:[#allocation2 + $0x53]]
    %v3790 = vstv %s3789
    %v3791 = vmul.f32 %v3790, %v2575
    %v3792 = vmul.f32 %v3790, %v2576
    %3795 = vrot.lane.b32.xlu0 %v3791, 126
    %v3796 = vpop.permute.xlu0 %3795
    %3797 = vrot.lane.b32.xlu0 %v3792, 126
    %v3798 = vpop.permute.xlu0 %3797
    %v3801 = vadd.f32 %v3787, %v3796
    %v3802 = vadd.f32 %v3788, %v3798
    %s3803 = sld [smem:[#allocation2 + $0x54]]
    %v3804 = vstv %s3803
    %v3805 = vmul.f32 %v3804, %v2575
    %v3806 = vmul.f32 %v3804, %v2576
    %v3809 = vrot.slane %v3805, 1
    %v3810 = vrot.slane %v3806, 1
    %v3811 = vsel %vm126, %v3809, %v3810
    %v3814 = vadd.f32 %v3801, %v3811
    %v3815 = vadd.f32 %v3802, %v3810
    %s3816 = sld [smem:[#allocation2 + $0x55]]
    %v3817 = vstv %s3816
    %v3818 = vmul.f32 %v3817, %v2575
    %v3819 = vmul.f32 %v3817, %v2576
    %v3822 = vrot.slane %v3818, 1
    %v3823 = vrot.slane %v3819, 1
    %v3824 = vsel %vm126, %v3822, %v3823
    %3825 = vrot.lane.b32.xlu0 %v3824, 127
    %v3826 = vpop.permute.xlu0 %3825
    %3827 = vrot.lane.b32.xlu0 %v3823, 127
    %v3828 = vpop.permute.xlu0 %3827
    %v3831 = vadd.f32 %v3814, %v3826
    %v3832 = vadd.f32 %v3815, %v3828
    %s3833 = sld [smem:[#allocation2 + $0x56]]
    %v3834 = vstv %s3833
    %v3835 = vmul.f32 %v3834, %v2575
    %v3836 = vmul.f32 %v3834, %v2576
    %v3839 = vrot.slane %v3835, 1
    %v3840 = vrot.slane %v3836, 1
    %v3841 = vsel %vm126, %v3839, %v3840
    %3842 = vrot.lane.b32.xlu0 %v3841, 126
    %v3843 = vpop.permute.xlu0 %3842
    %3844 = vrot.lane.b32.xlu0 %v3840, 126
    %v3845 = vpop.permute.xlu0 %3844
    %v3848 = vadd.f32 %v3831, %v3843
    %v3849 = vadd.f32 %v3832, %v3845
    %s3850 = sld [smem:[#allocation2 + $0x57]]
    %v3851 = vstv %s3850
    %v3852 = vmul.f32 %v3851, %v2575
    %v3853 = vmul.f32 %v3851, %v2576
    %v3856 = vrot.slane %v3852, 2
    %v3857 = vrot.slane %v3853, 2
    %v3858 = vsel %vm174, %v3856, %v3857
    %v3861 = vadd.f32 %v3848, %v3858
    %v3862 = vadd.f32 %v3849, %v3857
    %s3863 = sld [smem:[#allocation2 + $0x58]]
    %v3864 = vstv %s3863
    %v3865 = vmul.f32 %v3864, %v2575
    %v3866 = vmul.f32 %v3864, %v2576
    %v3869 = vrot.slane %v3865, 2
    %v3870 = vrot.slane %v3866, 2
    %v3871 = vsel %vm174, %v3869, %v3870
    %3872 = vrot.lane.b32.xlu0 %v3871, 127
    %v3873 = vpop.permute.xlu0 %3872
    %3874 = vrot.lane.b32.xlu0 %v3870, 127
    %v3875 = vpop.permute.xlu0 %3874
    %v3878 = vadd.f32 %v3861, %v3873
    %v3879 = vadd.f32 %v3862, %v3875
    %s3880 = sld [smem:[#allocation2 + $0x59]]
    %v3881 = vstv %s3880
    %v3882 = vmul.f32 %v3881, %v2575
    %v3883 = vmul.f32 %v3881, %v2576
    %v3886 = vrot.slane %v3882, 2
    %v3887 = vrot.slane %v3883, 2
    %v3888 = vsel %vm174, %v3886, %v3887
    %3889 = vrot.lane.b32.xlu0 %v3888, 126
    %v3890 = vpop.permute.xlu0 %3889
    %3891 = vrot.lane.b32.xlu0 %v3887, 126
    %v3892 = vpop.permute.xlu0 %3891
    %v3895 = vadd.f32 %v3878, %v3890
    %v3896 = vadd.f32 %v3879, %v3892
    %s3897 = sld [smem:[#allocation2 + $0x5a]]
    %v3898 = vstv %s3897
    %v3899 = vmul.f32 %v3898, %v2578
    %v3900 = vmul.f32 %v3898, %v2579
    %v3901 = vadd.f32 %v3895, %v3899
    %v3902 = vadd.f32 %v3896, %v3900
    %s3903 = sld [smem:[#allocation2 + $0x5b]]
    %v3904 = vstv %s3903
    %v3905 = vmul.f32 %v3904, %v2578
    %v3906 = vmul.f32 %v3904, %v2579
    %3909 = vrot.lane.b32.xlu0 %v3905, 127
    %v3910 = vpop.permute.xlu0 %3909
    %3911 = vrot.lane.b32.xlu0 %v3906, 127
    %v3912 = vpop.permute.xlu0 %3911
    %v3915 = vadd.f32 %v3901, %v3910
    %v3916 = vadd.f32 %v3902, %v3912
    %s3917 = sld [smem:[#allocation2 + $0x5c]]
    %v3918 = vstv %s3917
    %v3919 = vmul.f32 %v3918, %v2578
    %v3920 = vmul.f32 %v3918, %v2579
    %3923 = vrot.lane.b32.xlu0 %v3919, 126
    %v3924 = vpop.permute.xlu0 %3923
    %3925 = vrot.lane.b32.xlu0 %v3920, 126
    %v3926 = vpop.permute.xlu0 %3925
    %v3929 = vadd.f32 %v3915, %v3924
    %v3930 = vadd.f32 %v3916, %v3926
    %s3931 = sld [smem:[#allocation2 + $0x5d]]
    %v3932 = vstv %s3931
    %v3933 = vmul.f32 %v3932, %v2578
    %v3934 = vmul.f32 %v3932, %v2579
    %v3937 = vrot.slane %v3933, 1
    %v3938 = vrot.slane %v3934, 1
    %v3939 = vsel %vm126, %v3937, %v3938
    %v3942 = vadd.f32 %v3929, %v3939
    %v3943 = vadd.f32 %v3930, %v3938
    %s3944 = sld [smem:[#allocation2 + $0x5e]]
    %v3945 = vstv %s3944
    %v3946 = vmul.f32 %v3945, %v2578
    %v3947 = vmul.f32 %v3945, %v2579
    %v3950 = vrot.slane %v3946, 1
    %v3951 = vrot.slane %v3947, 1
    %v3952 = vsel %vm126, %v3950, %v3951
    %3953 = vrot.lane.b32.xlu0 %v3952, 127
    %v3954 = vpop.permute.xlu0 %3953
    %3955 = vrot.lane.b32.xlu0 %v3951, 127
    %v3956 = vpop.permute.xlu0 %3955
    %v3959 = vadd.f32 %v3942, %v3954
    %v3960 = vadd.f32 %v3943, %v3956
    %s3961 = sld [smem:[#allocation2 + $0x5f]]
    %v3962 = vstv %s3961
    %v3963 = vmul.f32 %v3962, %v2578
    %v3964 = vmul.f32 %v3962, %v2579
    %v3967 = vrot.slane %v3963, 1
    %v3968 = vrot.slane %v3964, 1
    %v3969 = vsel %vm126, %v3967, %v3968
    %3970 = vrot.lane.b32.xlu0 %v3969, 126
    %v3971 = vpop.permute.xlu0 %3970
    %3972 = vrot.lane.b32.xlu0 %v3968, 126
    %v3973 = vpop.permute.xlu0 %3972
    %v3976 = vadd.f32 %v3959, %v3971
    %v3977 = vadd.f32 %v3960, %v3973
    %s3978 = sld [smem:[#allocation2 + $0x60]]
    %v3979 = vstv %s3978
    %v3980 = vmul.f32 %v3979, %v2578
    %v3981 = vmul.f32 %v3979, %v2579
    %v3984 = vrot.slane %v3980, 2
    %v3985 = vrot.slane %v3981, 2
    %v3986 = vsel %vm174, %v3984, %v3985
    %v3989 = vadd.f32 %v3976, %v3986
    %v3990 = vadd.f32 %v3977, %v3985
    %s3991 = sld [smem:[#allocation2 + $0x61]]
    %v3992 = vstv %s3991
    %v3993 = vmul.f32 %v3992, %v2578
    %v3994 = vmul.f32 %v3992, %v2579
    %v3997 = vrot.slane %v3993, 2
    %v3998 = vrot.slane %v3994, 2
    %v3999 = vsel %vm174, %v3997, %v3998
    %4000 = vrot.lane.b32.xlu0 %v3999, 127
    %v4001 = vpop.permute.xlu0 %4000
    %4002 = vrot.lane.b32.xlu0 %v3998, 127
    %v4003 = vpop.permute.xlu0 %4002
    %v4006 = vadd.f32 %v3989, %v4001
    %v4007 = vadd.f32 %v3990, %v4003
    %s4008 = sld [smem:[#allocation2 + $0x62]]
    %v4009 = vstv %s4008
    %v4010 = vmul.f32 %v4009, %v2578
    %v4011 = vmul.f32 %v4009, %v2579
    %v4014 = vrot.slane %v4010, 2
    %v4015 = vrot.slane %v4011, 2
    %v4016 = vsel %vm174, %v4014, %v4015
    %4017 = vrot.lane.b32.xlu0 %v4016, 126
    %v4018 = vpop.permute.xlu0 %4017
    %4019 = vrot.lane.b32.xlu0 %v4015, 126
    %v4020 = vpop.permute.xlu0 %4019
    %v4023 = vadd.f32 %v4006, %v4018
    %v4024 = vadd.f32 %v4007, %v4020
    %s4025 = sld [smem:[#allocation2 + $0x63]]
    %v4026 = vstv %s4025
    %v4027 = vmul.f32 %v4026, %v2581
    %v4028 = vmul.f32 %v4026, %v2582
    %v4029 = vadd.f32 %v4023, %v4027
    %v4030 = vadd.f32 %v4024, %v4028
    %s4031 = sld [smem:[#allocation2 + $0x64]]
    %v4032 = vstv %s4031
    %v4033 = vmul.f32 %v4032, %v2581
    %v4034 = vmul.f32 %v4032, %v2582
    %4037 = vrot.lane.b32.xlu0 %v4033, 127
    %v4038 = vpop.permute.xlu0 %4037
    %4039 = vrot.lane.b32.xlu0 %v4034, 127
    %v4040 = vpop.permute.xlu0 %4039
    %v4043 = vadd.f32 %v4029, %v4038
    %v4044 = vadd.f32 %v4030, %v4040
    %s4045 = sld [smem:[#allocation2 + $0x65]]
    %v4046 = vstv %s4045
    %v4047 = vmul.f32 %v4046, %v2581
    %v4048 = vmul.f32 %v4046, %v2582
    %4051 = vrot.lane.b32.xlu0 %v4047, 126
    %v4052 = vpop.permute.xlu0 %4051
    %4053 = vrot.lane.b32.xlu0 %v4048, 126
    %v4054 = vpop.permute.xlu0 %4053
    %v4057 = vadd.f32 %v4043, %v4052
    %v4058 = vadd.f32 %v4044, %v4054
    %s4059 = sld [smem:[#allocation2 + $0x66]]
    %v4060 = vstv %s4059
    %v4061 = vmul.f32 %v4060, %v2581
    %v4062 = vmul.f32 %v4060, %v2582
    %v4065 = vrot.slane %v4061, 1
    %v4066 = vrot.slane %v4062, 1
    %v4067 = vsel %vm126, %v4065, %v4066
    %v4070 = vadd.f32 %v4057, %v4067
    %v4071 = vadd.f32 %v4058, %v4066
    %s4072 = sld [smem:[#allocation2 + $0x67]]
    %v4073 = vstv %s4072
    %v4074 = vmul.f32 %v4073, %v2581
    %v4075 = vmul.f32 %v4073, %v2582
    %v4078 = vrot.slane %v4074, 1
    %v4079 = vrot.slane %v4075, 1
    %v4080 = vsel %vm126, %v4078, %v4079
    %4081 = vrot.lane.b32.xlu0 %v4080, 127
    %v4082 = vpop.permute.xlu0 %4081
    %4083 = vrot.lane.b32.xlu0 %v4079, 127
    %v4084 = vpop.permute.xlu0 %4083
    %v4087 = vadd.f32 %v4070, %v4082
    %v4088 = vadd.f32 %v4071, %v4084
    %s4089 = sld [smem:[#allocation2 + $0x68]]
    %v4090 = vstv %s4089
    %v4091 = vmul.f32 %v4090, %v2581
    %v4092 = vmul.f32 %v4090, %v2582
    %v4095 = vrot.slane %v4091, 1
    %v4096 = vrot.slane %v4092, 1
    %v4097 = vsel %vm126, %v4095, %v4096
    %4098 = vrot.lane.b32.xlu0 %v4097, 126
    %v4099 = vpop.permute.xlu0 %4098
    %4100 = vrot.lane.b32.xlu0 %v4096, 126
    %v4101 = vpop.permute.xlu0 %4100
    %v4104 = vadd.f32 %v4087, %v4099
    %v4105 = vadd.f32 %v4088, %v4101
    %s4106 = sld [smem:[#allocation2 + $0x69]]
    %v4107 = vstv %s4106
    %v4108 = vmul.f32 %v4107, %v2581
    %v4109 = vmul.f32 %v4107, %v2582
    %v4112 = vrot.slane %v4108, 2
    %v4113 = vrot.slane %v4109, 2
    %v4114 = vsel %vm174, %v4112, %v4113
    %v4117 = vadd.f32 %v4104, %v4114
    %v4118 = vadd.f32 %v4105, %v4113
    %s4119 = sld [smem:[#allocation2 + $0x6a]]
    %v4120 = vstv %s4119
    %v4121 = vmul.f32 %v4120, %v2581
    %v4122 = vmul.f32 %v4120, %v2582
    %v4125 = vrot.slane %v4121, 2
    %v4126 = vrot.slane %v4122, 2
    %v4127 = vsel %vm174, %v4125, %v4126
    %4128 = vrot.lane.b32.xlu0 %v4127, 127
    %v4129 = vpop.permute.xlu0 %4128
    %4130 = vrot.lane.b32.xlu0 %v4126, 127
    %v4131 = vpop.permute.xlu0 %4130
    %v4134 = vadd.f32 %v4117, %v4129
    %v4135 = vadd.f32 %v4118, %v4131
    %s4136 = sld [smem:[#allocation2 + $0x6b]]
    %v4137 = vstv %s4136
    %v4138 = vmul.f32 %v4137, %v2581
    %v4139 = vmul.f32 %v4137, %v2582
    %v4142 = vrot.slane %v4138, 2
    %v4143 = vrot.slane %v4139, 2
    %v4144 = vsel %vm174, %v4142, %v4143
    %4145 = vrot.lane.b32.xlu0 %v4144, 126
    %v4146 = vpop.permute.xlu0 %4145
    %4147 = vrot.lane.b32.xlu0 %v4143, 126
    %v4148 = vpop.permute.xlu0 %4147
    %v4151 = vadd.f32 %v4134, %v4146
    %v4152 = vadd.f32 %v4135, %v4148
    %v4153 = vsub.f32 0.0, %v4151
    %v4154 = vsub.f32 0.0, %v4152
    %v4155 = vmul.f32 %v4153, 1.442695
    %v4156 = vpow.pop %v4155
    %v4157 = vmul.f32 %v4154, 1.442695
    %v4158 = vpow.pop %v4157
    %v4159 = vadd.f32 %v4156, 1.0
    %v4160 = vadd.f32 %v4158, 1.0
    %v4161 = vrcp.pop %v4159
    %v4162 = vmul.f32 1.0, %v4161
    %v4163 = vrcp.pop %v4160
    %v4164 = vmul.f32 1.0, %v4163
    %v4165 = vsel %vm72, %v4162, 0.0
    %v4166 = vsel %vm72, %v4164, 0.0
    %s4167 = sld [smem:[#allocation4 + $0x3]]
    %v4168 = vstv %s4167
    %s4169 = sld [smem:[#allocation2 + $0x6c]]
    %v4170 = vstv %s4169
    %v4171 = vmul.f32 %v4170, %v2572
    %v4172 = vmul.f32 %v4170, %v2573
    %v4173 = vadd.f32 %v4168, %v4171
    %v4174 = vadd.f32 %v4168, %v4172
    %s4175 = sld [smem:[#allocation2 + $0x6d]]
    %v4176 = vstv %s4175
    %v4177 = vmul.f32 %v4176, %v2572
    %v4178 = vmul.f32 %v4176, %v2573
    %4181 = vrot.lane.b32.xlu0 %v4177, 127
    %v4182 = vpop.permute.xlu0 %4181
    %4183 = vrot.lane.b32.xlu0 %v4178, 127
    %v4184 = vpop.permute.xlu0 %4183
    %v4187 = vadd.f32 %v4173, %v4182
    %v4188 = vadd.f32 %v4174, %v4184
    %s4189 = sld [smem:[#allocation2 + $0x6e]]
    %v4190 = vstv %s4189
    %v4191 = vmul.f32 %v4190, %v2572
    %v4192 = vmul.f32 %v4190, %v2573
    %4195 = vrot.lane.b32.xlu0 %v4191, 126
    %v4196 = vpop.permute.xlu0 %4195
    %4197 = vrot.lane.b32.xlu0 %v4192, 126
    %v4198 = vpop.permute.xlu0 %4197
    %v4201 = vadd.f32 %v4187, %v4196
    %v4202 = vadd.f32 %v4188, %v4198
    %s4203 = sld [smem:[#allocation2 + $0x6f]]
    %v4204 = vstv %s4203
    %v4205 = vmul.f32 %v4204, %v2572
    %v4206 = vmul.f32 %v4204, %v2573
    %v4209 = vrot.slane %v4205, 1
    %v4210 = vrot.slane %v4206, 1
    %v4211 = vsel %vm126, %v4209, %v4210
    %v4214 = vadd.f32 %v4201, %v4211
    %v4215 = vadd.f32 %v4202, %v4210
    %s4216 = sld [smem:[#allocation2 + $0x70]]
    %v4217 = vstv %s4216
    %v4218 = vmul.f32 %v4217, %v2572
    %v4219 = vmul.f32 %v4217, %v2573
    %v4222 = vrot.slane %v4218, 1
    %v4223 = vrot.slane %v4219, 1
    %v4224 = vsel %vm126, %v4222, %v4223
    %4225 = vrot.lane.b32.xlu0 %v4224, 127
    %v4226 = vpop.permute.xlu0 %4225
    %4227 = vrot.lane.b32.xlu0 %v4223, 127
    %v4228 = vpop.permute.xlu0 %4227
    %v4231 = vadd.f32 %v4214, %v4226
    %v4232 = vadd.f32 %v4215, %v4228
    %s4233 = sld [smem:[#allocation2 + $0x71]]
    %v4234 = vstv %s4233
    %v4235 = vmul.f32 %v4234, %v2572
    %v4236 = vmul.f32 %v4234, %v2573
    %v4239 = vrot.slane %v4235, 1
    %v4240 = vrot.slane %v4236, 1
    %v4241 = vsel %vm126, %v4239, %v4240
    %4242 = vrot.lane.b32.xlu0 %v4241, 126
    %v4243 = vpop.permute.xlu0 %4242
    %4244 = vrot.lane.b32.xlu0 %v4240, 126
    %v4245 = vpop.permute.xlu0 %4244
    %v4248 = vadd.f32 %v4231, %v4243
    %v4249 = vadd.f32 %v4232, %v4245
    %s4250 = sld [smem:[#allocation2 + $0x72]]
    %v4251 = vstv %s4250
    %v4252 = vmul.f32 %v4251, %v2572
    %v4253 = vmul.f32 %v4251, %v2573
    %v4256 = vrot.slane %v4252, 2
    %v4257 = vrot.slane %v4253, 2
    %v4258 = vsel %vm174, %v4256, %v4257
    %v4261 = vadd.f32 %v4248, %v4258
    %v4262 = vadd.f32 %v4249, %v4257
    %s4263 = sld [smem:[#allocation2 + $0x73]]
    %v4264 = vstv %s4263
    %v4265 = vmul.f32 %v4264, %v2572
    %v4266 = vmul.f32 %v4264, %v2573
    %v4269 = vrot.slane %v4265, 2
    %v4270 = vrot.slane %v4266, 2
    %v4271 = vsel %vm174, %v4269, %v4270
    %4272 = vrot.lane.b32.xlu0 %v4271, 127
    %v4273 = vpop.permute.xlu0 %4272
    %4274 = vrot.lane.b32.xlu0 %v4270, 127
    %v4275 = vpop.permute.xlu0 %4274
    %v4278 = vadd.f32 %v4261, %v4273
    %v4279 = vadd.f32 %v4262, %v4275
    %s4280 = sld [smem:[#allocation2 + $0x74]]
    %v4281 = vstv %s4280
    %v4282 = vmul.f32 %v4281, %v2572
    %v4283 = vmul.f32 %v4281, %v2573
    %v4286 = vrot.slane %v4282, 2
    %v4287 = vrot.slane %v4283, 2
    %v4288 = vsel %vm174, %v4286, %v4287
    %4289 = vrot.lane.b32.xlu0 %v4288, 126
    %v4290 = vpop.permute.xlu0 %4289
    %4291 = vrot.lane.b32.xlu0 %v4287, 126
    %v4292 = vpop.permute.xlu0 %4291
    %v4295 = vadd.f32 %v4278, %v4290
    %v4296 = vadd.f32 %v4279, %v4292
    %s4297 = sld [smem:[#allocation2 + $0x75]]
    %v4298 = vstv %s4297
    %v4299 = vmul.f32 %v4298, %v2575
    %v4300 = vmul.f32 %v4298, %v2576
    %v4301 = vadd.f32 %v4295, %v4299
    %v4302 = vadd.f32 %v4296, %v4300
    %s4303 = sld [smem:[#allocation2 + $0x76]]
    %v4304 = vstv %s4303
    %v4305 = vmul.f32 %v4304, %v2575
    %v4306 = vmul.f32 %v4304, %v2576
    %4309 = vrot.lane.b32.xlu0 %v4305, 127
    %v4310 = vpop.permute.xlu0 %4309
    %4311 = vrot.lane.b32.xlu0 %v4306, 127
    %v4312 = vpop.permute.xlu0 %4311
    %v4315 = vadd.f32 %v4301, %v4310
    %v4316 = vadd.f32 %v4302, %v4312
    %s4317 = sld [smem:[#allocation2 + $0x77]]
    %v4318 = vstv %s4317
    %v4319 = vmul.f32 %v4318, %v2575
    %v4320 = vmul.f32 %v4318, %v2576
    %4323 = vrot.lane.b32.xlu0 %v4319, 126
    %v4324 = vpop.permute.xlu0 %4323
    %4325 = vrot.lane.b32.xlu0 %v4320, 126
    %v4326 = vpop.permute.xlu0 %4325
    %v4329 = vadd.f32 %v4315, %v4324
    %v4330 = vadd.f32 %v4316, %v4326
    %s4331 = sld [smem:[#allocation2 + $0x78]]
    %v4332 = vstv %s4331
    %v4333 = vmul.f32 %v4332, %v2575
    %v4334 = vmul.f32 %v4332, %v2576
    %v4337 = vrot.slane %v4333, 1
    %v4338 = vrot.slane %v4334, 1
    %v4339 = vsel %vm126, %v4337, %v4338
    %v4342 = vadd.f32 %v4329, %v4339
    %v4343 = vadd.f32 %v4330, %v4338
    %s4344 = sld [smem:[#allocation2 + $0x79]]
    %v4345 = vstv %s4344
    %v4346 = vmul.f32 %v4345, %v2575
    %v4347 = vmul.f32 %v4345, %v2576
    %v4350 = vrot.slane %v4346, 1
    %v4351 = vrot.slane %v4347, 1
    %v4352 = vsel %vm126, %v4350, %v4351
    %4353 = vrot.lane.b32.xlu0 %v4352, 127
    %v4354 = vpop.permute.xlu0 %4353
    %4355 = vrot.lane.b32.xlu0 %v4351, 127
    %v4356 = vpop.permute.xlu0 %4355
    %v4359 = vadd.f32 %v4342, %v4354
    %v4360 = vadd.f32 %v4343, %v4356
    %s4361 = sld [smem:[#allocation2 + $0x7a]]
    %v4362 = vstv %s4361
    %v4363 = vmul.f32 %v4362, %v2575
    %v4364 = vmul.f32 %v4362, %v2576
    %v4367 = vrot.slane %v4363, 1
    %v4368 = vrot.slane %v4364, 1
    %v4369 = vsel %vm126, %v4367, %v4368
    %4370 = vrot.lane.b32.xlu0 %v4369, 126
    %v4371 = vpop.permute.xlu0 %4370
    %4372 = vrot.lane.b32.xlu0 %v4368, 126
    %v4373 = vpop.permute.xlu0 %4372
    %v4376 = vadd.f32 %v4359, %v4371
    %v4377 = vadd.f32 %v4360, %v4373
    %s4378 = sld [smem:[#allocation2 + $0x7b]]
    %v4379 = vstv %s4378
    %v4380 = vmul.f32 %v4379, %v2575
    %v4381 = vmul.f32 %v4379, %v2576
    %v4384 = vrot.slane %v4380, 2
    %v4385 = vrot.slane %v4381, 2
    %v4386 = vsel %vm174, %v4384, %v4385
    %v4389 = vadd.f32 %v4376, %v4386
    %v4390 = vadd.f32 %v4377, %v4385
    %s4391 = sld [smem:[#allocation2 + $0x7c]]
    %v4392 = vstv %s4391
    %v4393 = vmul.f32 %v4392, %v2575
    %v4394 = vmul.f32 %v4392, %v2576
    %v4397 = vrot.slane %v4393, 2
    %v4398 = vrot.slane %v4394, 2
    %v4399 = vsel %vm174, %v4397, %v4398
    %4400 = vrot.lane.b32.xlu0 %v4399, 127
    %v4401 = vpop.permute.xlu0 %4400
    %4402 = vrot.lane.b32.xlu0 %v4398, 127
    %v4403 = vpop.permute.xlu0 %4402
    %v4406 = vadd.f32 %v4389, %v4401
    %v4407 = vadd.f32 %v4390, %v4403
    %s4408 = sld [smem:[#allocation2 + $0x7d]]
    %v4409 = vstv %s4408
    %v4410 = vmul.f32 %v4409, %v2575
    %v4411 = vmul.f32 %v4409, %v2576
    %v4414 = vrot.slane %v4410, 2
    %v4415 = vrot.slane %v4411, 2
    %v4416 = vsel %vm174, %v4414, %v4415
    %4417 = vrot.lane.b32.xlu0 %v4416, 126
    %v4418 = vpop.permute.xlu0 %4417
    %4419 = vrot.lane.b32.xlu0 %v4415, 126
    %v4420 = vpop.permute.xlu0 %4419
    %v4423 = vadd.f32 %v4406, %v4418
    %v4424 = vadd.f32 %v4407, %v4420
    %s4425 = sld [smem:[#allocation2 + $0x7e]]
    %v4426 = vstv %s4425
    %v4427 = vmul.f32 %v4426, %v2578
    %v4428 = vmul.f32 %v4426, %v2579
    %v4429 = vadd.f32 %v4423, %v4427
    %v4430 = vadd.f32 %v4424, %v4428
    %s4431 = sld [smem:[#allocation2 + $0x7f]]
    %v4432 = vstv %s4431
    %v4433 = vmul.f32 %v4432, %v2578
    %v4434 = vmul.f32 %v4432, %v2579
    %4437 = vrot.lane.b32.xlu0 %v4433, 127
    %v4438 = vpop.permute.xlu0 %4437
    %4439 = vrot.lane.b32.xlu0 %v4434, 127
    %v4440 = vpop.permute.xlu0 %4439
    %v4443 = vadd.f32 %v4429, %v4438
    %v4444 = vadd.f32 %v4430, %v4440
    %s4445 = sld [smem:[#allocation2 + $0x80]]
    %v4446 = vstv %s4445
    %v4447 = vmul.f32 %v4446, %v2578
    %v4448 = vmul.f32 %v4446, %v2579
    %4451 = vrot.lane.b32.xlu0 %v4447, 126
    %v4452 = vpop.permute.xlu0 %4451
    %4453 = vrot.lane.b32.xlu0 %v4448, 126
    %v4454 = vpop.permute.xlu0 %4453
    %v4457 = vadd.f32 %v4443, %v4452
    %v4458 = vadd.f32 %v4444, %v4454
    %s4459 = sld [smem:[#allocation2 + $0x81]]
    %v4460 = vstv %s4459
    %v4461 = vmul.f32 %v4460, %v2578
    %v4462 = vmul.f32 %v4460, %v2579
    %v4465 = vrot.slane %v4461, 1
    %v4466 = vrot.slane %v4462, 1
    %v4467 = vsel %vm126, %v4465, %v4466
    %v4470 = vadd.f32 %v4457, %v4467
    %v4471 = vadd.f32 %v4458, %v4466
    %s4472 = sld [smem:[#allocation2 + $0x82]]
    %v4473 = vstv %s4472
    %v4474 = vmul.f32 %v4473, %v2578
    %v4475 = vmul.f32 %v4473, %v2579
    %v4478 = vrot.slane %v4474, 1
    %v4479 = vrot.slane %v4475, 1
    %v4480 = vsel %vm126, %v4478, %v4479
    %4481 = vrot.lane.b32.xlu0 %v4480, 127
    %v4482 = vpop.permute.xlu0 %4481
    %4483 = vrot.lane.b32.xlu0 %v4479, 127
    %v4484 = vpop.permute.xlu0 %4483
    %v4487 = vadd.f32 %v4470, %v4482
    %v4488 = vadd.f32 %v4471, %v4484
    %s4489 = sld [smem:[#allocation2 + $0x83]]
    %v4490 = vstv %s4489
    %v4491 = vmul.f32 %v4490, %v2578
    %v4492 = vmul.f32 %v4490, %v2579
    %v4495 = vrot.slane %v4491, 1
    %v4496 = vrot.slane %v4492, 1
    %v4497 = vsel %vm126, %v4495, %v4496
    %4498 = vrot.lane.b32.xlu0 %v4497, 126
    %v4499 = vpop.permute.xlu0 %4498
    %4500 = vrot.lane.b32.xlu0 %v4496, 126
    %v4501 = vpop.permute.xlu0 %4500
    %v4504 = vadd.f32 %v4487, %v4499
    %v4505 = vadd.f32 %v4488, %v4501
    %s4506 = sld [smem:[#allocation2 + $0x84]]
    %v4507 = vstv %s4506
    %v4508 = vmul.f32 %v4507, %v2578
    %v4509 = vmul.f32 %v4507, %v2579
    %v4512 = vrot.slane %v4508, 2
    %v4513 = vrot.slane %v4509, 2
    %v4514 = vsel %vm174, %v4512, %v4513
    %v4517 = vadd.f32 %v4504, %v4514
    %v4518 = vadd.f32 %v4505, %v4513
    %s4519 = sld [smem:[#allocation2 + $0x85]]
    %v4520 = vstv %s4519
    %v4521 = vmul.f32 %v4520, %v2578
    %v4522 = vmul.f32 %v4520, %v2579
    %v4525 = vrot.slane %v4521, 2
    %v4526 = vrot.slane %v4522, 2
    %v4527 = vsel %vm174, %v4525, %v4526
    %4528 = vrot.lane.b32.xlu0 %v4527, 127
    %v4529 = vpop.permute.xlu0 %4528
    %4530 = vrot.lane.b32.xlu0 %v4526, 127
    %v4531 = vpop.permute.xlu0 %4530
    %v4534 = vadd.f32 %v4517, %v4529
    %v4535 = vadd.f32 %v4518, %v4531
    %s4536 = sld [smem:[#allocation2 + $0x86]]
    %v4537 = vstv %s4536
    %v4538 = vmul.f32 %v4537, %v2578
    %v4539 = vmul.f32 %v4537, %v2579
    %v4542 = vrot.slane %v4538, 2
    %v4543 = vrot.slane %v4539, 2
    %v4544 = vsel %vm174, %v4542, %v4543
    %4545 = vrot.lane.b32.xlu0 %v4544, 126
    %v4546 = vpop.permute.xlu0 %4545
    %4547 = vrot.lane.b32.xlu0 %v4543, 126
    %v4548 = vpop.permute.xlu0 %4547
    %v4551 = vadd.f32 %v4534, %v4546
    %v4552 = vadd.f32 %v4535, %v4548
    %s4553 = sld [smem:[#allocation2 + $0x87]]
    %v4554 = vstv %s4553
    %v4555 = vmul.f32 %v4554, %v2581
    %v4556 = vmul.f32 %v4554, %v2582
    %v4557 = vadd.f32 %v4551, %v4555
    %v4558 = vadd.f32 %v4552, %v4556
    %s4559 = sld [smem:[#allocation2 + $0x88]]
    %v4560 = vstv %s4559
    %v4561 = vmul.f32 %v4560, %v2581
    %v4562 = vmul.f32 %v4560, %v2582
    %4565 = vrot.lane.b32.xlu0 %v4561, 127
    %v4566 = vpop.permute.xlu0 %4565
    %4567 = vrot.lane.b32.xlu0 %v4562, 127
    %v4568 = vpop.permute.xlu0 %4567
    %v4571 = vadd.f32 %v4557, %v4566
    %v4572 = vadd.f32 %v4558, %v4568
    %s4573 = sld [smem:[#allocation2 + $0x89]]
    %v4574 = vstv %s4573
    %v4575 = vmul.f32 %v4574, %v2581
    %v4576 = vmul.f32 %v4574, %v2582
    %4579 = vrot.lane.b32.xlu0 %v4575, 126
    %v4580 = vpop.permute.xlu0 %4579
    %4581 = vrot.lane.b32.xlu0 %v4576, 126
    %v4582 = vpop.permute.xlu0 %4581
    %v4585 = vadd.f32 %v4571, %v4580
    %v4586 = vadd.f32 %v4572, %v4582
    %s4587 = sld [smem:[#allocation2 + $0x8a]]
    %v4588 = vstv %s4587
    %v4589 = vmul.f32 %v4588, %v2581
    %v4590 = vmul.f32 %v4588, %v2582
    %v4593 = vrot.slane %v4589, 1
    %v4594 = vrot.slane %v4590, 1
    %v4595 = vsel %vm126, %v4593, %v4594
    %v4598 = vadd.f32 %v4585, %v4595
    %v4599 = vadd.f32 %v4586, %v4594
    %s4600 = sld [smem:[#allocation2 + $0x8b]]
    %v4601 = vstv %s4600
    %v4602 = vmul.f32 %v4601, %v2581
    %v4603 = vmul.f32 %v4601, %v2582
    %v4606 = vrot.slane %v4602, 1
    %v4607 = vrot.slane %v4603, 1
    %v4608 = vsel %vm126, %v4606, %v4607
    %4609 = vrot.lane.b32.xlu0 %v4608, 127
    %v4610 = vpop.permute.xlu0 %4609
    %4611 = vrot.lane.b32.xlu0 %v4607, 127
    %v4612 = vpop.permute.xlu0 %4611
    %v4615 = vadd.f32 %v4598, %v4610
    %v4616 = vadd.f32 %v4599, %v4612
    %s4617 = sld [smem:[#allocation2 + $0x8c]]
    %v4618 = vstv %s4617
    %v4619 = vmul.f32 %v4618, %v2581
    %v4620 = vmul.f32 %v4618, %v2582
    %v4623 = vrot.slane %v4619, 1
    %v4624 = vrot.slane %v4620, 1
    %v4625 = vsel %vm126, %v4623, %v4624
    %4626 = vrot.lane.b32.xlu0 %v4625, 126
    %v4627 = vpop.permute.xlu0 %4626
    %4628 = vrot.lane.b32.xlu0 %v4624, 126
    %v4629 = vpop.permute.xlu0 %4628
    %v4632 = vadd.f32 %v4615, %v4627
    %v4633 = vadd.f32 %v4616, %v4629
    %s4634 = sld [smem:[#allocation2 + $0x8d]]
    %v4635 = vstv %s4634
    %v4636 = vmul.f32 %v4635, %v2581
    %v4637 = vmul.f32 %v4635, %v2582
    %v4640 = vrot.slane %v4636, 2
    %v4641 = vrot.slane %v4637, 2
    %v4642 = vsel %vm174, %v4640, %v4641
    %v4645 = vadd.f32 %v4632, %v4642
    %v4646 = vadd.f32 %v4633, %v4641
    %s4647 = sld [smem:[#allocation2 + $0x8e]]
    %v4648 = vstv %s4647
    %v4649 = vmul.f32 %v4648, %v2581
    %v4650 = vmul.f32 %v4648, %v2582
    %v4653 = vrot.slane %v4649, 2
    %v4654 = vrot.slane %v4650, 2
    %v4655 = vsel %vm174, %v4653, %v4654
    %4656 = vrot.lane.b32.xlu0 %v4655, 127
    %v4657 = vpop.permute.xlu0 %4656
    %4658 = vrot.lane.b32.xlu0 %v4654, 127
    %v4659 = vpop.permute.xlu0 %4658
    %v4662 = vadd.f32 %v4645, %v4657
    %v4663 = vadd.f32 %v4646, %v4659
    %s4664 = sld [smem:[#allocation2 + $0x8f]]
    %v4665 = vstv %s4664
    %v4666 = vmul.f32 %v4665, %v2581
    %v4667 = vmul.f32 %v4665, %v2582
    %v4670 = vrot.slane %v4666, 2
    %v4671 = vrot.slane %v4667, 2
    %v4672 = vsel %vm174, %v4670, %v4671
    %4673 = vrot.lane.b32.xlu0 %v4672, 126
    %v4674 = vpop.permute.xlu0 %4673
    %4675 = vrot.lane.b32.xlu0 %v4671, 126
    %v4676 = vpop.permute.xlu0 %4675
    %v4679 = vadd.f32 %v4662, %v4674
    %v4680 = vadd.f32 %v4663, %v4676
    %v4681 = vsub.f32 0.0, %v4679
    %v4682 = vsub.f32 0.0, %v4680
    %v4683 = vmul.f32 %v4681, 1.442695
    %v4684 = vpow.pop %v4683
    %v4685 = vmul.f32 %v4682, 1.442695
    %v4686 = vpow.pop %v4685
    %v4687 = vadd.f32 %v4684, 1.0
    %v4688 = vadd.f32 %v4686, 1.0
    %v4689 = vrcp.pop %v4687
    %v4690 = vmul.f32 1.0, %v4689
    %v4691 = vrcp.pop %v4688
    %v4692 = vmul.f32 1.0, %v4691
    %v4693 = vsel %vm72, %v4690, 0.0
    %v4694 = vsel %vm72, %v4692, 0.0
    %s4695 = sld [smem:[#allocation7]]
    %v4696 = vstv %s4695
    %s4697 = sld [smem:[#allocation6]]
    %v4698 = vstv %s4697
    %v4699 = vmul.f32 %v4698, %v3109
    %v4700 = vmul.f32 %v4698, %v3110
    %v4701 = vadd.f32 %v4696, %v4699
    %v4702 = vadd.f32 %v4696, %v4700
    %s4703 = sld [smem:[#allocation6 + $0x1]]
    %v4704 = vstv %s4703
    %v4705 = vmul.f32 %v4704, %v3109
    %v4706 = vmul.f32 %v4704, %v3110
    %4709 = vrot.lane.b32.xlu0 %v4705, 1
    %v4710 = vpop.permute.xlu0 %4709
    %4711 = vrot.lane.b32.xlu0 %v4706, 1
    %v4712 = vpop.permute.xlu0 %4711
    %v4715 = vadd.f32 %v4701, %v4710
    %v4716 = vadd.f32 %v4702, %v4712
    %s4717 = sld [smem:[#allocation6 + $0x2]]
    %v4718 = vstv %s4717
    %v4719 = vmul.f32 %v4718, %v3109
    %v4720 = vmul.f32 %v4718, %v3110
    %4723 = vrot.lane.b32.xlu0 %v4719, 2
    %v4724 = vpop.permute.xlu0 %4723
    %4725 = vrot.lane.b32.xlu0 %v4720, 2
    %v4726 = vpop.permute.xlu0 %4725
    %v4729 = vadd.f32 %v4715, %v4724
    %v4730 = vadd.f32 %v4716, %v4726
    %s4731 = sld [smem:[#allocation6 + $0x6]]
    %v4732 = vstv %s4731
    %v4733 = vmul.f32 %v4732, %v3637
    %v4734 = vmul.f32 %v4732, %v3638
    %v4735 = vadd.f32 %v4729, %v4733
    %v4736 = vadd.f32 %v4730, %v4734
    %s4737 = sld [smem:[#allocation6 + $0x7]]
    %v4738 = vstv %s4737
    %v4739 = vmul.f32 %v4738, %v3637
    %v4740 = vmul.f32 %v4738, %v3638
    %4743 = vrot.lane.b32.xlu0 %v4739, 1
    %v4744 = vpop.permute.xlu0 %4743
    %4745 = vrot.lane.b32.xlu0 %v4740, 1
    %v4746 = vpop.permute.xlu0 %4745
    %v4749 = vadd.f32 %v4735, %v4744
    %v4750 = vadd.f32 %v4736, %v4746
    %s4751 = sld [smem:[#allocation6 + $0x8]]
    %v4752 = vstv %s4751
    %v4753 = vmul.f32 %v4752, %v3637
    %v4754 = vmul.f32 %v4752, %v3638
    %4757 = vrot.lane.b32.xlu0 %v4753, 2
    %v4758 = vpop.permute.xlu0 %4757
    %4759 = vrot.lane.b32.xlu0 %v4754, 2
    %v4760 = vpop.permute.xlu0 %4759
    %v4763 = vadd.f32 %v4749, %v4758
    %v4764 = vadd.f32 %v4750, %v4760
    %v4765 = vsub.f32 0.0, %v4763
    %v4766 = vsub.f32 0.0, %v4764
    %v4767 = vmul.f32 %v4765, 1.442695
    %v4768 = vpow.pop %v4767
    %v4769 = vmul.f32 %v4766, 1.442695
    %v4770 = vpow.pop %v4769
    %v4771 = vadd.f32 %v4768, 1.0
    %v4772 = vadd.f32 %v4770, 1.0
    %v4773 = vrcp.pop %v4771
    %v4774 = vmul.f32 1.0, %v4773
    %v4775 = vrcp.pop %v4772
    %v4776 = vmul.f32 1.0, %v4775
    %4779 = vrot.lane.b32.xlu0 %v4774, 126
    %v4780 = vpop.permute.xlu0 %4779
    %4781 = vrot.lane.b32.xlu0 %v4776, 126
    %v4782 = vpop.permute.xlu0 %4781
    %s4785 = scalar_lea.vmem %s5, 32
    %4786 = vst.msk [vmem:[%s4785 - $0x2] sm:$0xfc] %vm2288, %v4780
    %4787 = vst.msk [vmem:[%s4785 + $0x6] sm:$0x1] %vm2290, %v4782
    %s4788 = sld [smem:[#allocation7 + $0x1]]
    %v4789 = vstv %s4788
    %s4790 = sld [smem:[#allocation6 + $0x3]]
    %v4791 = vstv %s4790
    %v4792 = vmul.f32 %v4791, %v3109
    %v4793 = vmul.f32 %v4791, %v3110
    %v4794 = vadd.f32 %v4789, %v4792
    %v4795 = vadd.f32 %v4789, %v4793
    %s4796 = sld [smem:[#allocation6 + $0x4]]
    %v4797 = vstv %s4796
    %v4798 = vmul.f32 %v4797, %v3109
    %v4799 = vmul.f32 %v4797, %v3110
    %4802 = vrot.lane.b32.xlu0 %v4798, 1
    %v4803 = vpop.permute.xlu0 %4802
    %4804 = vrot.lane.b32.xlu0 %v4799, 1
    %v4805 = vpop.permute.xlu0 %4804
    %v4808 = vadd.f32 %v4794, %v4803
    %v4809 = vadd.f32 %v4795, %v4805
    %s4810 = sld [smem:[#allocation6 + $0x5]]
    %v4811 = vstv %s4810
    %v4812 = vmul.f32 %v4811, %v3109
    %v4813 = vmul.f32 %v4811, %v3110
    %4816 = vrot.lane.b32.xlu0 %v4812, 2
    %v4817 = vpop.permute.xlu0 %4816
    %4818 = vrot.lane.b32.xlu0 %v4813, 2
    %v4819 = vpop.permute.xlu0 %4818
    %v4822 = vadd.f32 %v4808, %v4817
    %v4823 = vadd.f32 %v4809, %v4819
    %s4824 = sld [smem:[#allocation6 + $0x9]]
    %v4825 = vstv %s4824
    %v4826 = vmul.f32 %v4825, %v3637
    %v4827 = vmul.f32 %v4825, %v3638
    %v4828 = vadd.f32 %v4822, %v4826
    %v4829 = vadd.f32 %v4823, %v4827
    %s4830 = sld [smem:[#allocation6 + $0xa]]
    %v4831 = vstv %s4830
    %v4832 = vmul.f32 %v4831, %v3637
    %v4833 = vmul.f32 %v4831, %v3638
    %4836 = vrot.lane.b32.xlu0 %v4832, 1
    %v4837 = vpop.permute.xlu0 %4836
    %4838 = vrot.lane.b32.xlu0 %v4833, 1
    %v4839 = vpop.permute.xlu0 %4838
    %v4842 = vadd.f32 %v4828, %v4837
    %v4843 = vadd.f32 %v4829, %v4839
    %s4844 = sld [smem:[#allocation6 + $0xb]]
    %v4845 = vstv %s4844
    %v4846 = vmul.f32 %v4845, %v3637
    %v4847 = vmul.f32 %v4845, %v3638
    %4850 = vrot.lane.b32.xlu0 %v4846, 2
    %v4851 = vpop.permute.xlu0 %4850
    %4852 = vrot.lane.b32.xlu0 %v4847, 2
    %v4853 = vpop.permute.xlu0 %4852
    %v4856 = vadd.f32 %v4842, %v4851
    %v4857 = vadd.f32 %v4843, %v4853
    %v4858 = vsub.f32 0.0, %v4856
    %v4859 = vsub.f32 0.0, %v4857
    %v4860 = vmul.f32 %v4858, 1.442695
    %v4861 = vpow.pop %v4860
    %v4862 = vmul.f32 %v4859, 1.442695
    %v4863 = vpow.pop %v4862
    %v4864 = vadd.f32 %v4861, 1.0
    %v4865 = vadd.f32 %v4863, 1.0
    %v4866 = vrcp.pop %v4864
    %v4867 = vmul.f32 1.0, %v4866
    %v4868 = vrcp.pop %v4865
    %v4869 = vmul.f32 1.0, %v4868
    %4872 = vrot.lane.b32.xlu0 %v4867, 126
    %v4873 = vpop.permute.xlu0 %4872
    %4874 = vrot.lane.b32.xlu0 %v4869, 126
    %v4875 = vpop.permute.xlu0 %4874
    %s4878 = scalar_lea.vmem %s5, 40
    %4879 = vst.msk [vmem:[%s4878 - $0x2] sm:$0xfc] %vm2288, %v4873
    %4880 = vst.msk [vmem:[%s4878 + $0x6] sm:$0x1] %vm2290, %v4875
    %s4881 = sld [smem:[#allocation7 + $0x2]]
    %v4882 = vstv %s4881
    %s4883 = sld [smem:[#allocation6 + $0xc]]
    %v4884 = vstv %s4883
    %v4885 = vmul.f32 %v4884, %v4165
    %v4886 = vmul.f32 %v4884, %v4166
    %v4887 = vadd.f32 %v4882, %v4885
    %v4888 = vadd.f32 %v4882, %v4886
    %s4889 = sld [smem:[#allocation6 + $0xd]]
    %v4890 = vstv %s4889
    %v4891 = vmul.f32 %v4890, %v4165
    %v4892 = vmul.f32 %v4890, %v4166
    %4895 = vrot.lane.b32.xlu0 %v4891, 1
    %v4896 = vpop.permute.xlu0 %4895
    %4897 = vrot.lane.b32.xlu0 %v4892, 1
    %v4898 = vpop.permute.xlu0 %4897
    %v4901 = vadd.f32 %v4887, %v4896
    %v4902 = vadd.f32 %v4888, %v4898
    %s4903 = sld [smem:[#allocation6 + $0xe]]
    %v4904 = vstv %s4903
    %v4905 = vmul.f32 %v4904, %v4165
    %v4906 = vmul.f32 %v4904, %v4166
    %4909 = vrot.lane.b32.xlu0 %v4905, 2
    %v4910 = vpop.permute.xlu0 %4909
    %4911 = vrot.lane.b32.xlu0 %v4906, 2
    %v4912 = vpop.permute.xlu0 %4911
    %v4915 = vadd.f32 %v4901, %v4910
    %v4916 = vadd.f32 %v4902, %v4912
    %s4917 = sld [smem:[#allocation6 + $0x12]]
    %v4918 = vstv %s4917
    %v4919 = vmul.f32 %v4918, %v4693
    %v4920 = vmul.f32 %v4918, %v4694
    %v4921 = vadd.f32 %v4915, %v4919
    %v4922 = vadd.f32 %v4916, %v4920
    %s4923 = sld [smem:[#allocation6 + $0x13]]
    %v4924 = vstv %s4923
    %v4925 = vmul.f32 %v4924, %v4693
    %v4926 = vmul.f32 %v4924, %v4694
    %4929 = vrot.lane.b32.xlu0 %v4925, 1
    %v4930 = vpop.permute.xlu0 %4929
    %4931 = vrot.lane.b32.xlu0 %v4926, 1
    %v4932 = vpop.permute.xlu0 %4931
    %v4935 = vadd.f32 %v4921, %v4930
    %v4936 = vadd.f32 %v4922, %v4932
    %s4937 = sld [smem:[#allocation6 + $0x14]]
    %v4938 = vstv %s4937
    %v4939 = vmul.f32 %v4938, %v4693
    %v4940 = vmul.f32 %v4938, %v4694
    %4943 = vrot.lane.b32.xlu0 %v4939, 2
    %v4944 = vpop.permute.xlu0 %4943
    %4945 = vrot.lane.b32.xlu0 %v4940, 2
    %v4946 = vpop.permute.xlu0 %4945
    %v4949 = vadd.f32 %v4935, %v4944
    %v4950 = vadd.f32 %v4936, %v4946
    %v4951 = vsub.f32 0.0, %v4949
    %v4952 = vsub.f32 0.0, %v4950
    %v4953 = vmul.f32 %v4951, 1.442695
    %v4954 = vpow.pop %v4953
    %v4955 = vmul.f32 %v4952, 1.442695
    %v4956 = vpow.pop %v4955
    %v4957 = vadd.f32 %v4954, 1.0
    %v4958 = vadd.f32 %v4956, 1.0
    %v4959 = vrcp.pop %v4957
    %v4960 = vmul.f32 1.0, %v4959
    %v4961 = vrcp.pop %v4958
    %v4962 = vmul.f32 1.0, %v4961
    %4965 = vrot.lane.b32.xlu0 %v4960, 126
    %v4966 = vpop.permute.xlu0 %4965
    %4967 = vrot.lane.b32.xlu0 %v4962, 126
    %v4968 = vpop.permute.xlu0 %4967
    %s4971 = scalar_lea.vmem %s5, 48
    %4972 = vst.msk [vmem:[%s4971 - $0x2] sm:$0xfc] %vm2288, %v4966
    %4973 = vst.msk [vmem:[%s4971 + $0x6] sm:$0x1] %vm2290, %v4968
    %s4974 = sld [smem:[#allocation7 + $0x3]]
    %v4975 = vstv %s4974
    %s4976 = sld [smem:[#allocation6 + $0xf]]
    %v4977 = vstv %s4976
    %v4978 = vmul.f32 %v4977, %v4165
    %v4979 = vmul.f32 %v4977, %v4166
    %v4980 = vadd.f32 %v4975, %v4978
    %v4981 = vadd.f32 %v4975, %v4979
    %s4982 = sld [smem:[#allocation6 + $0x10]]
    %v4983 = vstv %s4982
    %v4984 = vmul.f32 %v4983, %v4165
    %v4985 = vmul.f32 %v4983, %v4166
    %4988 = vrot.lane.b32.xlu0 %v4984, 1
    %v4989 = vpop.permute.xlu0 %4988
    %4990 = vrot.lane.b32.xlu0 %v4985, 1
    %v4991 = vpop.permute.xlu0 %4990
    %v4994 = vadd.f32 %v4980, %v4989
    %v4995 = vadd.f32 %v4981, %v4991
    %s4996 = sld [smem:[#allocation6 + $0x11]]
    %v4997 = vstv %s4996
    %v4998 = vmul.f32 %v4997, %v4165
    %v4999 = vmul.f32 %v4997, %v4166
    %5002 = vrot.lane.b32.xlu0 %v4998, 2
    %v5003 = vpop.permute.xlu0 %5002
    %5004 = vrot.lane.b32.xlu0 %v4999, 2
    %v5005 = vpop.permute.xlu0 %5004
    %v5008 = vadd.f32 %v4994, %v5003
    %v5009 = vadd.f32 %v4995, %v5005
    %s5010 = sld [smem:[#allocation6 + $0x15]]
    %v5011 = vstv %s5010
    %v5012 = vmul.f32 %v5011, %v4693
    %v5013 = vmul.f32 %v5011, %v4694
    %v5014 = vadd.f32 %v5008, %v5012
    %v5015 = vadd.f32 %v5009, %v5013
    %s5016 = sld [smem:[#allocation6 + $0x16]]
    %v5017 = vstv %s5016
    %v5018 = vmul.f32 %v5017, %v4693
    %v5019 = vmul.f32 %v5017, %v4694
    %5022 = vrot.lane.b32.xlu0 %v5018, 1
    %v5023 = vpop.permute.xlu0 %5022
    %5024 = vrot.lane.b32.xlu0 %v5019, 1
    %v5025 = vpop.permute.xlu0 %5024
    %v5028 = vadd.f32 %v5014, %v5023
    %v5029 = vadd.f32 %v5015, %v5025
    %s5030 = sld [smem:[#allocation6 + $0x17]]
    %v5031 = vstv %s5030
    %v5032 = vmul.f32 %v5031, %v4693
    %v5033 = vmul.f32 %v5031, %v4694
    %5036 = vrot.lane.b32.xlu0 %v5032, 2
    %v5037 = vpop.permute.xlu0 %5036
    %5038 = vrot.lane.b32.xlu0 %v5033, 2
    %v5039 = vpop.permute.xlu0 %5038
    %v5042 = vadd.f32 %v5028, %v5037
    %v5043 = vadd.f32 %v5029, %v5039
    %v5044 = vsub.f32 0.0, %v5042
    %v5045 = vsub.f32 0.0, %v5043
    %v5046 = vmul.f32 %v5044, 1.442695
    %v5047 = vpow.pop %v5046
    %v5048 = vmul.f32 %v5045, 1.442695
    %v5049 = vpow.pop %v5048
    %v5050 = vadd.f32 %v5047, 1.0
    %v5051 = vadd.f32 %v5049, 1.0
    %v5052 = vrcp.pop %v5050
    %v5053 = vmul.f32 1.0, %v5052
    %v5054 = vrcp.pop %v5051
    %v5055 = vmul.f32 1.0, %v5054
    %5058 = vrot.lane.b32.xlu0 %v5053, 126
    %v5059 = vpop.permute.xlu0 %5058
    %5060 = vrot.lane.b32.xlu0 %v5055, 126
    %v5061 = vpop.permute.xlu0 %5060
    %s5064 = scalar_lea.vmem %s5, 56
    %5065 = vst.msk [vmem:[%s5064 - $0x2] sm:$0xfc] %vm2288, %v5059
    %5066 = vst.msk [vmem:[%s5064 + $0x6] sm:$0x1] %vm2290, %v5061
    // Predicated region
    $region38: #{tpu_custom_call.1} parent=1 // pred_check
      _
    $region39: #{tpu_custom_call.1} parent=1 // pred_check_branch
      %5068 = sbr.rel (0) target = $region41
    $region40: #{tpu_custom_call.1} parent=1 // pred_region
      _
    $region41: #{tpu_custom_call.1} parent=1 // pred_fallthru
      _
    // Predicated region
    $region42: #{tpu_custom_call.1} parent=1 // pred_check
      _
    $region43: #{tpu_custom_call.1} parent=1 // pred_check_branch
      %5070 = sbr.rel (0) target = $region45
    $region44: #{tpu_custom_call.1} parent=1 // pred_region
      _
    $region45: #{tpu_custom_call.1} parent=1 // pred_fallthru
      _
    %5071 = vsyncpa [#allocation3], 1
    %5072 = vsyncpa [#allocation5], 1
    %5073 = vsyncpa [#allocation8], 1

</llo_original>
